<compile_context>
chip_gen: v7x
topology: tpu7x:2x2x1
jax: 0.10.0
libtpu: 0.0.40
codegen_flags: <defaults>
</compile_context>

<pallas_src>
import functools

import jax
import jax.numpy as jnp
from jax.experimental import pallas as pl
from jax.experimental.pallas import tpu as pltpu

_LANE = 128
_LATENT_DIM = 32
_LATENT_PAD = 128
_HIDDEN_DIMS = (320, 128, 64, 32, 64, 128, 320)   # original 8-layer chain


def _round_up(n: int, m: int) -> int:
    return ((n + m - 1) // m) * m


def _cdiv(a: int, b: int) -> int:
    return -(-a // b)


def layer_dims(input_dim: int):
    """Unfused per-layer dims of the original module (9 entries, 8 layers)."""
    return (input_dim,) + _HIDDEN_DIMS + (input_dim,)


def fused_layer_dims(input_dim: int):
    """Dims after folding L3+L4 and D1+D2 (7 entries, 6 fused layers)."""
    return (input_dim, 320, 128, 32, 128, 320, input_dim)


def padded_fused_dims(input_dim: int):
    d = fused_layer_dims(input_dim)
    return (d[0],) + tuple(_round_up(v, _LANE) for v in d[1:-1]) + (d[-1],)


# --------------------------------------------------------------------------- kernel
def _ae_kernel(x_ref,
               w1, b1, w2, b2, w34, b34, w56, b56, w7, b7, w8, b8,
               latent_ref, y_ref):
    """One batch tile of the fused forward.  bf16 MXU operands, f32 accumulation,
    f32 bias-add + ReLU on the VPU, a single bf16 downcast per layer."""

    def lin(h_bf16, w_ref, b_ref):
        return jnp.dot(h_bf16, w_ref[...],
                       preferred_element_type=jnp.float32) + b_ref[...]

    def relu_bf16(a_f32):
        return jax.nn.relu(a_f32).astype(jnp.bfloat16)

    h = relu_bf16(lin(x_ref[...], w1, b1))        # input_dim -> 384 (=320 pad), ReLU
    h = relu_bf16(lin(h, w2, b2))                 # 384 -> 128, ReLU
    latent = relu_bf16(lin(h, w34, b34))          # 128 -> 128 (=32 pad), folded L3+L4
    latent_ref[...] = latent                      # lane-dense bf16 writeback
    h = relu_bf16(lin(latent, w56, b56))          # 128 -> 128, folded D1+D2
    h = relu_bf16(lin(h, w7, b7))                 # 128 -> 384 (=320 pad), ReLU
    y_ref[...] = lin(h, w8, b8).astype(y_ref.dtype)   # 384 -> input_dim, no act


# --------------------------------------------------------------------------- params
def init_params(input_dim: int, key):
    """PyTorch nn.Linear-style init: uniform(-1/sqrt(fan_in), 1/sqrt(fan_in)).
    Weights stored (in, out) so the kernel computes h @ W + b."""
    dims = layer_dims(input_dim)
    params = []
    for i in range(8):
        fan_in, fan_out = dims[i], dims[i + 1]
        key, kw, kb = jax.random.split(key, 3)
        bound = 1.0 / float(fan_in) ** 0.5
        params.append(jax.random.uniform(kw, (fan_in, fan_out), jnp.float32, -bound, bound))
        params.append(jax.random.uniform(kb, (fan_out,), jnp.float32, -bound, bound))
    return params


def fold_params(params):
    """Fold the two activation-free layers into their successors (exact in f32):
       L3 (no act) + L4  ->  W34 = W3 @ W4,  b34 = b3 @ W4 + b4
       D1 (no act) + D2  ->  W56 = W5 @ W6,  b56 = b5 @ W6 + b6
    """
    (w1, b1, w2, b2, w3, b3, w4, b4,
     w5, b5, w6, b6, w7, b7, w8, b8) = params
    w34 = w3 @ w4
    b34 = b3 @ w4 + b4
    w56 = w5 @ w6
    b56 = b5 @ w6 + b6
    return [w1, b1, w2, b2, w34, b34, w56, b56, w7, b7, w8, b8]


def prepare_params(params, input_dim: int):
    """Fold, zero-pad hidden dims to lane multiples, cast weights to bf16.
    Padding is numerically exact (zero weight rows/cols, zero bias, relu(0)=0)."""
    folded = fold_params(params)
    dims = fused_layer_dims(input_dim)
    pdims = padded_fused_dims(input_dim)
    prepped = []
    for i in range(6):
        w, b = folded[2 * i], folded[2 * i + 1]
        pfi, pfo = pdims[i], pdims[i + 1]
        wp = jnp.zeros((pfi, pfo), jnp.float32).at[:dims[i], :dims[i + 1]].set(w)
        bp = jnp.zeros((1, pfo), jnp.float32).at[0, :dims[i + 1]].set(b)
        prepped += [wp.astype(jnp.bfloat16), bp]   # weights bf16, biases f32
    return prepped


# --------------------------------------------------------------------------- wrapper
def _const_param_spec(shape):
    idx_map = lambda i: (0, 0)
    try:
        # Constant index_map -> param is DMA'd once and stays resident; single
        # buffer saves VMEM and redundant second-buffer DMA descriptors.
        return pl.BlockSpec(shape, idx_map, pipeline_mode=pl.Buffered(1))
    except Exception:  # older jax without pipeline_mode / Buffered
        return pl.BlockSpec(shape, idx_map)


@functools.partial(jax.jit, static_argnames=("input_dim", "block_batch"))
def autoencoder_forward(x, prepped_params, *, input_dim, block_batch=1024):
    batch = x.shape[0]
    pdims = padded_fused_dims(input_dim)

    # bf16 at the HBM boundary: the kernel is memory-bound on all generations.
    x = x.astype(jnp.bfloat16)

    # Batch tile: multiple of 8 sublanes, up to block_batch, but prefer >= 4 grid
    # steps (>= 2 per TensorCore under v7x megacore) so the input DMA pipelines
    # behind the previous tile's compute.
    tb = min(block_batch, _round_up(batch, 8))
    while tb > 128 and _cdiv(_round_up(batch, 8), tb) < 4:
        tb = max(128, _round_up(tb // 2, 8))

    padded_batch = _round_up(batch, tb)
    if padded_batch != batch:
        x = jnp.pad(x, ((0, padded_batch - batch), (0, 0)))
    num_tiles = padded_batch // tb

    def act_spec(width):
        return pl.BlockSpec((tb, width), lambda i: (i, 0))

    param_specs = [_const_param_spec(p.shape) for p in prepped_params]
    param_bytes = sum(int(p.size) * p.dtype.itemsize for p in prepped_params)

    # VMEM budget: resident params + double-buffered bf16 activation tiles +
    # headroom for f32 intermediates / spills.  Floor at 16 MiB (safety), cap at
    # 32 MiB (fits v7x's 64 MiB physical VMEM with room for surrounding fusions).
    act_tile_bytes = tb * (input_dim + _LATENT_PAD + input_dim) * 2
    spill_headroom = 8 * tb * max(pdims) * 4
    vmem_limit = int(min(max(param_bytes + 4 * act_tile_bytes + spill_headroom,
                             16 << 20), 32 << 20))

    flops = 2 * padded_batch * sum(pdims[i] * pdims[i + 1] for i in range(6))
    bytes_accessed = int(
        padded_batch * input_dim * 2                     # x (bf16) in
        + padded_batch * (_LATENT_PAD + input_dim) * 2   # latent + y (bf16) out
        + param_bytes)

    latent_pad, y = pl.pallas_call(
        _ae_kernel,
        grid=(num_tiles,),
        out_shape=(
            jax.ShapeDtypeStruct((padded_batch, _LATENT_PAD), jnp.bfloat16),
            jax.ShapeDtypeStruct((padded_batch, input_dim), jnp.bfloat16),
        ),
        in_specs=[act_spec(input_dim)] + param_specs,
        out_specs=(act_spec(_LATENT_PAD), act_spec(input_dim)),
        compiler_params=pltpu.CompilerParams(
            dimension_semantics=("parallel",),   # megacore batch sharding on v7x
            vmem_limit_bytes=vmem_limit,
        ),
        cost_estimate=pl.CostEstimate(
            flops=flops, transcendentals=0, bytes_accessed=bytes_accessed),
    )(x, *prepped_params)

    return latent_pad[:batch, :_LATENT_DIM], y[:batch]


# --------------------------------------------------------------------------- driver
if __name__ == "__main__":
    INPUT_DIM = 128
    BATCH = 1024          # -> 4 grid tiles of 256 rows (2 per TensorCore on v7x)

    key = jax.random.PRNGKey(0)
    key, kx = jax.random.split(key)
    x = jax.random.normal(kx, (BATCH, INPUT_DIM), jnp.float32)

    params = init_params(INPUT_DIM, key)
    prepped = prepare_params(params, INPUT_DIM)

    latent, y = autoencoder_forward(x, prepped, input_dim=INPUT_DIM)
    jax.block_until_ready((latent, y))

    assert latent.shape == (BATCH, _LATENT_DIM), latent.shape
    assert y.shape == (BATCH, INPUT_DIM), y.shape
    assert latent.dtype == jnp.bfloat16 and y.dtype == jnp.bfloat16
    assert bool(jnp.all(latent.astype(jnp.float32) >= 0.0))   # latent passed ReLU

    # Reference 1: identical numerics in plain JAX (folded params, bf16 MXU
    # operands, f32 accumulation, bf16 downcasts) -> tight tolerance.
    def ref_same_numerics(x, prepped):
        (w1, b1, w2, b2, w34, b34, w56, b56, w7, b7, w8, b8) = prepped

        def lin(h, w, b):
            return jnp.dot(h, w, preferred_element_type=jnp.float32) + b

        def rb(a):
            return jax.nn.relu(a).astype(jnp.bfloat16)

        h = rb(lin(x.astype(jnp.bfloat16), w1, b1))
        h = rb(lin(h, w2, b2))
        lat = rb(lin(h, w34, b34))
        h = rb(lin(lat, w56, b56))
        h = rb(lin(h, w7, b7))
        yv = lin(h, w8, b8).astype(jnp.bfloat16)
        return lat[:, :_LATENT_DIM], yv

    lat_ref, y_ref = ref_same_numerics(x, prepped)
    lat_err = float(jnp.max(jnp.abs(latent.astype(jnp.float32)
                                    - lat_ref.astype(jnp.float32))))
    y_err = float(jnp.max(jnp.abs(y.astype(jnp.float32)
                                  - y_ref.astype(jnp.float32))))
    assert lat_err < 2e-3, lat_err
    assert y_err < 2e-3, y_err

    # Reference 2: original unfused module in full f32 -> loose tolerance
    # (bf16 weights/activations + L3+L4 / D1+D2 folding perturb numerics slightly).
    def ref_f32(x, params):
        (w1, b1, w2, b2, w3, b3, w4, b4,
         w5, b5, w6, b6, w7, b7, w8, b8) = params
        h = jax.nn.relu(x @ w1 + b1)
        h = jax.nn.relu(h @ w2 + b2)
        h = h @ w3 + b3
        lat = jax.nn.relu(h @ w4 + b4)
        h = lat @ w5 + b5
        h = jax.nn.relu(h @ w6 + b6)
        h = jax.nn.relu(h @ w7 + b7)
        return lat, h @ w8 + b8

    lat32, y32 = ref_f32(x, params)
    lat_err32 = float(jnp.max(jnp.abs(latent.astype(jnp.float32) - lat32)))
    y_err32 = float(jnp.max(jnp.abs(y.astype(jnp.float32) - y32)))
    assert lat_err32 < 5e-2, lat_err32
    assert y_err32 < 5e-2, y_err32

    # Also exercise the non-tile-multiple / small-batch padding path.
    lat_s, y_s = autoencoder_forward(x[:8], prepped, input_dim=INPUT_DIM)
    jax.block_until_ready((lat_s, y_s))
    assert lat_s.shape == (8, _LATENT_DIM) and y_s.shape == (8, INPUT_DIM)
    assert jnp.allclose(lat_s.astype(jnp.float32), lat_ref[:8].astype(jnp.float32),
                        atol=2e-3, rtol=2e-3)
    assert jnp.allclose(y_s.astype(jnp.float32), y_ref[:8].astype(jnp.float32),
                        atol=2e-3, rtol=2e-3)

    print("KERNEL_OK")
</pallas_src>

<mosaic_0001>
module attributes {stable_mosaic.version = 11 : i64} {
  func.func @_ae_kernel(%arg0: i32, %arg1: memref<256x128xbf16, #tpu.memory_space<vmem>>, %arg2: memref<128x384xbf16, #tpu.memory_space<vmem>>, %arg3: memref<1x384xf32, #tpu.memory_space<vmem>>, %arg4: memref<384x128xbf16, #tpu.memory_space<vmem>>, %arg5: memref<1x128xf32, #tpu.memory_space<vmem>>, %arg6: memref<128x128xbf16, #tpu.memory_space<vmem>>, %arg7: memref<1x128xf32, #tpu.memory_space<vmem>>, %arg8: memref<128x128xbf16, #tpu.memory_space<vmem>>, %arg9: memref<1x128xf32, #tpu.memory_space<vmem>>, %arg10: memref<128x384xbf16, #tpu.memory_space<vmem>>, %arg11: memref<1x384xf32, #tpu.memory_space<vmem>>, %arg12: memref<384x128xbf16, #tpu.memory_space<vmem>>, %arg13: memref<1x128xf32, #tpu.memory_space<vmem>>, %arg14: memref<256x128xbf16, #tpu.memory_space<vmem>>, %arg15: memref<256x128xbf16, #tpu.memory_space<vmem>>) attributes {dimension_semantics = [#tpu.dimension_semantics<parallel>], iteration_bounds = array<i64: 4>, scalar_prefetch = 0 : i64, scratch_operands = 0 : i64, tpu.core_type = #tpu.core_type<tc>, window_params = [{transform_indices = @transform_0, window_bounds = array<i64: 256, 128>}, {pipeline_mode = #tpu.pipeline_mode<synchronous>, transform_indices = @transform_1, window_bounds = array<i64: 128, 384>}, {pipeline_mode = #tpu.pipeline_mode<synchronous>, transform_indices = @transform_2, window_bounds = array<i64: 1, 384>}, {pipeline_mode = #tpu.pipeline_mode<synchronous>, transform_indices = @transform_3, window_bounds = array<i64: 384, 128>}, {pipeline_mode = #tpu.pipeline_mode<synchronous>, transform_indices = @transform_4, window_bounds = array<i64: 1, 128>}, {pipeline_mode = #tpu.pipeline_mode<synchronous>, transform_indices = @transform_5, window_bounds = array<i64: 128, 128>}, {pipeline_mode = #tpu.pipeline_mode<synchronous>, transform_indices = @transform_6, window_bounds = array<i64: 1, 128>}, {pipeline_mode = #tpu.pipeline_mode<synchronous>, transform_indices = @transform_7, window_bounds = array<i64: 128, 128>}, {pipeline_mode = #tpu.pipeline_mode<synchronous>, transform_indices = @transform_8, window_bounds = array<i64: 1, 128>}, {pipeline_mode = #tpu.pipeline_mode<synchronous>, transform_indices = @transform_9, window_bounds = array<i64: 128, 384>}, {pipeline_mode = #tpu.pipeline_mode<synchronous>, transform_indices = @transform_10, window_bounds = array<i64: 1, 384>}, {pipeline_mode = #tpu.pipeline_mode<synchronous>, transform_indices = @transform_11, window_bounds = array<i64: 384, 128>}, {pipeline_mode = #tpu.pipeline_mode<synchronous>, transform_indices = @transform_12, window_bounds = array<i64: 1, 128>}, {transform_indices = @transform_13, window_bounds = array<i64: 256, 128>}, {transform_indices = @transform_14, window_bounds = array<i64: 256, 128>}]} {
    %c0 = arith.constant 0 : index
    %c0_0 = arith.constant 0 : index
    %0 = vector.load %arg1[%c0, %c0_0] : memref<256x128xbf16, #tpu.memory_space<vmem>>, vector<256x128xbf16>
    %c0_1 = arith.constant 0 : index
    %c0_2 = arith.constant 0 : index
    %1 = vector.load %arg2[%c0_1, %c0_2] : memref<128x384xbf16, #tpu.memory_space<vmem>>, vector<128x384xbf16>
    %cst = arith.constant dense<0.000000e+00> : vector<256x384xf32>
    %2 = tpu.matmul %0, %1, %cst {dimension_numbers = #tpu.dot_dimension_numbers<[1], [0], [0], [1], [0, 0, 1, 1], [], []>} : vector<256x128xbf16>, vector<128x384xbf16>, vector<256x384xf32> -> vector<256x384xf32>
    %c0_3 = arith.constant 0 : index
    %c0_4 = arith.constant 0 : index
    %3 = vector.load %arg3[%c0_3, %c0_4] : memref<1x384xf32, #tpu.memory_space<vmem>>, vector<1x384xf32>
    %4 = vector.broadcast %3 : vector<1x384xf32> to vector<256x384xf32>
    %5 = arith.addf %2, %4 : vector<256x384xf32>
    %cst_5 = arith.constant 0.000000e+00 : f32
    %6 = vector.broadcast %cst_5 : f32 to vector<256x384xf32>
    %7 = arith.maximumf %5, %6 : vector<256x384xf32>
    %8 = arith.truncf %7 : vector<256x384xf32> to vector<256x384xbf16>
    %c0_6 = arith.constant 0 : index
    %c0_7 = arith.constant 0 : index
    %9 = vector.load %arg4[%c0_6, %c0_7] : memref<384x128xbf16, #tpu.memory_space<vmem>>, vector<384x128xbf16>
    %cst_8 = arith.constant dense<0.000000e+00> : vector<256x128xf32>
    %10 = tpu.matmul %8, %9, %cst_8 {dimension_numbers = #tpu.dot_dimension_numbers<[1], [0], [0], [1], [0, 0, 1, 1], [], []>} : vector<256x384xbf16>, vector<384x128xbf16>, vector<256x128xf32> -> vector<256x128xf32>
    %c0_9 = arith.constant 0 : index
    %c0_10 = arith.constant 0 : index
    %11 = vector.load %arg5[%c0_9, %c0_10] : memref<1x128xf32, #tpu.memory_space<vmem>>, vector<1x128xf32>
    %12 = vector.broadcast %11 : vector<1x128xf32> to vector<256x128xf32>
    %13 = arith.addf %10, %12 : vector<256x128xf32>
    %cst_11 = arith.constant 0.000000e+00 : f32
    %14 = vector.broadcast %cst_11 : f32 to vector<256x128xf32>
    %15 = arith.maximumf %13, %14 : vector<256x128xf32>
    %16 = arith.truncf %15 : vector<256x128xf32> to vector<256x128xbf16>
    %c0_12 = arith.constant 0 : index
    %c0_13 = arith.constant 0 : index
    %17 = vector.load %arg6[%c0_12, %c0_13] : memref<128x128xbf16, #tpu.memory_space<vmem>>, vector<128x128xbf16>
    %cst_14 = arith.constant dense<0.000000e+00> : vector<256x128xf32>
    %18 = tpu.matmul %16, %17, %cst_14 {dimension_numbers = #tpu.dot_dimension_numbers<[1], [0], [0], [1], [0, 0, 1, 1], [], []>} : vector<256x128xbf16>, vector<128x128xbf16>, vector<256x128xf32> -> vector<256x128xf32>
    %c0_15 = arith.constant 0 : index
    %c0_16 = arith.constant 0 : index
    %19 = vector.load %arg7[%c0_15, %c0_16] : memref<1x128xf32, #tpu.memory_space<vmem>>, vector<1x128xf32>
    %20 = vector.broadcast %19 : vector<1x128xf32> to vector<256x128xf32>
    %21 = arith.addf %18, %20 : vector<256x128xf32>
    %cst_17 = arith.constant 0.000000e+00 : f32
    %22 = vector.broadcast %cst_17 : f32 to vector<256x128xf32>
    %23 = arith.maximumf %21, %22 : vector<256x128xf32>
    %24 = arith.truncf %23 : vector<256x128xf32> to vector<256x128xbf16>
    %c0_18 = arith.constant 0 : index
    %c0_19 = arith.constant 0 : index
    %25 = vector.load %arg14[%c0_18, %c0_19] : memref<256x128xbf16, #tpu.memory_space<vmem>>, vector<256x128xbf16>
    tpu.vector_store %arg14[%c0_18, %c0_19], %24 {strides = array<i32>} : memref<256x128xbf16, #tpu.memory_space<vmem>>, vector<256x128xbf16>,
    %c0_20 = arith.constant 0 : index
    %c0_21 = arith.constant 0 : index
    %26 = vector.load %arg8[%c0_20, %c0_21] : memref<128x128xbf16, #tpu.memory_space<vmem>>, vector<128x128xbf16>
    %cst_22 = arith.constant dense<0.000000e+00> : vector<256x128xf32>
    %27 = tpu.matmul %24, %26, %cst_22 {dimension_numbers = #tpu.dot_dimension_numbers<[1], [0], [0], [1], [0, 0, 1, 1], [], []>} : vector<256x128xbf16>, vector<128x128xbf16>, vector<256x128xf32> -> vector<256x128xf32>
    %c0_23 = arith.constant 0 : index
    %c0_24 = arith.constant 0 : index
    %28 = vector.load %arg9[%c0_23, %c0_24] : memref<1x128xf32, #tpu.memory_space<vmem>>, vector<1x128xf32>
    %29 = vector.broadcast %28 : vector<1x128xf32> to vector<256x128xf32>
    %30 = arith.addf %27, %29 : vector<256x128xf32>
    %cst_25 = arith.constant 0.000000e+00 : f32
    %31 = vector.broadcast %cst_25 : f32 to vector<256x128xf32>
    %32 = arith.maximumf %30, %31 : vector<256x128xf32>
    %33 = arith.truncf %32 : vector<256x128xf32> to vector<256x128xbf16>
    %c0_26 = arith.constant 0 : index
    %c0_27 = arith.constant 0 : index
    %34 = vector.load %arg10[%c0_26, %c0_27] : memref<128x384xbf16, #tpu.memory_space<vmem>>, vector<128x384xbf16>
    %cst_28 = arith.constant dense<0.000000e+00> : vector<256x384xf32>
    %35 = tpu.matmul %33, %34, %cst_28 {dimension_numbers = #tpu.dot_dimension_numbers<[1], [0], [0], [1], [0, 0, 1, 1], [], []>} : vector<256x128xbf16>, vector<128x384xbf16>, vector<256x384xf32> -> vector<256x384xf32>
    %c0_29 = arith.constant 0 : index
    %c0_30 = arith.constant 0 : index
    %36 = vector.load %arg11[%c0_29, %c0_30] : memref<1x384xf32, #tpu.memory_space<vmem>>, vector<1x384xf32>
    %37 = vector.broadcast %36 : vector<1x384xf32> to vector<256x384xf32>
    %38 = arith.addf %35, %37 : vector<256x384xf32>
    %cst_31 = arith.constant 0.000000e+00 : f32
    %39 = vector.broadcast %cst_31 : f32 to vector<256x384xf32>
    %40 = arith.maximumf %38, %39 : vector<256x384xf32>
    %41 = arith.truncf %40 : vector<256x384xf32> to vector<256x384xbf16>
    %c0_32 = arith.constant 0 : index
    %c0_33 = arith.constant 0 : index
    %42 = vector.load %arg12[%c0_32, %c0_33] : memref<384x128xbf16, #tpu.memory_space<vmem>>, vector<384x128xbf16>
    %cst_34 = arith.constant dense<0.000000e+00> : vector<256x128xf32>
    %43 = tpu.matmul %41, %42, %cst_34 {dimension_numbers = #tpu.dot_dimension_numbers<[1], [0], [0], [1], [0, 0, 1, 1], [], []>} : vector<256x384xbf16>, vector<384x128xbf16>, vector<256x128xf32> -> vector<256x128xf32>
    %c0_35 = arith.constant 0 : index
    %c0_36 = arith.constant 0 : index
    %44 = vector.load %arg13[%c0_35, %c0_36] : memref<1x128xf32, #tpu.memory_space<vmem>>, vector<1x128xf32>
    %45 = vector.broadcast %44 : vector<1x128xf32> to vector<256x128xf32>
    %46 = arith.addf %43, %45 : vector<256x128xf32>
    %47 = arith.truncf %46 : vector<256x128xf32> to vector<256x128xbf16>
    %c0_37 = arith.constant 0 : index
    %c0_38 = arith.constant 0 : index
    %48 = vector.load %arg15[%c0_37, %c0_38] : memref<256x128xbf16, #tpu.memory_space<vmem>>, vector<256x128xbf16>
    tpu.vector_store %arg15[%c0_37, %c0_38], %47 {strides = array<i32>} : memref<256x128xbf16, #tpu.memory_space<vmem>>, vector<256x128xbf16>,
    return
  }
  func.func @transform_0(%arg0: i32) -> (i32, i32) {
    %c0_i32 = arith.constant 0 : i32
    %c0_i32_0 = arith.constant 0 : i32
    return %arg0, %c0_i32 : i32, i32
  }
  func.func @transform_1(%arg0: i32) -> (i32, i32) {
    %c0_i32 = arith.constant 0 : i32
    %c0_i32_0 = arith.constant 0 : i32
    %c0_i32_1 = arith.constant 0 : i32
    return %c0_i32, %c0_i32_0 : i32, i32
  }
  func.func @transform_2(%arg0: i32) -> (i32, i32) {
    %c0_i32 = arith.constant 0 : i32
    %c0_i32_0 = arith.constant 0 : i32
    %c0_i32_1 = arith.constant 0 : i32
    return %c0_i32, %c0_i32_0 : i32, i32
  }
  func.func @transform_3(%arg0: i32) -> (i32, i32) {
    %c0_i32 = arith.constant 0 : i32
    %c0_i32_0 = arith.constant 0 : i32
    %c0_i32_1 = arith.constant 0 : i32
    return %c0_i32, %c0_i32_0 : i32, i32
  }
  func.func @transform_4(%arg0: i32) -> (i32, i32) {
    %c0_i32 = arith.constant 0 : i32
    %c0_i32_0 = arith.constant 0 : i32
    %c0_i32_1 = arith.constant 0 : i32
    return %c0_i32, %c0_i32_0 : i32, i32
  }
  func.func @transform_5(%arg0: i32) -> (i32, i32) {
    %c0_i32 = arith.constant 0 : i32
    %c0_i32_0 = arith.constant 0 : i32
    %c0_i32_1 = arith.constant 0 : i32
    return %c0_i32, %c0_i32_0 : i32, i32
  }
  func.func @transform_6(%arg0: i32) -> (i32, i32) {
    %c0_i32 = arith.constant 0 : i32
    %c0_i32_0 = arith.constant 0 : i32
    %c0_i32_1 = arith.constant 0 : i32
    return %c0_i32, %c0_i32_0 : i32, i32
  }
  func.func @transform_7(%arg0: i32) -> (i32, i32) {
    %c0_i32 = arith.constant 0 : i32
    %c0_i32_0 = arith.constant 0 : i32
    %c0_i32_1 = arith.constant 0 : i32
    return %c0_i32, %c0_i32_0 : i32, i32
  }
  func.func @transform_8(%arg0: i32) -> (i32, i32) {
    %c0_i32 = arith.constant 0 : i32
    %c0_i32_0 = arith.constant 0 : i32
    %c0_i32_1 = arith.constant 0 : i32
    return %c0_i32, %c0_i32_0 : i32, i32
  }
  func.func @transform_9(%arg0: i32) -> (i32, i32) {
    %c0_i32 = arith.constant 0 : i32
    %c0_i32_0 = arith.constant 0 : i32
    %c0_i32_1 = arith.constant 0 : i32
    return %c0_i32, %c0_i32_0 : i32, i32
  }
  func.func @transform_10(%arg0: i32) -> (i32, i32) {
    %c0_i32 = arith.constant 0 : i32
    %c0_i32_0 = arith.constant 0 : i32
    %c0_i32_1 = arith.constant 0 : i32
    return %c0_i32, %c0_i32_0 : i32, i32
  }
  func.func @transform_11(%arg0: i32) -> (i32, i32) {
    %c0_i32 = arith.constant 0 : i32
    %c0_i32_0 = arith.constant 0 : i32
    %c0_i32_1 = arith.constant 0 : i32
    return %c0_i32, %c0_i32_0 : i32, i32
  }
  func.func @transform_12(%arg0: i32) -> (i32, i32) {
    %c0_i32 = arith.constant 0 : i32
    %c0_i32_0 = arith.constant 0 : i32
    %c0_i32_1 = arith.constant 0 : i32
    return %c0_i32, %c0_i32_0 : i32, i32
  }
  func.func @transform_13(%arg0: i32) -> (i32, i32) {
    %c0_i32 = arith.constant 0 : i32
    %c0_i32_0 = arith.constant 0 : i32
    return %arg0, %c0_i32 : i32, i32
  }
  func.func @transform_14(%arg0: i32) -> (i32, i32) {
    %c0_i32 = arith.constant 0 : i32
    %c0_i32_0 = arith.constant 0 : i32
    return %arg0, %c0_i32 : i32, i32
  }
}

</mosaic_0001>

<llo_original>
// kernel: autoencoder_forward.1
$region0: #{autoencoder_forward.1}
  #allocation0 [shape = 'u32[]', space=smem, size = 0x4, offset = 0x4, fixed_abs, tag = 'smem constant byte address 0x4 - core index']
  #allocation1 [shape = 'u32[144,128]{1,0:T(1,128)}', space=vmem, size = 0x12000, scoped, tag = 'internal scratch']
  %s0 = inlined_call_operand.vmem [shape: bf16[1024,128], index: 0, kind: input, shape index: {}]
  %s1 = inlined_call_operand.vmem [shape: bf16[128,384], index: 1, kind: input, shape index: {}]
  %s2 = inlined_call_operand.vmem [shape: f32[1,384], index: 2, kind: input, shape index: {}]
  %s3 = inlined_call_operand.vmem [shape: bf16[384,128], index: 3, kind: input, shape index: {}]
  %s4 = inlined_call_operand.vmem [shape: f32[1,128], index: 4, kind: input, shape index: {}]
  %s5 = inlined_call_operand.vmem [shape: bf16[128,128], index: 5, kind: input, shape index: {}]
  %s6 = inlined_call_operand.vmem [shape: f32[1,128], index: 6, kind: input, shape index: {}]
  %s7 = inlined_call_operand.vmem [shape: bf16[128,128], index: 7, kind: input, shape index: {}]
  %s8 = inlined_call_operand.vmem [shape: f32[1,128], index: 8, kind: input, shape index: {}]
  %s9 = inlined_call_operand.vmem [shape: bf16[128,384], index: 9, kind: input, shape index: {}]
  %s10 = inlined_call_operand.vmem [shape: f32[1,384], index: 10, kind: input, shape index: {}]
  %s11 = inlined_call_operand.vmem [shape: bf16[384,128], index: 11, kind: input, shape index: {}]
  %s12 = inlined_call_operand.vmem [shape: f32[1,128], index: 12, kind: input, shape index: {}]
  %s13 = inlined_call_operand.vmem [shape: bf16[1024,128], index: 13, kind: output, shape index: {0}]
  %s14 = inlined_call_operand.hbm [shape: bf16[1024,128], index: 14, kind: output, shape index: {1}]
  %15 = xla_tuple %s13, %s14
  %s16 = sld [smem:[#allocation0]]
  $region93: #{autoencoder_forward.1} parent=0
    _
  %s18 = ssub.s32 1, %s16
  %s19 = scalar_select 0, %s18, %s16
  $region1: #{autoencoder_forward.1} parent=0
    #allocation2 [shape = 'u8[131072]{0}', space=vmem, size = 0x20000, scoped, tag = 'output window, operand 1']
    #allocation3 [shape = 's32[2]{0}', space=sflag, size = 0x8, scoped, tag = 'scoped memory for autoencoder_forward.1']
    %20 = vsyncpa [#allocation3], 0
    %s21 = scalar_lea.sflag [#allocation3], 1
    %22 = vsyncpa %s21, 0
    loop: start=0, step=1, limit=6
    $region2: #{autoencoder_forward.1} parent=1 // loop_pre_header
      _
    $region3: #{autoencoder_forward.1} parent=1 // loop_header
      %s24 = sphi 0, %s28
      %p25 = scmp.ge.s32.totalorder %s24, 6
      %s34 = sphi 0, %s36
      %s37 = sphi 0, %s34
      %s38 = sphi 0, %s37
      %s54 = sphi 0, %s38
      %s58 = sphi 0, %s58
      %s60 = sphi 0, %s58
      %s61 = sphi 0, %s60
      %s75 = sphi 0, %s61
      %s79 = sphi 0, %s79
      %s81 = sphi 0, %s79
      %s82 = sphi 0, %s81
      %s96 = sphi 0, %s82
      %s100 = sphi 0, %s100
      %s102 = sphi 0, %s100
      %s103 = sphi 0, %s102
      %s117 = sphi 0, %s103
      %s121 = sphi 0, %s121
      %s123 = sphi 0, %s121
      %s124 = sphi 0, %s123
      %s138 = sphi 0, %s124
      %s142 = sphi 0, %s142
      %s144 = sphi 0, %s142
      %s145 = sphi 0, %s144
      %s159 = sphi 0, %s145
      %s163 = sphi 0, %s163
      %s165 = sphi 0, %s163
      %s166 = sphi 0, %s165
      %s180 = sphi 0, %s166
      %s184 = sphi 0, %s184
      %s186 = sphi 0, %s184
      %s187 = sphi 0, %s186
      %s201 = sphi 0, %s187
      %s205 = sphi 0, %s205
      %s207 = sphi 0, %s205
      %s208 = sphi 0, %s207
      %s222 = sphi 0, %s208
      %s226 = sphi 0, %s226
      %s228 = sphi 0, %s226
      %s229 = sphi 0, %s228
      %s243 = sphi 0, %s229
      %s247 = sphi 0, %s247
      %s249 = sphi 0, %s247
      %s250 = sphi 0, %s249
      %s264 = sphi 0, %s250
      %s268 = sphi 0, %s268
      %s270 = sphi 0, %s268
      %s271 = sphi 0, %s270
      %s285 = sphi 0, %s271
      %s289 = sphi 0, %s289
      %s291 = sphi 0, %s289
      %s292 = sphi 0, %s291
      %s306 = sphi 0, %s292
      %s312 = sphi 0, %s314
      %s315 = sphi 0, %s312
      %s316 = sphi 0, %s315
      %s332 = sphi 0, %s316
      %s338 = sphi 0, %s340
      %s341 = sphi 0, %s338
      %s342 = sphi 0, %s341
      %s358 = sphi 0, %s342
    $region4: #{autoencoder_forward.1} parent=1 // loop_header_branch
      %27 = sbr.rel (%p25) target = $region8
    $region5: #{autoencoder_forward.1} parent=1 // loop_body
      %s29 = ssub.s32 %s24, 1
      %s30 = ssub.s32 %s24, 2
      %s31 = sadd.s32 %s24, 1
      %s32 = ssub.s32 %s24, %s31
      %p33 = scmp.eq.s32.totalorder %s32, 0
      %s35 = sadd.s32 %s34, 1
      %s36 = scalar_select %p33, %s34, %s35
      %p39 = pneg %p33
      %p40 = scmp.eq.s32.totalorder %s24, 3
      %p41 = por %p39, %p40
      %p42 = scmp.ne.s32.totalorder %s34, %s37
      %p43 = scmp.eq.s32.totalorder %s24, 0
      %p44 = por %p42, %p43
      %p45 = scmp.ne.s32.totalorder %s34, %s37
      %p46 = scmp.eq.s32.totalorder %s29, 3
      %p47 = por %p45, %p46
      %p48 = scmp.ne.s32.totalorder %s37, %s38
      %p49 = scmp.eq.s32.totalorder %s29, 0
      %p50 = por %p48, %p49
      %p51 = scmp.ne.s32.totalorder %s37, %s38
      %p52 = scmp.eq.s32.totalorder %s30, 3
      %p53 = por %p51, %p52
      %p55 = scmp.ne.s32.totalorder %s38, %s54
      %p56 = scmp.eq.s32.totalorder %s30, 0
      %p57 = por %p55, %p56
      %s59 = sadd.s32 %s58, 1
      %p62 = scmp.eq.s32.totalorder %s24, 3
      %p63 = scmp.ne.s32.totalorder %s58, %s60
      %p64 = scmp.eq.s32.totalorder %s24, 0
      %p65 = por %p63, %p64
      %p66 = scmp.ne.s32.totalorder %s58, %s60
      %p67 = scmp.eq.s32.totalorder %s29, 3
      %p68 = por %p66, %p67
      %p69 = scmp.ne.s32.totalorder %s60, %s61
      %p70 = scmp.eq.s32.totalorder %s29, 0
      %p71 = por %p69, %p70
      %p72 = scmp.ne.s32.totalorder %s60, %s61
      %p73 = scmp.eq.s32.totalorder %s30, 3
      %p74 = por %p72, %p73
      %p76 = scmp.ne.s32.totalorder %s61, %s75
      %p77 = scmp.eq.s32.totalorder %s30, 0
      %p78 = por %p76, %p77
      %s80 = sadd.s32 %s79, 1
      %p83 = scmp.eq.s32.totalorder %s24, 3
      %p84 = scmp.ne.s32.totalorder %s79, %s81
      %p85 = scmp.eq.s32.totalorder %s24, 0
      %p86 = por %p84, %p85
      %p87 = scmp.ne.s32.totalorder %s79, %s81
      %p88 = scmp.eq.s32.totalorder %s29, 3
      %p89 = por %p87, %p88
      %p90 = scmp.ne.s32.totalorder %s81, %s82
      %p91 = scmp.eq.s32.totalorder %s29, 0
      %p92 = por %p90, %p91
      %p93 = scmp.ne.s32.totalorder %s81, %s82
      %p94 = scmp.eq.s32.totalorder %s30, 3
      %p95 = por %p93, %p94
      %p97 = scmp.ne.s32.totalorder %s82, %s96
      %p98 = scmp.eq.s32.totalorder %s30, 0
      %p99 = por %p97, %p98
      %s101 = sadd.s32 %s100, 1
      %p104 = scmp.eq.s32.totalorder %s24, 3
      %p105 = scmp.ne.s32.totalorder %s100, %s102
      %p106 = scmp.eq.s32.totalorder %s24, 0
      %p107 = por %p105, %p106
      %p108 = scmp.ne.s32.totalorder %s100, %s102
      %p109 = scmp.eq.s32.totalorder %s29, 3
      %p110 = por %p108, %p109
      %p111 = scmp.ne.s32.totalorder %s102, %s103
      %p112 = scmp.eq.s32.totalorder %s29, 0
      %p113 = por %p111, %p112
      %p114 = scmp.ne.s32.totalorder %s102, %s103
      %p115 = scmp.eq.s32.totalorder %s30, 3
      %p116 = por %p114, %p115
      %p118 = scmp.ne.s32.totalorder %s103, %s117
      %p119 = scmp.eq.s32.totalorder %s30, 0
      %p120 = por %p118, %p119
      %s122 = sadd.s32 %s121, 1
      %p125 = scmp.eq.s32.totalorder %s24, 3
      %p126 = scmp.ne.s32.totalorder %s121, %s123
      %p127 = scmp.eq.s32.totalorder %s24, 0
      %p128 = por %p126, %p127
      %p129 = scmp.ne.s32.totalorder %s121, %s123
      %p130 = scmp.eq.s32.totalorder %s29, 3
      %p131 = por %p129, %p130
      %p132 = scmp.ne.s32.totalorder %s123, %s124
      %p133 = scmp.eq.s32.totalorder %s29, 0
      %p134 = por %p132, %p133
      %p135 = scmp.ne.s32.totalorder %s123, %s124
      %p136 = scmp.eq.s32.totalorder %s30, 3
      %p137 = por %p135, %p136
      %p139 = scmp.ne.s32.totalorder %s124, %s138
      %p140 = scmp.eq.s32.totalorder %s30, 0
      %p141 = por %p139, %p140
      %s143 = sadd.s32 %s142, 1
      %p146 = scmp.eq.s32.totalorder %s24, 3
      %p147 = scmp.ne.s32.totalorder %s142, %s144
      %p148 = scmp.eq.s32.totalorder %s24, 0
      %p149 = por %p147, %p148
      %p150 = scmp.ne.s32.totalorder %s142, %s144
      %p151 = scmp.eq.s32.totalorder %s29, 3
      %p152 = por %p150, %p151
      %p153 = scmp.ne.s32.totalorder %s144, %s145
      %p154 = scmp.eq.s32.totalorder %s29, 0
      %p155 = por %p153, %p154
      %p156 = scmp.ne.s32.totalorder %s144, %s145
      %p157 = scmp.eq.s32.totalorder %s30, 3
      %p158 = por %p156, %p157
      %p160 = scmp.ne.s32.totalorder %s145, %s159
      %p161 = scmp.eq.s32.totalorder %s30, 0
      %p162 = por %p160, %p161
      %s164 = sadd.s32 %s163, 1
      %p167 = scmp.eq.s32.totalorder %s24, 3
      %p168 = scmp.ne.s32.totalorder %s163, %s165
      %p169 = scmp.eq.s32.totalorder %s24, 0
      %p170 = por %p168, %p169
      %p171 = scmp.ne.s32.totalorder %s163, %s165
      %p172 = scmp.eq.s32.totalorder %s29, 3
      %p173 = por %p171, %p172
      %p174 = scmp.ne.s32.totalorder %s165, %s166
      %p175 = scmp.eq.s32.totalorder %s29, 0
      %p176 = por %p174, %p175
      %p177 = scmp.ne.s32.totalorder %s165, %s166
      %p178 = scmp.eq.s32.totalorder %s30, 3
      %p179 = por %p177, %p178
      %p181 = scmp.ne.s32.totalorder %s166, %s180
      %p182 = scmp.eq.s32.totalorder %s30, 0
      %p183 = por %p181, %p182
      %s185 = sadd.s32 %s184, 1
      %p188 = scmp.eq.s32.totalorder %s24, 3
      %p189 = scmp.ne.s32.totalorder %s184, %s186
      %p190 = scmp.eq.s32.totalorder %s24, 0
      %p191 = por %p189, %p190
      %p192 = scmp.ne.s32.totalorder %s184, %s186
      %p193 = scmp.eq.s32.totalorder %s29, 3
      %p194 = por %p192, %p193
      %p195 = scmp.ne.s32.totalorder %s186, %s187
      %p196 = scmp.eq.s32.totalorder %s29, 0
      %p197 = por %p195, %p196
      %p198 = scmp.ne.s32.totalorder %s186, %s187
      %p199 = scmp.eq.s32.totalorder %s30, 3
      %p200 = por %p198, %p199
      %p202 = scmp.ne.s32.totalorder %s187, %s201
      %p203 = scmp.eq.s32.totalorder %s30, 0
      %p204 = por %p202, %p203
      %s206 = sadd.s32 %s205, 1
      %p209 = scmp.eq.s32.totalorder %s24, 3
      %p210 = scmp.ne.s32.totalorder %s205, %s207
      %p211 = scmp.eq.s32.totalorder %s24, 0
      %p212 = por %p210, %p211
      %p213 = scmp.ne.s32.totalorder %s205, %s207
      %p214 = scmp.eq.s32.totalorder %s29, 3
      %p215 = por %p213, %p214
      %p216 = scmp.ne.s32.totalorder %s207, %s208
      %p217 = scmp.eq.s32.totalorder %s29, 0
      %p218 = por %p216, %p217
      %p219 = scmp.ne.s32.totalorder %s207, %s208
      %p220 = scmp.eq.s32.totalorder %s30, 3
      %p221 = por %p219, %p220
      %p223 = scmp.ne.s32.totalorder %s208, %s222
      %p224 = scmp.eq.s32.totalorder %s30, 0
      %p225 = por %p223, %p224
      %s227 = sadd.s32 %s226, 1
      %p230 = scmp.eq.s32.totalorder %s24, 3
      %p231 = scmp.ne.s32.totalorder %s226, %s228
      %p232 = scmp.eq.s32.totalorder %s24, 0
      %p233 = por %p231, %p232
      %p234 = scmp.ne.s32.totalorder %s226, %s228
      %p235 = scmp.eq.s32.totalorder %s29, 3
      %p236 = por %p234, %p235
      %p237 = scmp.ne.s32.totalorder %s228, %s229
      %p238 = scmp.eq.s32.totalorder %s29, 0
      %p239 = por %p237, %p238
      %p240 = scmp.ne.s32.totalorder %s228, %s229
      %p241 = scmp.eq.s32.totalorder %s30, 3
      %p242 = por %p240, %p241
      %p244 = scmp.ne.s32.totalorder %s229, %s243
      %p245 = scmp.eq.s32.totalorder %s30, 0
      %p246 = por %p244, %p245
      %s248 = sadd.s32 %s247, 1
      %p251 = scmp.eq.s32.totalorder %s24, 3
      %p252 = scmp.ne.s32.totalorder %s247, %s249
      %p253 = scmp.eq.s32.totalorder %s24, 0
      %p254 = por %p252, %p253
      %p255 = scmp.ne.s32.totalorder %s247, %s249
      %p256 = scmp.eq.s32.totalorder %s29, 3
      %p257 = por %p255, %p256
      %p258 = scmp.ne.s32.totalorder %s249, %s250
      %p259 = scmp.eq.s32.totalorder %s29, 0
      %p260 = por %p258, %p259
      %p261 = scmp.ne.s32.totalorder %s249, %s250
      %p262 = scmp.eq.s32.totalorder %s30, 3
      %p263 = por %p261, %p262
      %p265 = scmp.ne.s32.totalorder %s250, %s264
      %p266 = scmp.eq.s32.totalorder %s30, 0
      %p267 = por %p265, %p266
      %s269 = sadd.s32 %s268, 1
      %p272 = scmp.eq.s32.totalorder %s24, 3
      %p273 = scmp.ne.s32.totalorder %s268, %s270
      %p274 = scmp.eq.s32.totalorder %s24, 0
      %p275 = por %p273, %p274
      %p276 = scmp.ne.s32.totalorder %s268, %s270
      %p277 = scmp.eq.s32.totalorder %s29, 3
      %p278 = por %p276, %p277
      %p279 = scmp.ne.s32.totalorder %s270, %s271
      %p280 = scmp.eq.s32.totalorder %s29, 0
      %p281 = por %p279, %p280
      %p282 = scmp.ne.s32.totalorder %s270, %s271
      %p283 = scmp.eq.s32.totalorder %s30, 3
      %p284 = por %p282, %p283
      %p286 = scmp.ne.s32.totalorder %s271, %s285
      %p287 = scmp.eq.s32.totalorder %s30, 0
      %p288 = por %p286, %p287
      %s290 = sadd.s32 %s289, 1
      %p293 = scmp.eq.s32.totalorder %s24, 3
      %p294 = scmp.ne.s32.totalorder %s289, %s291
      %p295 = scmp.eq.s32.totalorder %s24, 0
      %p296 = por %p294, %p295
      %p297 = scmp.ne.s32.totalorder %s289, %s291
      %p298 = scmp.eq.s32.totalorder %s29, 3
      %p299 = por %p297, %p298
      %p300 = scmp.ne.s32.totalorder %s291, %s292
      %p301 = scmp.eq.s32.totalorder %s29, 0
      %p302 = por %p300, %p301
      %p303 = scmp.ne.s32.totalorder %s291, %s292
      %p304 = scmp.eq.s32.totalorder %s30, 3
      %p305 = por %p303, %p304
      %p307 = scmp.ne.s32.totalorder %s292, %s306
      %p308 = scmp.eq.s32.totalorder %s30, 0
      %p309 = por %p307, %p308
      %s310 = ssub.s32 %s24, %s31
      %p311 = scmp.eq.s32.totalorder %s310, 0
      %s313 = sadd.s32 %s312, 1
      %s314 = scalar_select %p311, %s312, %s313
      %p317 = pneg %p311
      %p318 = scmp.eq.s32.totalorder %s24, 3
      %p319 = por %p317, %p318
      %p320 = scmp.ne.s32.totalorder %s312, %s315
      %p321 = scmp.eq.s32.totalorder %s24, 0
      %p322 = por %p320, %p321
      %p323 = scmp.ne.s32.totalorder %s312, %s315
      %p324 = scmp.eq.s32.totalorder %s29, 3
      %p325 = por %p323, %p324
      %p326 = scmp.ne.s32.totalorder %s315, %s316
      %p327 = scmp.eq.s32.totalorder %s29, 0
      %p328 = por %p326, %p327
      %p329 = scmp.ne.s32.totalorder %s315, %s316
      %p330 = scmp.eq.s32.totalorder %s30, 3
      %p331 = por %p329, %p330
      %p333 = scmp.ne.s32.totalorder %s316, %s332
      %p334 = scmp.eq.s32.totalorder %s30, 0
      %p335 = por %p333, %p334
      %s336 = ssub.s32 %s24, %s31
      %p337 = scmp.eq.s32.totalorder %s336, 0
      %s339 = sadd.s32 %s338, 1
      %s340 = scalar_select %p337, %s338, %s339
      %p343 = pneg %p337
      %p344 = scmp.eq.s32.totalorder %s24, 3
      %p345 = por %p343, %p344
      %p346 = scmp.ne.s32.totalorder %s338, %s341
      %p347 = scmp.eq.s32.totalorder %s24, 0
      %p348 = por %p346, %p347
      %p349 = scmp.ne.s32.totalorder %s338, %s341
      %p350 = scmp.eq.s32.totalorder %s29, 3
      %p351 = por %p349, %p350
      %p352 = scmp.ne.s32.totalorder %s341, %s342
      %p353 = scmp.eq.s32.totalorder %s29, 0
      %p354 = por %p352, %p353
      %p355 = scmp.ne.s32.totalorder %s341, %s342
      %p356 = scmp.eq.s32.totalorder %s30, 3
      %p357 = por %p355, %p356
      %p359 = scmp.ne.s32.totalorder %s342, %s358
      %p360 = scmp.eq.s32.totalorder %s30, 0
      %p361 = por %p359, %p360
      %p362 = scmp.le.s32.totalorder 1, %s24
      %p363 = scmp.lt.s32.totalorder %s24, 5
      %p364 = pnand %p362, %p363
      %p365 = pneg %p364
      // Predicated region
      $region9: #{autoencoder_forward.1} parent=5 // pred_check
        _
      $region10: #{autoencoder_forward.1} parent=5 // pred_check_branch
        %367 = sbr.rel (%p364) target = $region12
      $region11: #{autoencoder_forward.1} parent=5 // pred_region
        %s368 = ssub.s32 %s24, 1
        // Predicated region
        $region13: #{autoencoder_forward.1} parent=11 // pred_check
          %p369 = pneg %p71
        $region14: #{autoencoder_forward.1} parent=11 // pred_check_branch
          %371 = sbr.rel (%p369) target = $region16
        $region15: #{autoencoder_forward.1} parent=11 // pred_region
          _
        $region16: #{autoencoder_forward.1} parent=11 // pred_fallthru
          _
        // Predicated region
        $region17: #{autoencoder_forward.1} parent=11 // pred_check
          %p372 = pneg %p92
        $region18: #{autoencoder_forward.1} parent=11 // pred_check_branch
          %374 = sbr.rel (%p372) target = $region20
        $region19: #{autoencoder_forward.1} parent=11 // pred_region
          _
        $region20: #{autoencoder_forward.1} parent=11 // pred_fallthru
          _
        // Predicated region
        $region21: #{autoencoder_forward.1} parent=11 // pred_check
          %p375 = pneg %p113
        $region22: #{autoencoder_forward.1} parent=11 // pred_check_branch
          %377 = sbr.rel (%p375) target = $region24
        $region23: #{autoencoder_forward.1} parent=11 // pred_region
          _
        $region24: #{autoencoder_forward.1} parent=11 // pred_fallthru
          _
        // Predicated region
        $region25: #{autoencoder_forward.1} parent=11 // pred_check
          %p378 = pneg %p134
        $region26: #{autoencoder_forward.1} parent=11 // pred_check_branch
          %380 = sbr.rel (%p378) target = $region28
        $region27: #{autoencoder_forward.1} parent=11 // pred_region
          _
        $region28: #{autoencoder_forward.1} parent=11 // pred_fallthru
          _
        // Predicated region
        $region29: #{autoencoder_forward.1} parent=11 // pred_check
          %p381 = pneg %p155
        $region30: #{autoencoder_forward.1} parent=11 // pred_check_branch
          %383 = sbr.rel (%p381) target = $region32
        $region31: #{autoencoder_forward.1} parent=11 // pred_region
          _
        $region32: #{autoencoder_forward.1} parent=11 // pred_fallthru
          _
        // Predicated region
        $region33: #{autoencoder_forward.1} parent=11 // pred_check
          %p384 = pneg %p176
        $region34: #{autoencoder_forward.1} parent=11 // pred_check_branch
          %386 = sbr.rel (%p384) target = $region36
        $region35: #{autoencoder_forward.1} parent=11 // pred_region
          _
        $region36: #{autoencoder_forward.1} parent=11 // pred_fallthru
          _
        // Predicated region
        $region37: #{autoencoder_forward.1} parent=11 // pred_check
          %p387 = pneg %p197
        $region38: #{autoencoder_forward.1} parent=11 // pred_check_branch
          %389 = sbr.rel (%p387) target = $region40
        $region39: #{autoencoder_forward.1} parent=11 // pred_region
          _
        $region40: #{autoencoder_forward.1} parent=11 // pred_fallthru
          _
        // Predicated region
        $region41: #{autoencoder_forward.1} parent=11 // pred_check
          %p390 = pneg %p218
        $region42: #{autoencoder_forward.1} parent=11 // pred_check_branch
          %392 = sbr.rel (%p390) target = $region44
        $region43: #{autoencoder_forward.1} parent=11 // pred_region
          _
        $region44: #{autoencoder_forward.1} parent=11 // pred_fallthru
          _
        // Predicated region
        $region45: #{autoencoder_forward.1} parent=11 // pred_check
          %p393 = pneg %p239
        $region46: #{autoencoder_forward.1} parent=11 // pred_check_branch
          %395 = sbr.rel (%p393) target = $region48
        $region47: #{autoencoder_forward.1} parent=11 // pred_region
          _
        $region48: #{autoencoder_forward.1} parent=11 // pred_fallthru
          _
        // Predicated region
        $region49: #{autoencoder_forward.1} parent=11 // pred_check
          %p396 = pneg %p260
        $region50: #{autoencoder_forward.1} parent=11 // pred_check_branch
          %398 = sbr.rel (%p396) target = $region52
        $region51: #{autoencoder_forward.1} parent=11 // pred_region
          _
        $region52: #{autoencoder_forward.1} parent=11 // pred_fallthru
          _
        // Predicated region
        $region53: #{autoencoder_forward.1} parent=11 // pred_check
          %p399 = pneg %p281
        $region54: #{autoencoder_forward.1} parent=11 // pred_check_branch
          %401 = sbr.rel (%p399) target = $region56
        $region55: #{autoencoder_forward.1} parent=11 // pred_region
          _
        $region56: #{autoencoder_forward.1} parent=11 // pred_fallthru
          _
        // Predicated region
        $region57: #{autoencoder_forward.1} parent=11 // pred_check
          %p402 = pneg %p302
        $region58: #{autoencoder_forward.1} parent=11 // pred_check_branch
          %404 = sbr.rel (%p402) target = $region60
        $region59: #{autoencoder_forward.1} parent=11 // pred_region
          _
        $region60: #{autoencoder_forward.1} parent=11 // pred_fallthru
          _
      $region12: #{autoencoder_forward.1} parent=5 // pred_fallthru
        _
      %p405 = scmp.lt.s32.totalorder %s24, 4
      // Predicated region
      $region61: #{autoencoder_forward.1} parent=5 // pred_check
        %p406 = pneg %p405
      $region62: #{autoencoder_forward.1} parent=5 // pred_check_branch
        %408 = sbr.rel (%p406) target = $region64
      $region63: #{autoencoder_forward.1} parent=5 // pred_region
        // Predicated region
        $region65: #{autoencoder_forward.1} parent=63 // pred_check
          %p409 = pneg %p44
        $region66: #{autoencoder_forward.1} parent=63 // pred_check_branch
          %411 = sbr.rel (%p409) target = $region68
        $region67: #{autoencoder_forward.1} parent=63 // pred_region
          %s412 = smul.u32 32, %s24
          %p413 = scmp.lt.s32.totalorder %s412, 127
          %s414 = scalar_select %p413, %s412, 127
          %s415 = smul.addr %s414, 4
          %s416 = scalar_lea.vmem %s0, %s415
          %s417 = smul.u32 32, %s24
        $region68: #{autoencoder_forward.1} parent=63 // pred_fallthru
          _
      $region64: #{autoencoder_forward.1} parent=5 // pred_fallthru
        _
      %p418 = scmp.le.s32.totalorder 1, %s24
      %p419 = scmp.lt.s32.totalorder %s24, 5
      %p420 = pnand %p418, %p419
      %p421 = pneg %p420
      // Predicated region
      $region69: #{autoencoder_forward.1} parent=5 // pred_check
        _
      $region70: #{autoencoder_forward.1} parent=5 // pred_check_branch
        %423 = sbr.rel (%p420) target = $region72
      $region71: #{autoencoder_forward.1} parent=5 // pred_region
        %s424 = ssub.s32 %s24, 1
        %s425 = smul.u32 32, %s29
        %p426 = scmp.lt.s32.totalorder %s425, 127
        %s427 = scalar_select %p426, %s425, 127
        %s428 = smul.addr %s427, 4
        %s429 = scalar_lea.vmem %s0, %s428
        %p430 = pneg %p50
        %p431 = pneg %p47
        %p432 = pneg %p71
        %p433 = pneg %p68
        %p434 = pneg %p92
        %p435 = pneg %p89
        %p436 = pneg %p113
        %p437 = pneg %p110
        %p438 = pneg %p134
        %p439 = pneg %p131
        %p440 = pneg %p155
        %p441 = pneg %p152
        %p442 = pneg %p176
        %p443 = pneg %p173
        %p444 = pneg %p197
        %p445 = pneg %p194
        %p446 = pneg %p218
        %p447 = pneg %p215
        %p448 = pneg %p239
        %p449 = pneg %p236
        %p450 = pneg %p260
        %p451 = pneg %p257
        %p452 = pneg %p281
        %p453 = pneg %p278
        %p454 = pneg %p302
        %p455 = pneg %p299
        %p456 = pneg %p328
        %p457 = pneg %p325
        %s458 = smul.u32 32, %s29
        %p459 = scmp.lt.s32.totalorder %s458, 127
        %s460 = scalar_select %p459, %s458, 127
        %s461 = smul.addr %s460, 4
        %s462 = scalar_lea.vmem %s13, %s461
        %p463 = pneg %p354
        %p464 = pneg %p351
        %s465 = sand.u32 %s341, 1
        %s466 = scalar_lea.sflag [#allocation3], %s465
        %s467 = sand.u32 %s341, 1
        %s468 = smul.addr %s467, 128
        %s469 = scalar_lea.vmem [#allocation2], %s468
        %s470 = smul.u32 32, %s29
        %p471 = scmp.lt.s32.totalorder %s470, 127
        %s472 = scalar_select %p471, %s470, 127
        %s473 = smul.addr %s472, 4
        %s474 = scalar_lea.vmem %s0, %s473
        %s475 = smul.u32 32, %s29
        %s476 = smul.u32 32, %s29
        %p477 = scmp.lt.s32.totalorder %s476, 127
        %s478 = scalar_select %p477, %s476, 127
        %s479 = smul.addr %s478, 4
        %s480 = scalar_lea.vmem %s13, %s479
        %s481 = smul.u32 32, %s29
        %s482 = smul.u32 32, %s29
        %v484 = vld [vmem:[%s474] sm:$0xf]
        %v485 = vld [vmem:[%s474 + $0x4] sm:$0xf]
        %v486 = vld [vmem:[%s474 + $0x8] sm:$0xf]
        %v487 = vld [vmem:[%s474 + $0xc] sm:$0xf]
        %v488 = vld [vmem:[%s474 + $0x10] sm:$0xf]
        %v489 = vld [vmem:[%s474 + $0x14] sm:$0xf]
        %v490 = vld [vmem:[%s474 + $0x18] sm:$0xf]
        %v491 = vld [vmem:[%s474 + $0x1c] sm:$0xf]
        %v492 = vld [vmem:[%s474 + $0x20] sm:$0xf]
        %v493 = vld [vmem:[%s474 + $0x24] sm:$0xf]
        %v494 = vld [vmem:[%s474 + $0x28] sm:$0xf]
        %v495 = vld [vmem:[%s474 + $0x2c] sm:$0xf]
        %v496 = vld [vmem:[%s474 + $0x30] sm:$0xf]
        %v497 = vld [vmem:[%s474 + $0x34] sm:$0xf]
        %v498 = vld [vmem:[%s474 + $0x38] sm:$0xf]
        %v499 = vld [vmem:[%s474 + $0x3c] sm:$0xf]
        %v500 = vld [vmem:[%s474 + $0x40] sm:$0xf]
        %v501 = vld [vmem:[%s474 + $0x44] sm:$0xf]
        %v502 = vld [vmem:[%s474 + $0x48] sm:$0xf]
        %v503 = vld [vmem:[%s474 + $0x4c] sm:$0xf]
        %v504 = vld [vmem:[%s474 + $0x50] sm:$0xf]
        %v505 = vld [vmem:[%s474 + $0x54] sm:$0xf]
        %v506 = vld [vmem:[%s474 + $0x58] sm:$0xf]
        %v507 = vld [vmem:[%s474 + $0x5c] sm:$0xf]
        %v508 = vld [vmem:[%s474 + $0x60] sm:$0xf]
        %v509 = vld [vmem:[%s474 + $0x64] sm:$0xf]
        %v510 = vld [vmem:[%s474 + $0x68] sm:$0xf]
        %v511 = vld [vmem:[%s474 + $0x6c] sm:$0xf]
        %v512 = vld [vmem:[%s474 + $0x70] sm:$0xf]
        %v513 = vld [vmem:[%s474 + $0x74] sm:$0xf]
        %v514 = vld [vmem:[%s474 + $0x78] sm:$0xf]
        %v515 = vld [vmem:[%s474 + $0x7c] sm:$0xf]
        %v516 = vld [vmem:[%s1] sm:$0xff]
        %v517 = vld [vmem:[%s1 + $0x8] sm:$0xf]
        %v518 = vld [vmem:[%s1 + $0xc] sm:$0xff]
        %v519 = vld [vmem:[%s1 + $0x14] sm:$0xf]
        %v520 = vld [vmem:[%s1 + $0x18] sm:$0xff]
        %v521 = vld [vmem:[%s1 + $0x20] sm:$0xf]
        %v522 = vld [vmem:[%s1 + $0x24] sm:$0xff]
        %v523 = vld [vmem:[%s1 + $0x2c] sm:$0xf]
        %v524 = vld [vmem:[%s1 + $0x30] sm:$0xff]
        %v525 = vld [vmem:[%s1 + $0x38] sm:$0xf]
        %v526 = vld [vmem:[%s1 + $0x3c] sm:$0xff]
        %v527 = vld [vmem:[%s1 + $0x44] sm:$0xf]
        %v528 = vld [vmem:[%s1 + $0x48] sm:$0xff]
        %v529 = vld [vmem:[%s1 + $0x50] sm:$0xf]
        %v530 = vld [vmem:[%s1 + $0x54] sm:$0xff]
        %v531 = vld [vmem:[%s1 + $0x5c] sm:$0xf]
        %v532 = vld [vmem:[%s1 + $0x60] sm:$0xff]
        %v533 = vld [vmem:[%s1 + $0x68] sm:$0xf]
        %v534 = vld [vmem:[%s1 + $0x6c] sm:$0xff]
        %v535 = vld [vmem:[%s1 + $0x74] sm:$0xf]
        %v536 = vld [vmem:[%s1 + $0x78] sm:$0xff]
        %v537 = vld [vmem:[%s1 + $0x80] sm:$0xf]
        %v538 = vld [vmem:[%s1 + $0x84] sm:$0xff]
        %v539 = vld [vmem:[%s1 + $0x8c] sm:$0xf]
        %v540 = vld [vmem:[%s1 + $0x90] sm:$0xff]
        %v541 = vld [vmem:[%s1 + $0x98] sm:$0xf]
        %v542 = vld [vmem:[%s1 + $0x9c] sm:$0xff]
        %v543 = vld [vmem:[%s1 + $0xa4] sm:$0xf]
        %v544 = vld [vmem:[%s1 + $0xa8] sm:$0xff]
        %v545 = vld [vmem:[%s1 + $0xb0] sm:$0xf]
        %v546 = vld [vmem:[%s1 + $0xb4] sm:$0xff]
        %v547 = vld [vmem:[%s1 + $0xbc] sm:$0xf]
        %v548 = vld [vmem:[%s2] sm:$0x7]
        %v550 = vlaneseq
        %v551 = vshrl.u32 %v550, 7
        %v552 = vsub.s32 0, %v551
        %v553 = vrot.slane %v548, %v552
        %v554 = vlaneseq
        %v555 = vshrl.u32 %v554, 7
        %v556 = vsub.s32 1, %v555
        %v557 = vrot.slane %v548, %v556
        %v558 = vlaneseq
        %v559 = vshrl.u32 %v558, 7
        %v560 = vsub.s32 2, %v559
        %v561 = vrot.slane %v548, %v560
        %v597 = vunpack.c.l.b16 %v484
        %v598 = vunpack.c.l.b16 %v485
        %v599 = vunpack.c.l.b16 %v486
        %v600 = vunpack.c.l.b16 %v487
        %v601 = vunpack.c.l.b16 %v488
        %v602 = vunpack.c.l.b16 %v489
        %v603 = vunpack.c.l.b16 %v490
        %v604 = vunpack.c.l.b16 %v491
        %v605 = vunpack.c.l.b16 %v492
        %v606 = vunpack.c.l.b16 %v493
        %v607 = vunpack.c.l.b16 %v494
        %v608 = vunpack.c.l.b16 %v495
        %v609 = vunpack.c.l.b16 %v496
        %v610 = vunpack.c.l.b16 %v497
        %v611 = vunpack.c.l.b16 %v498
        %v612 = vunpack.c.l.b16 %v499
        %v613 = vunpack.c.l.b16 %v500
        %v614 = vunpack.c.l.b16 %v501
        %v615 = vunpack.c.l.b16 %v502
        %v616 = vunpack.c.l.b16 %v503
        %v617 = vunpack.c.l.b16 %v504
        %v618 = vunpack.c.l.b16 %v505
        %v619 = vunpack.c.l.b16 %v506
        %v620 = vunpack.c.l.b16 %v507
        %v621 = vunpack.c.l.b16 %v508
        %v622 = vunpack.c.l.b16 %v509
        %v623 = vunpack.c.l.b16 %v510
        %v624 = vunpack.c.l.b16 %v511
        %v625 = vunpack.c.l.b16 %v512
        %v626 = vunpack.c.l.b16 %v513
        %v627 = vunpack.c.l.b16 %v514
        %v628 = vunpack.c.l.b16 %v515
        %v629 = vpack.c.b16 %v598, %v597
        %v630 = vpack.c.b16 %v600, %v599
        %v631 = vpack.c.b16 %v602, %v601
        %v632 = vpack.c.b16 %v604, %v603
        %v633 = vpack.c.b16 %v606, %v605
        %v634 = vpack.c.b16 %v608, %v607
        %v635 = vpack.c.b16 %v610, %v609
        %v636 = vpack.c.b16 %v612, %v611
        %v637 = vpack.c.b16 %v614, %v613
        %v638 = vpack.c.b16 %v616, %v615
        %v639 = vpack.c.b16 %v618, %v617
        %v640 = vpack.c.b16 %v620, %v619
        %v641 = vpack.c.b16 %v622, %v621
        %v642 = vpack.c.b16 %v624, %v623
        %v643 = vpack.c.b16 %v626, %v625
        %v644 = vpack.c.b16 %v628, %v627
        %v693 = vunpack.c.l.b16 %v516
        %v694 = vunpack.c.h.b16 %v516
        %v695 = vunpack.c.l.b16 %v517
        %v696 = vunpack.c.l.b16 %v518
        %v697 = vunpack.c.h.b16 %v518
        %v698 = vunpack.c.l.b16 %v519
        %v699 = vunpack.c.l.b16 %v520
        %v700 = vunpack.c.h.b16 %v520
        %v701 = vunpack.c.l.b16 %v521
        %v702 = vunpack.c.l.b16 %v522
        %v703 = vunpack.c.h.b16 %v522
        %v704 = vunpack.c.l.b16 %v523
        %v705 = vunpack.c.l.b16 %v524
        %v706 = vunpack.c.h.b16 %v524
        %v707 = vunpack.c.l.b16 %v525
        %v708 = vunpack.c.l.b16 %v526
        %v709 = vunpack.c.h.b16 %v526
        %v710 = vunpack.c.l.b16 %v527
        %v711 = vunpack.c.l.b16 %v528
        %v712 = vunpack.c.h.b16 %v528
        %v713 = vunpack.c.l.b16 %v529
        %v714 = vunpack.c.l.b16 %v530
        %v715 = vunpack.c.h.b16 %v530
        %v716 = vunpack.c.l.b16 %v531
        %v717 = vunpack.c.l.b16 %v532
        %v718 = vunpack.c.h.b16 %v532
        %v719 = vunpack.c.l.b16 %v533
        %v720 = vunpack.c.l.b16 %v534
        %v721 = vunpack.c.h.b16 %v534
        %v722 = vunpack.c.l.b16 %v535
        %v723 = vunpack.c.l.b16 %v536
        %v724 = vunpack.c.h.b16 %v536
        %v725 = vunpack.c.l.b16 %v537
        %v726 = vunpack.c.l.b16 %v538
        %v727 = vunpack.c.h.b16 %v538
        %v728 = vunpack.c.l.b16 %v539
        %v729 = vunpack.c.l.b16 %v540
        %v730 = vunpack.c.h.b16 %v540
        %v731 = vunpack.c.l.b16 %v541
        %v732 = vunpack.c.l.b16 %v542
        %v733 = vunpack.c.h.b16 %v542
        %v734 = vunpack.c.l.b16 %v543
        %v735 = vunpack.c.l.b16 %v544
        %v736 = vunpack.c.h.b16 %v544
        %v737 = vunpack.c.l.b16 %v545
        %v738 = vunpack.c.l.b16 %v546
        %v739 = vunpack.c.h.b16 %v546
        %v740 = vunpack.c.l.b16 %v547
        %v741 = vpack.c.b16 %v696, %v693
        %v742 = vpack.c.b16 %v697, %v694
        %v743 = vpack.c.b16 %v698, %v695
        %v744 = vpack.c.b16 %v702, %v699
        %v745 = vpack.c.b16 %v703, %v700
        %v746 = vpack.c.b16 %v704, %v701
        %v747 = vpack.c.b16 %v708, %v705
        %v748 = vpack.c.b16 %v709, %v706
        %v749 = vpack.c.b16 %v710, %v707
        %v750 = vpack.c.b16 %v714, %v711
        %v751 = vpack.c.b16 %v715, %v712
        %v752 = vpack.c.b16 %v716, %v713
        %v753 = vpack.c.b16 %v720, %v717
        %v754 = vpack.c.b16 %v721, %v718
        %v755 = vpack.c.b16 %v722, %v719
        %v756 = vpack.c.b16 %v726, %v723
        %v757 = vpack.c.b16 %v727, %v724
        %v758 = vpack.c.b16 %v728, %v725
        %v759 = vpack.c.b16 %v732, %v729
        %v760 = vpack.c.b16 %v733, %v730
        %v761 = vpack.c.b16 %v734, %v731
        %v762 = vpack.c.b16 %v738, %v735
        %v763 = vpack.c.b16 %v739, %v736
        %v764 = vpack.c.b16 %v740, %v737
        %789 = vmatprep.subr.bf16.mxu0 %v742
        %790 = vmatpush1.bf16.msra.mxu0 %v741
        %791 = vmatprep.subr.bf16.mxu0 %v745
        %792 = vmatpush1.bf16.msra.mxu0 %v744
        %793 = vmatprep.subr.bf16.mxu0 %v748
        %794 = vmatpush1.bf16.msra.mxu0 %v747
        %795 = vmatprep.subr.bf16.mxu0 %v751
        %796 = vmatpush1.bf16.msra.mxu0 %v750
        %797 = vmatprep.subr.bf16.mxu0 %v754
        %798 = vmatpush1.bf16.msra.mxu0 %v753
        %799 = vmatprep.subr.bf16.mxu0 %v757
        %800 = vmatpush1.bf16.msra.mxu0 %v756
        %801 = vmatprep.subr.bf16.mxu0 %v760
        %802 = vmatpush1.bf16.msra.mxu0 %v759
        %803 = vmatprep.subr.bf16.mxu0 %v763
        %804 = vmatpush1.bf16.msra.mxu0 %v762
        %805 = vmatprep.subr.bf16.mxu0 0
        %806 = vmatpush1.bf16.msra.mxu0 0
        %807 = vmatprep.subr.bf16.mxu0 0
        %808 = vmatpush1.bf16.msra.mxu0 0
        %809 = vmatprep.subr.bf16.mxu0 0
        %810 = vmatpush1.bf16.msra.mxu0 0
        %811 = vmatprep.subr.bf16.mxu0 0
        %812 = vmatpush1.bf16.msra.mxu0 0
        %813 = vmatprep.subr.bf16.mxu0 0
        %814 = vmatpush1.bf16.msra.mxu0 0
        %815 = vmatprep.subr.bf16.mxu0 0
        %816 = vmatpush1.bf16.msra.mxu0 0
        %817 = vmatprep.subr.bf16.mxu0 0
        %818 = vmatpush1.bf16.msra.mxu0 0
        %819 = vmatprep.subr.bf16.mxu0 0
        %820 = vmatpush1.bf16.msra.mxu0 0
        %821 = vmatprep.mubr.bf16.mxu0 0
        %822 = vmatmul.mubr.bf16.gmra.mrb[0].mxu0 %v629
        %v823 = vpop.f32.mrb[0].mxu0
        %v824 = vadd.f32 %v553, %v823
        %v825 = vpop.f32.mrb[0].mxu0
        %v826 = vadd.f32 %v557, %v825
        %v827 = vpop.f32.mrb[0].mxu0
        %v828 = vadd.f32 %v553, %v827
        %v829 = vpop.f32.mrb[0].mxu0
        %v830 = vadd.f32 %v557, %v829
        %831 = vmatprep.mubr.bf16.mxu0 0
        %832 = vmatmul.mubr.bf16.gmra.mrb[0].mxu0 %v630
        %v833 = vpop.f32.mrb[0].mxu0
        %v834 = vadd.f32 %v553, %v833
        %v835 = vpop.f32.mrb[0].mxu0
        %v836 = vadd.f32 %v557, %v835
        %v837 = vpop.f32.mrb[0].mxu0
        %v838 = vadd.f32 %v553, %v837
        %v839 = vpop.f32.mrb[0].mxu0
        %v840 = vadd.f32 %v557, %v839
        %841 = vmatprep.mubr.bf16.mxu0 0
        %842 = vmatmul.mubr.bf16.gmra.mrb[0].mxu0 %v631
        %v843 = vpop.f32.mrb[0].mxu0
        %v844 = vadd.f32 %v553, %v843
        %v845 = vpop.f32.mrb[0].mxu0
        %v846 = vadd.f32 %v557, %v845
        %v847 = vpop.f32.mrb[0].mxu0
        %v848 = vadd.f32 %v553, %v847
        %v849 = vpop.f32.mrb[0].mxu0
        %v850 = vadd.f32 %v557, %v849
        %851 = vmatprep.mubr.bf16.mxu0 0
        %852 = vmatmul.mubr.bf16.gmra.mrb[0].mxu0 %v632
        %v853 = vpop.f32.mrb[0].mxu0
        %v854 = vadd.f32 %v553, %v853
        %v855 = vpop.f32.mrb[0].mxu0
        %v856 = vadd.f32 %v557, %v855
        %v857 = vpop.f32.mrb[0].mxu0
        %v858 = vadd.f32 %v553, %v857
        %v859 = vpop.f32.mrb[0].mxu0
        %v860 = vadd.f32 %v557, %v859
        %861 = vmatprep.mubr.bf16.mxu0 0
        %862 = vmatmul.mubr.bf16.gmra.mrb[0].mxu0 %v633
        %v863 = vpop.f32.mrb[0].mxu0
        %v864 = vadd.f32 %v553, %v863
        %v865 = vpop.f32.mrb[0].mxu0
        %v866 = vadd.f32 %v557, %v865
        %v867 = vpop.f32.mrb[0].mxu0
        %v868 = vadd.f32 %v553, %v867
        %v869 = vpop.f32.mrb[0].mxu0
        %v870 = vadd.f32 %v557, %v869
        %871 = vmatprep.mubr.bf16.mxu0 0
        %872 = vmatmul.mubr.bf16.gmra.mrb[0].mxu0 %v634
        %v873 = vpop.f32.mrb[0].mxu0
        %v874 = vadd.f32 %v553, %v873
        %v875 = vpop.f32.mrb[0].mxu0
        %v876 = vadd.f32 %v557, %v875
        %v877 = vpop.f32.mrb[0].mxu0
        %v878 = vadd.f32 %v553, %v877
        %v879 = vpop.f32.mrb[0].mxu0
        %v880 = vadd.f32 %v557, %v879
        %881 = vmatprep.mubr.bf16.mxu0 0
        %882 = vmatmul.mubr.bf16.gmra.mrb[0].mxu0 %v635
        %v883 = vpop.f32.mrb[0].mxu0
        %v884 = vadd.f32 %v553, %v883
        %v885 = vpop.f32.mrb[0].mxu0
        %v886 = vadd.f32 %v557, %v885
        %v887 = vpop.f32.mrb[0].mxu0
        %v888 = vadd.f32 %v553, %v887
        %v889 = vpop.f32.mrb[0].mxu0
        %v890 = vadd.f32 %v557, %v889
        %891 = vmatprep.mubr.bf16.mxu0 0
        %892 = vmatmul.mubr.bf16.gmra.mrb[0].mxu0 %v636
        %v893 = vpop.f32.mrb[0].mxu0
        %v894 = vadd.f32 %v553, %v893
        %v895 = vpop.f32.mrb[0].mxu0
        %v896 = vadd.f32 %v557, %v895
        %v897 = vpop.f32.mrb[0].mxu0
        %v898 = vadd.f32 %v553, %v897
        %v899 = vpop.f32.mrb[0].mxu0
        %v900 = vadd.f32 %v557, %v899
        %901 = vmatprep.mubr.bf16.mxu0 0
        %902 = vmatmul.mubr.bf16.gmra.mrb[0].mxu0 %v637
        %v903 = vpop.f32.mrb[0].mxu0
        %v904 = vadd.f32 %v553, %v903
        %v905 = vpop.f32.mrb[0].mxu0
        %v906 = vadd.f32 %v557, %v905
        %v907 = vpop.f32.mrb[0].mxu0
        %v908 = vadd.f32 %v553, %v907
        %v909 = vpop.f32.mrb[0].mxu0
        %v910 = vadd.f32 %v557, %v909
        %911 = vmatprep.mubr.bf16.mxu0 0
        %912 = vmatmul.mubr.bf16.gmra.mrb[0].mxu0 %v638
        %v913 = vpop.f32.mrb[0].mxu0
        %v914 = vadd.f32 %v553, %v913
        %v915 = vpop.f32.mrb[0].mxu0
        %v916 = vadd.f32 %v557, %v915
        %v917 = vpop.f32.mrb[0].mxu0
        %v918 = vadd.f32 %v553, %v917
        %v919 = vpop.f32.mrb[0].mxu0
        %v920 = vadd.f32 %v557, %v919
        %921 = vmatprep.mubr.bf16.mxu0 0
        %922 = vmatmul.mubr.bf16.gmra.mrb[0].mxu0 %v639
        %v923 = vpop.f32.mrb[0].mxu0
        %v924 = vadd.f32 %v553, %v923
        %v925 = vpop.f32.mrb[0].mxu0
        %v926 = vadd.f32 %v557, %v925
        %v927 = vpop.f32.mrb[0].mxu0
        %v928 = vadd.f32 %v553, %v927
        %v929 = vpop.f32.mrb[0].mxu0
        %v930 = vadd.f32 %v557, %v929
        %931 = vmatprep.mubr.bf16.mxu0 0
        %932 = vmatmul.mubr.bf16.gmra.mrb[0].mxu0 %v640
        %v933 = vpop.f32.mrb[0].mxu0
        %v934 = vadd.f32 %v553, %v933
        %v935 = vpop.f32.mrb[0].mxu0
        %v936 = vadd.f32 %v557, %v935
        %v937 = vpop.f32.mrb[0].mxu0
        %v938 = vadd.f32 %v553, %v937
        %v939 = vpop.f32.mrb[0].mxu0
        %v940 = vadd.f32 %v557, %v939
        %941 = vmatprep.mubr.bf16.mxu0 0
        %942 = vmatmul.mubr.bf16.gmra.mrb[0].mxu0 %v641
        %v943 = vpop.f32.mrb[0].mxu0
        %v944 = vadd.f32 %v553, %v943
        %v945 = vpop.f32.mrb[0].mxu0
        %v946 = vadd.f32 %v557, %v945
        %v947 = vpop.f32.mrb[0].mxu0
        %v948 = vadd.f32 %v553, %v947
        %v949 = vpop.f32.mrb[0].mxu0
        %v950 = vadd.f32 %v557, %v949
        %951 = vmatprep.mubr.bf16.mxu0 0
        %952 = vmatmul.mubr.bf16.gmra.mrb[0].mxu0 %v642
        %v953 = vpop.f32.mrb[0].mxu0
        %v954 = vadd.f32 %v553, %v953
        %v955 = vpop.f32.mrb[0].mxu0
        %v956 = vadd.f32 %v557, %v955
        %v957 = vpop.f32.mrb[0].mxu0
        %v958 = vadd.f32 %v553, %v957
        %v959 = vpop.f32.mrb[0].mxu0
        %v960 = vadd.f32 %v557, %v959
        %961 = vmatprep.mubr.bf16.mxu0 0
        %962 = vmatmul.mubr.bf16.gmra.mrb[0].mxu0 %v643
        %v963 = vpop.f32.mrb[0].mxu0
        %v964 = vadd.f32 %v553, %v963
        %v965 = vpop.f32.mrb[0].mxu0
        %v966 = vadd.f32 %v557, %v965
        %v967 = vpop.f32.mrb[0].mxu0
        %v968 = vadd.f32 %v553, %v967
        %v969 = vpop.f32.mrb[0].mxu0
        %v970 = vadd.f32 %v557, %v969
        %971 = vmatprep.mubr.bf16.mxu0 0
        %972 = vmatmul.mubr.bf16.gmra.mrb[0].mxu0 %v644
        %v973 = vpop.f32.mrb[0].mxu0
        %v974 = vadd.f32 %v553, %v973
        %v975 = vpop.f32.mrb[0].mxu0
        %v976 = vadd.f32 %v557, %v975
        %v977 = vpop.f32.mrb[0].mxu0
        %v978 = vadd.f32 %v553, %v977
        %v979 = vpop.f32.mrb[0].mxu0
        %v980 = vadd.f32 %v557, %v979
        %981 = vdwg.mxu0
        %982 = vmatprep.subr.bf16.mxu0 0
        %983 = vmatpush1.bf16.msra.mxu0 %v743
        %984 = vmatprep.subr.bf16.mxu0 0
        %985 = vmatpush1.bf16.msra.mxu0 %v746
        %986 = vmatprep.subr.bf16.mxu0 0
        %987 = vmatpush1.bf16.msra.mxu0 %v749
        %988 = vmatprep.subr.bf16.mxu0 0
        %989 = vmatpush1.bf16.msra.mxu0 %v752
        %990 = vmatprep.subr.bf16.mxu0 0
        %991 = vmatpush1.bf16.msra.mxu0 %v755
        %992 = vmatprep.subr.bf16.mxu0 0
        %993 = vmatpush1.bf16.msra.mxu0 %v758
        %994 = vmatprep.subr.bf16.mxu0 0
        %995 = vmatpush1.bf16.msra.mxu0 %v761
        %996 = vmatprep.subr.bf16.mxu0 0
        %997 = vmatpush1.bf16.msra.mxu0 %v764
        %998 = vmatprep.subr.bf16.mxu0 0
        %999 = vmatpush1.bf16.msra.mxu0 0
        %1000 = vmatprep.subr.bf16.mxu0 0
        %1001 = vmatpush1.bf16.msra.mxu0 0
        %1002 = vmatprep.subr.bf16.mxu0 0
        %1003 = vmatpush1.bf16.msra.mxu0 0
        %1004 = vmatprep.subr.bf16.mxu0 0
        %1005 = vmatpush1.bf16.msra.mxu0 0
        %1006 = vmatprep.subr.bf16.mxu0 0
        %1007 = vmatpush1.bf16.msra.mxu0 0
        %1008 = vmatprep.subr.bf16.mxu0 0
        %1009 = vmatpush1.bf16.msra.mxu0 0
        %1010 = vmatprep.subr.bf16.mxu0 0
        %1011 = vmatpush1.bf16.msra.mxu0 0
        %1012 = vmatprep.subr.bf16.mxu0 0
        %1013 = vmatpush1.bf16.msra.mxu0 0
        %1014 = vmatprep.mubr.bf16.mxu0 0
        %1015 = vmatmul.mubr.bf16.gmra.mrb[0].mxu0 %v629
        %v1016 = vpop.f32.mrb[0].mxu0
        %v1017 = vadd.f32 %v561, %v1016
        %v1018 = vpop.f32.mrb[0].mxu0
        %v1019 = vpop.f32.mrb[0].mxu0
        %v1020 = vadd.f32 %v561, %v1019
        %v1021 = vpop.f32.mrb[0].mxu0
        %1022 = vmatprep.mubr.bf16.mxu0 0
        %1023 = vmatmul.mubr.bf16.gmra.mrb[0].mxu0 %v630
        %v1024 = vpop.f32.mrb[0].mxu0
        %v1025 = vadd.f32 %v561, %v1024
        %v1026 = vpop.f32.mrb[0].mxu0
        %v1027 = vpop.f32.mrb[0].mxu0
        %v1028 = vadd.f32 %v561, %v1027
        %v1029 = vpop.f32.mrb[0].mxu0
        %1030 = vmatprep.mubr.bf16.mxu0 0
        %1031 = vmatmul.mubr.bf16.gmra.mrb[0].mxu0 %v631
        %v1032 = vpop.f32.mrb[0].mxu0
        %v1033 = vadd.f32 %v561, %v1032
        %v1034 = vpop.f32.mrb[0].mxu0
        %v1035 = vpop.f32.mrb[0].mxu0
        %v1036 = vadd.f32 %v561, %v1035
        %v1037 = vpop.f32.mrb[0].mxu0
        %1038 = vmatprep.mubr.bf16.mxu0 0
        %1039 = vmatmul.mubr.bf16.gmra.mrb[0].mxu0 %v632
        %v1040 = vpop.f32.mrb[0].mxu0
        %v1041 = vadd.f32 %v561, %v1040
        %v1042 = vpop.f32.mrb[0].mxu0
        %v1043 = vpop.f32.mrb[0].mxu0
        %v1044 = vadd.f32 %v561, %v1043
        %v1045 = vpop.f32.mrb[0].mxu0
        %1046 = vmatprep.mubr.bf16.mxu0 0
        %1047 = vmatmul.mubr.bf16.gmra.mrb[0].mxu0 %v633
        %v1048 = vpop.f32.mrb[0].mxu0
        %v1049 = vadd.f32 %v561, %v1048
        %v1050 = vpop.f32.mrb[0].mxu0
        %v1051 = vpop.f32.mrb[0].mxu0
        %v1052 = vadd.f32 %v561, %v1051
        %v1053 = vpop.f32.mrb[0].mxu0
        %1054 = vmatprep.mubr.bf16.mxu0 0
        %1055 = vmatmul.mubr.bf16.gmra.mrb[0].mxu0 %v634
        %v1056 = vpop.f32.mrb[0].mxu0
        %v1057 = vadd.f32 %v561, %v1056
        %v1058 = vpop.f32.mrb[0].mxu0
        %v1059 = vpop.f32.mrb[0].mxu0
        %v1060 = vadd.f32 %v561, %v1059
        %v1061 = vpop.f32.mrb[0].mxu0
        %1062 = vmatprep.mubr.bf16.mxu0 0
        %1063 = vmatmul.mubr.bf16.gmra.mrb[0].mxu0 %v635
        %v1064 = vpop.f32.mrb[0].mxu0
        %v1065 = vadd.f32 %v561, %v1064
        %v1066 = vpop.f32.mrb[0].mxu0
        %v1067 = vpop.f32.mrb[0].mxu0
        %v1068 = vadd.f32 %v561, %v1067
        %v1069 = vpop.f32.mrb[0].mxu0
        %1070 = vmatprep.mubr.bf16.mxu0 0
        %1071 = vmatmul.mubr.bf16.gmra.mrb[0].mxu0 %v636
        %v1072 = vpop.f32.mrb[0].mxu0
        %v1073 = vadd.f32 %v561, %v1072
        %v1074 = vpop.f32.mrb[0].mxu0
        %v1075 = vpop.f32.mrb[0].mxu0
        %v1076 = vadd.f32 %v561, %v1075
        %v1077 = vpop.f32.mrb[0].mxu0
        %1078 = vmatprep.mubr.bf16.mxu0 0
        %1079 = vmatmul.mubr.bf16.gmra.mrb[0].mxu0 %v637
        %v1080 = vpop.f32.mrb[0].mxu0
        %v1081 = vadd.f32 %v561, %v1080
        %v1082 = vpop.f32.mrb[0].mxu0
        %v1083 = vpop.f32.mrb[0].mxu0
        %v1084 = vadd.f32 %v561, %v1083
        %v1085 = vpop.f32.mrb[0].mxu0
        %1086 = vmatprep.mubr.bf16.mxu0 0
        %1087 = vmatmul.mubr.bf16.gmra.mrb[0].mxu0 %v638
        %v1088 = vpop.f32.mrb[0].mxu0
        %v1089 = vadd.f32 %v561, %v1088
        %v1090 = vpop.f32.mrb[0].mxu0
        %v1091 = vpop.f32.mrb[0].mxu0
        %v1092 = vadd.f32 %v561, %v1091
        %v1093 = vpop.f32.mrb[0].mxu0
        %1094 = vmatprep.mubr.bf16.mxu0 0
        %1095 = vmatmul.mubr.bf16.gmra.mrb[0].mxu0 %v639
        %v1096 = vpop.f32.mrb[0].mxu0
        %v1097 = vadd.f32 %v561, %v1096
        %v1098 = vpop.f32.mrb[0].mxu0
        %v1099 = vpop.f32.mrb[0].mxu0
        %v1100 = vadd.f32 %v561, %v1099
        %v1101 = vpop.f32.mrb[0].mxu0
        %1102 = vmatprep.mubr.bf16.mxu0 0
        %1103 = vmatmul.mubr.bf16.gmra.mrb[0].mxu0 %v640
        %v1104 = vpop.f32.mrb[0].mxu0
        %v1105 = vadd.f32 %v561, %v1104
        %v1106 = vpop.f32.mrb[0].mxu0
        %v1107 = vpop.f32.mrb[0].mxu0
        %v1108 = vadd.f32 %v561, %v1107
        %v1109 = vpop.f32.mrb[0].mxu0
        %1110 = vmatprep.mubr.bf16.mxu0 0
        %1111 = vmatmul.mubr.bf16.gmra.mrb[0].mxu0 %v641
        %v1112 = vpop.f32.mrb[0].mxu0
        %v1113 = vadd.f32 %v561, %v1112
        %v1114 = vpop.f32.mrb[0].mxu0
        %v1115 = vpop.f32.mrb[0].mxu0
        %v1116 = vadd.f32 %v561, %v1115
        %v1117 = vpop.f32.mrb[0].mxu0
        %1118 = vmatprep.mubr.bf16.mxu0 0
        %1119 = vmatmul.mubr.bf16.gmra.mrb[0].mxu0 %v642
        %v1120 = vpop.f32.mrb[0].mxu0
        %v1121 = vadd.f32 %v561, %v1120
        %v1122 = vpop.f32.mrb[0].mxu0
        %v1123 = vpop.f32.mrb[0].mxu0
        %v1124 = vadd.f32 %v561, %v1123
        %v1125 = vpop.f32.mrb[0].mxu0
        %1126 = vmatprep.mubr.bf16.mxu0 0
        %1127 = vmatmul.mubr.bf16.gmra.mrb[0].mxu0 %v643
        %v1128 = vpop.f32.mrb[0].mxu0
        %v1129 = vadd.f32 %v561, %v1128
        %v1130 = vpop.f32.mrb[0].mxu0
        %v1131 = vpop.f32.mrb[0].mxu0
        %v1132 = vadd.f32 %v561, %v1131
        %v1133 = vpop.f32.mrb[0].mxu0
        %1134 = vmatprep.mubr.bf16.mxu0 0
        %1135 = vmatmul.mubr.bf16.gmra.mrb[0].mxu0 %v644
        %v1136 = vpop.f32.mrb[0].mxu0
        %v1137 = vadd.f32 %v561, %v1136
        %v1138 = vpop.f32.mrb[0].mxu0
        %v1139 = vpop.f32.mrb[0].mxu0
        %v1140 = vadd.f32 %v561, %v1139
        %v1141 = vpop.f32.mrb[0].mxu0
        %1142 = vdwg.mxu0
        %v1143 = vmax.f32 %v824, 0.0
        %v1144 = vmax.f32 %v826, 0.0
        %v1145 = vmax.f32 %v1017, 0.0
        %v1146 = vmax.f32 %v828, 0.0
        %v1147 = vmax.f32 %v830, 0.0
        %v1148 = vmax.f32 %v1020, 0.0
        %v1149 = vmax.f32 %v834, 0.0
        %v1150 = vmax.f32 %v836, 0.0
        %v1151 = vmax.f32 %v1025, 0.0
        %v1152 = vmax.f32 %v838, 0.0
        %v1153 = vmax.f32 %v840, 0.0
        %v1154 = vmax.f32 %v1028, 0.0
        %v1155 = vmax.f32 %v844, 0.0
        %v1156 = vmax.f32 %v846, 0.0
        %v1157 = vmax.f32 %v1033, 0.0
        %v1158 = vmax.f32 %v848, 0.0
        %v1159 = vmax.f32 %v850, 0.0
        %v1160 = vmax.f32 %v1036, 0.0
        %v1161 = vmax.f32 %v854, 0.0
        %v1162 = vmax.f32 %v856, 0.0
        %v1163 = vmax.f32 %v1041, 0.0
        %v1164 = vmax.f32 %v858, 0.0
        %v1165 = vmax.f32 %v860, 0.0
        %v1166 = vmax.f32 %v1044, 0.0
        %v1167 = vmax.f32 %v864, 0.0
        %v1168 = vmax.f32 %v866, 0.0
        %v1169 = vmax.f32 %v1049, 0.0
        %v1170 = vmax.f32 %v868, 0.0
        %v1171 = vmax.f32 %v870, 0.0
        %v1172 = vmax.f32 %v1052, 0.0
        %v1173 = vmax.f32 %v874, 0.0
        %v1174 = vmax.f32 %v876, 0.0
        %v1175 = vmax.f32 %v1057, 0.0
        %v1176 = vmax.f32 %v878, 0.0
        %v1177 = vmax.f32 %v880, 0.0
        %v1178 = vmax.f32 %v1060, 0.0
        %v1179 = vmax.f32 %v884, 0.0
        %v1180 = vmax.f32 %v886, 0.0
        %v1181 = vmax.f32 %v1065, 0.0
        %v1182 = vmax.f32 %v888, 0.0
        %v1183 = vmax.f32 %v890, 0.0
        %v1184 = vmax.f32 %v1068, 0.0
        %v1185 = vmax.f32 %v894, 0.0
        %v1186 = vmax.f32 %v896, 0.0
        %v1187 = vmax.f32 %v1073, 0.0
        %v1188 = vmax.f32 %v898, 0.0
        %v1189 = vmax.f32 %v900, 0.0
        %v1190 = vmax.f32 %v1076, 0.0
        %v1191 = vmax.f32 %v904, 0.0
        %v1192 = vmax.f32 %v906, 0.0
        %v1193 = vmax.f32 %v1081, 0.0
        %v1194 = vmax.f32 %v908, 0.0
        %v1195 = vmax.f32 %v910, 0.0
        %v1196 = vmax.f32 %v1084, 0.0
        %v1197 = vmax.f32 %v914, 0.0
        %v1198 = vmax.f32 %v916, 0.0
        %v1199 = vmax.f32 %v1089, 0.0
        %v1200 = vmax.f32 %v918, 0.0
        %v1201 = vmax.f32 %v920, 0.0
        %v1202 = vmax.f32 %v1092, 0.0
        %v1203 = vmax.f32 %v924, 0.0
        %v1204 = vmax.f32 %v926, 0.0
        %v1205 = vmax.f32 %v1097, 0.0
        %v1206 = vmax.f32 %v928, 0.0
        %v1207 = vmax.f32 %v930, 0.0
        %v1208 = vmax.f32 %v1100, 0.0
        %v1209 = vmax.f32 %v934, 0.0
        %v1210 = vmax.f32 %v936, 0.0
        %v1211 = vmax.f32 %v1105, 0.0
        %v1212 = vmax.f32 %v938, 0.0
        %v1213 = vmax.f32 %v940, 0.0
        %v1214 = vmax.f32 %v1108, 0.0
        %v1215 = vmax.f32 %v944, 0.0
        %v1216 = vmax.f32 %v946, 0.0
        %v1217 = vmax.f32 %v1113, 0.0
        %v1218 = vmax.f32 %v948, 0.0
        %v1219 = vmax.f32 %v950, 0.0
        %v1220 = vmax.f32 %v1116, 0.0
        %v1221 = vmax.f32 %v954, 0.0
        %v1222 = vmax.f32 %v956, 0.0
        %v1223 = vmax.f32 %v1121, 0.0
        %v1224 = vmax.f32 %v958, 0.0
        %v1225 = vmax.f32 %v960, 0.0
        %v1226 = vmax.f32 %v1124, 0.0
        %v1227 = vmax.f32 %v964, 0.0
        %v1228 = vmax.f32 %v966, 0.0
        %v1229 = vmax.f32 %v1129, 0.0
        %v1230 = vmax.f32 %v968, 0.0
        %v1231 = vmax.f32 %v970, 0.0
        %v1232 = vmax.f32 %v1132, 0.0
        %v1233 = vmax.f32 %v974, 0.0
        %v1234 = vmax.f32 %v976, 0.0
        %v1235 = vmax.f32 %v1137, 0.0
        %v1236 = vmax.f32 %v978, 0.0
        %v1237 = vmax.f32 %v980, 0.0
        %v1238 = vmax.f32 %v1140, 0.0
        %v1239 = vpack.c.bf16 %v1146, %v1143
        %v1240 = vpack.c.bf16 %v1147, %v1144
        %v1241 = vpack.c.bf16 %v1148, %v1145
        %v1242 = vpack.c.bf16 %v1152, %v1149
        %v1243 = vpack.c.bf16 %v1153, %v1150
        %v1244 = vpack.c.bf16 %v1154, %v1151
        %v1245 = vpack.c.bf16 %v1158, %v1155
        %v1246 = vpack.c.bf16 %v1159, %v1156
        %v1247 = vpack.c.bf16 %v1160, %v1157
        %v1248 = vpack.c.bf16 %v1164, %v1161
        %v1249 = vpack.c.bf16 %v1165, %v1162
        %v1250 = vpack.c.bf16 %v1166, %v1163
        %v1251 = vpack.c.bf16 %v1170, %v1167
        %v1252 = vpack.c.bf16 %v1171, %v1168
        %v1253 = vpack.c.bf16 %v1172, %v1169
        %v1254 = vpack.c.bf16 %v1176, %v1173
        %v1255 = vpack.c.bf16 %v1177, %v1174
        %v1256 = vpack.c.bf16 %v1178, %v1175
        %v1257 = vpack.c.bf16 %v1182, %v1179
        %v1258 = vpack.c.bf16 %v1183, %v1180
        %v1259 = vpack.c.bf16 %v1184, %v1181
        %v1260 = vpack.c.bf16 %v1188, %v1185
        %v1261 = vpack.c.bf16 %v1189, %v1186
        %v1262 = vpack.c.bf16 %v1190, %v1187
        %v1263 = vpack.c.bf16 %v1194, %v1191
        %v1264 = vpack.c.bf16 %v1195, %v1192
        %v1265 = vpack.c.bf16 %v1196, %v1193
        %v1266 = vpack.c.bf16 %v1200, %v1197
        %v1267 = vpack.c.bf16 %v1201, %v1198
        %v1268 = vpack.c.bf16 %v1202, %v1199
        %v1269 = vpack.c.bf16 %v1206, %v1203
        %v1270 = vpack.c.bf16 %v1207, %v1204
        %v1271 = vpack.c.bf16 %v1208, %v1205
        %v1272 = vpack.c.bf16 %v1212, %v1209
        %v1273 = vpack.c.bf16 %v1213, %v1210
        %v1274 = vpack.c.bf16 %v1214, %v1211
        %v1275 = vpack.c.bf16 %v1218, %v1215
        %v1276 = vpack.c.bf16 %v1219, %v1216
        %v1277 = vpack.c.bf16 %v1220, %v1217
        %v1278 = vpack.c.bf16 %v1224, %v1221
        %v1279 = vpack.c.bf16 %v1225, %v1222
        %v1280 = vpack.c.bf16 %v1226, %v1223
        %v1281 = vpack.c.bf16 %v1230, %v1227
        %v1282 = vpack.c.bf16 %v1231, %v1228
        %v1283 = vpack.c.bf16 %v1232, %v1229
        %v1284 = vpack.c.bf16 %v1236, %v1233
        %v1285 = vpack.c.bf16 %v1237, %v1234
        %v1286 = vpack.c.bf16 %v1238, %v1235
        %v1287 = vld [vmem:[%s3] sm:$0xf]
        %v1288 = vld [vmem:[%s3 + $0x4] sm:$0xf]
        %v1289 = vld [vmem:[%s3 + $0x8] sm:$0xf]
        %v1290 = vld [vmem:[%s3 + $0xc] sm:$0xf]
        %v1291 = vld [vmem:[%s3 + $0x10] sm:$0xf]
        %v1292 = vld [vmem:[%s3 + $0x14] sm:$0xf]
        %v1293 = vld [vmem:[%s3 + $0x18] sm:$0xf]
        %v1294 = vld [vmem:[%s3 + $0x1c] sm:$0xf]
        %v1295 = vld [vmem:[%s3 + $0x20] sm:$0xf]
        %v1296 = vld [vmem:[%s3 + $0x24] sm:$0xf]
        %v1297 = vld [vmem:[%s3 + $0x28] sm:$0xf]
        %v1298 = vld [vmem:[%s3 + $0x2c] sm:$0xf]
        %v1299 = vld [vmem:[%s3 + $0x30] sm:$0xf]
        %v1300 = vld [vmem:[%s3 + $0x34] sm:$0xf]
        %v1301 = vld [vmem:[%s3 + $0x38] sm:$0xf]
        %v1302 = vld [vmem:[%s3 + $0x3c] sm:$0xf]
        %v1303 = vld [vmem:[%s3 + $0x40] sm:$0xf]
        %v1304 = vld [vmem:[%s3 + $0x44] sm:$0xf]
        %v1305 = vld [vmem:[%s3 + $0x48] sm:$0xf]
        %v1306 = vld [vmem:[%s3 + $0x4c] sm:$0xf]
        %v1307 = vld [vmem:[%s3 + $0x50] sm:$0xf]
        %v1308 = vld [vmem:[%s3 + $0x54] sm:$0xf]
        %v1309 = vld [vmem:[%s3 + $0x58] sm:$0xf]
        %v1310 = vld [vmem:[%s3 + $0x5c] sm:$0xf]
        %v1311 = vld [vmem:[%s3 + $0x60] sm:$0xf]
        %v1312 = vld [vmem:[%s3 + $0x64] sm:$0xf]
        %v1313 = vld [vmem:[%s3 + $0x68] sm:$0xf]
        %v1314 = vld [vmem:[%s3 + $0x6c] sm:$0xf]
        %v1315 = vld [vmem:[%s3 + $0x70] sm:$0xf]
        %v1316 = vld [vmem:[%s3 + $0x74] sm:$0xf]
        %v1317 = vld [vmem:[%s3 + $0x78] sm:$0xf]
        %v1318 = vld [vmem:[%s3 + $0x7c] sm:$0xf]
        %v1319 = vld [vmem:[%s3 + $0x80] sm:$0xf]
        %v1320 = vld [vmem:[%s3 + $0x84] sm:$0xf]
        %v1321 = vld [vmem:[%s3 + $0x88] sm:$0xf]
        %v1322 = vld [vmem:[%s3 + $0x8c] sm:$0xf]
        %v1323 = vld [vmem:[%s3 + $0x90] sm:$0xf]
        %v1324 = vld [vmem:[%s3 + $0x94] sm:$0xf]
        %v1325 = vld [vmem:[%s3 + $0x98] sm:$0xf]
        %v1326 = vld [vmem:[%s3 + $0x9c] sm:$0xf]
        %v1327 = vld [vmem:[%s3 + $0xa0] sm:$0xf]
        %v1328 = vld [vmem:[%s3 + $0xa4] sm:$0xf]
        %v1329 = vld [vmem:[%s3 + $0xa8] sm:$0xf]
        %v1330 = vld [vmem:[%s3 + $0xac] sm:$0xf]
        %v1331 = vld [vmem:[%s3 + $0xb0] sm:$0xf]
        %v1332 = vld [vmem:[%s3 + $0xb4] sm:$0xf]
        %v1333 = vld [vmem:[%s3 + $0xb8] sm:$0xf]
        %v1334 = vld [vmem:[%s3 + $0xbc] sm:$0xf]
        %v1335 = vld [vmem:[%s4] sm:$0x1]
        %v1337 = vlaneseq
        %v1338 = vshrl.u32 %v1337, 7
        %v1339 = vsub.s32 0, %v1338
        %v1340 = vrot.slane %v1335, %v1339
        %v1390 = vunpack.c.l.b16 %v1287
        %v1391 = vunpack.c.l.b16 %v1288
        %v1392 = vunpack.c.l.b16 %v1289
        %v1393 = vunpack.c.l.b16 %v1290
        %v1394 = vunpack.c.l.b16 %v1291
        %v1395 = vunpack.c.l.b16 %v1292
        %v1396 = vunpack.c.l.b16 %v1293
        %v1397 = vunpack.c.l.b16 %v1294
        %v1398 = vunpack.c.l.b16 %v1295
        %v1399 = vunpack.c.l.b16 %v1296
        %v1400 = vunpack.c.l.b16 %v1297
        %v1401 = vunpack.c.l.b16 %v1298
        %v1402 = vunpack.c.l.b16 %v1299
        %v1403 = vunpack.c.l.b16 %v1300
        %v1404 = vunpack.c.l.b16 %v1301
        %v1405 = vunpack.c.l.b16 %v1302
        %v1406 = vunpack.c.l.b16 %v1303
        %v1407 = vunpack.c.l.b16 %v1304
        %v1408 = vunpack.c.l.b16 %v1305
        %v1409 = vunpack.c.l.b16 %v1306
        %v1410 = vunpack.c.l.b16 %v1307
        %v1411 = vunpack.c.l.b16 %v1308
        %v1412 = vunpack.c.l.b16 %v1309
        %v1413 = vunpack.c.l.b16 %v1310
        %v1414 = vunpack.c.l.b16 %v1311
        %v1415 = vunpack.c.l.b16 %v1312
        %v1416 = vunpack.c.l.b16 %v1313
        %v1417 = vunpack.c.l.b16 %v1314
        %v1418 = vunpack.c.l.b16 %v1315
        %v1419 = vunpack.c.l.b16 %v1316
        %v1420 = vunpack.c.l.b16 %v1317
        %v1421 = vunpack.c.l.b16 %v1318
        %v1422 = vunpack.c.l.b16 %v1319
        %v1423 = vunpack.c.l.b16 %v1320
        %v1424 = vunpack.c.l.b16 %v1321
        %v1425 = vunpack.c.l.b16 %v1322
        %v1426 = vunpack.c.l.b16 %v1323
        %v1427 = vunpack.c.l.b16 %v1324
        %v1428 = vunpack.c.l.b16 %v1325
        %v1429 = vunpack.c.l.b16 %v1326
        %v1430 = vunpack.c.l.b16 %v1327
        %v1431 = vunpack.c.l.b16 %v1328
        %v1432 = vunpack.c.l.b16 %v1329
        %v1433 = vunpack.c.l.b16 %v1330
        %v1434 = vunpack.c.l.b16 %v1331
        %v1435 = vunpack.c.l.b16 %v1332
        %v1436 = vunpack.c.l.b16 %v1333
        %v1437 = vunpack.c.l.b16 %v1334
        %v1438 = vpack.c.b16 %v1391, %v1390
        %v1439 = vpack.c.b16 %v1393, %v1392
        %v1440 = vpack.c.b16 %v1395, %v1394
        %v1441 = vpack.c.b16 %v1397, %v1396
        %v1442 = vpack.c.b16 %v1399, %v1398
        %v1443 = vpack.c.b16 %v1401, %v1400
        %v1444 = vpack.c.b16 %v1403, %v1402
        %v1445 = vpack.c.b16 %v1405, %v1404
        %v1446 = vpack.c.b16 %v1407, %v1406
        %v1447 = vpack.c.b16 %v1409, %v1408
        %v1448 = vpack.c.b16 %v1411, %v1410
        %v1449 = vpack.c.b16 %v1413, %v1412
        %v1450 = vpack.c.b16 %v1415, %v1414
        %v1451 = vpack.c.b16 %v1417, %v1416
        %v1452 = vpack.c.b16 %v1419, %v1418
        %v1453 = vpack.c.b16 %v1421, %v1420
        %v1454 = vpack.c.b16 %v1423, %v1422
        %v1455 = vpack.c.b16 %v1425, %v1424
        %v1456 = vpack.c.b16 %v1427, %v1426
        %v1457 = vpack.c.b16 %v1429, %v1428
        %v1458 = vpack.c.b16 %v1431, %v1430
        %v1459 = vpack.c.b16 %v1433, %v1432
        %v1460 = vpack.c.b16 %v1435, %v1434
        %v1461 = vpack.c.b16 %v1437, %v1436
        %1486 = vmatprep.subr.bf16.mxu0 0
        %1487 = vmatpush1.bf16.msra.mxu0 %v1438
        %1488 = vmatprep.subr.bf16.mxu0 0
        %1489 = vmatpush1.bf16.msra.mxu0 %v1439
        %1490 = vmatprep.subr.bf16.mxu0 0
        %1491 = vmatpush1.bf16.msra.mxu0 %v1440
        %1492 = vmatprep.subr.bf16.mxu0 0
        %1493 = vmatpush1.bf16.msra.mxu0 %v1441
        %1494 = vmatprep.subr.bf16.mxu0 0
        %1495 = vmatpush1.bf16.msra.mxu0 %v1442
        %1496 = vmatprep.subr.bf16.mxu0 0
        %1497 = vmatpush1.bf16.msra.mxu0 %v1443
        %1498 = vmatprep.subr.bf16.mxu0 0
        %1499 = vmatpush1.bf16.msra.mxu0 %v1444
        %1500 = vmatprep.subr.bf16.mxu0 0
        %1501 = vmatpush1.bf16.msra.mxu0 %v1445
        %1502 = vmatprep.subr.bf16.mxu0 0
        %1503 = vmatpush1.bf16.msra.mxu0 %v1446
        %1504 = vmatprep.subr.bf16.mxu0 0
        %1505 = vmatpush1.bf16.msra.mxu0 %v1447
        %1506 = vmatprep.subr.bf16.mxu0 0
        %1507 = vmatpush1.bf16.msra.mxu0 %v1448
        %1508 = vmatprep.subr.bf16.mxu0 0
        %1509 = vmatpush1.bf16.msra.mxu0 %v1449
        %1510 = vmatprep.subr.bf16.mxu0 0
        %1511 = vmatpush1.bf16.msra.mxu0 %v1450
        %1512 = vmatprep.subr.bf16.mxu0 0
        %1513 = vmatpush1.bf16.msra.mxu0 %v1451
        %1514 = vmatprep.subr.bf16.mxu0 0
        %1515 = vmatpush1.bf16.msra.mxu0 %v1452
        %1516 = vmatprep.subr.bf16.mxu0 0
        %1517 = vmatpush1.bf16.msra.mxu0 %v1453
        %1518 = vmatprep.mubr.bf16.mxu0 %v1240
        %1519 = vmatmul.mubr.bf16.gmra.mrb[0].mxu0 %v1239
        %v1520 = vpop.f32.mrb[0].mxu0
        %v1521 = vadd.f32 %v1340, %v1520
        %v1522 = vpop.f32.mrb[0].mxu0
        %v1523 = vpop.f32.mrb[0].mxu0
        %v1524 = vadd.f32 %v1340, %v1523
        %v1525 = vpop.f32.mrb[0].mxu0
        %1526 = vmatprep.mubr.bf16.mxu0 %v1243
        %1527 = vmatmul.mubr.bf16.gmra.mrb[0].mxu0 %v1242
        %v1528 = vpop.f32.mrb[0].mxu0
        %v1529 = vadd.f32 %v1340, %v1528
        %v1530 = vpop.f32.mrb[0].mxu0
        %v1531 = vpop.f32.mrb[0].mxu0
        %v1532 = vadd.f32 %v1340, %v1531
        %v1533 = vpop.f32.mrb[0].mxu0
        %1534 = vmatprep.mubr.bf16.mxu0 %v1246
        %1535 = vmatmul.mubr.bf16.gmra.mrb[0].mxu0 %v1245
        %v1536 = vpop.f32.mrb[0].mxu0
        %v1537 = vadd.f32 %v1340, %v1536
        %v1538 = vpop.f32.mrb[0].mxu0
        %v1539 = vpop.f32.mrb[0].mxu0
        %v1540 = vadd.f32 %v1340, %v1539
        %v1541 = vpop.f32.mrb[0].mxu0
        %1542 = vmatprep.mubr.bf16.mxu0 %v1249
        %1543 = vmatmul.mubr.bf16.gmra.mrb[0].mxu0 %v1248
        %v1544 = vpop.f32.mrb[0].mxu0
        %v1545 = vadd.f32 %v1340, %v1544
        %v1546 = vpop.f32.mrb[0].mxu0
        %v1547 = vpop.f32.mrb[0].mxu0
        %v1548 = vadd.f32 %v1340, %v1547
        %v1549 = vpop.f32.mrb[0].mxu0
        %1550 = vmatprep.mubr.bf16.mxu0 %v1252
        %1551 = vmatmul.mubr.bf16.gmra.mrb[0].mxu0 %v1251
        %v1552 = vpop.f32.mrb[0].mxu0
        %v1553 = vadd.f32 %v1340, %v1552
        %v1554 = vpop.f32.mrb[0].mxu0
        %v1555 = vpop.f32.mrb[0].mxu0
        %v1556 = vadd.f32 %v1340, %v1555
        %v1557 = vpop.f32.mrb[0].mxu0
        %1558 = vmatprep.mubr.bf16.mxu0 %v1255
        %1559 = vmatmul.mubr.bf16.gmra.mrb[0].mxu0 %v1254
        %v1560 = vpop.f32.mrb[0].mxu0
        %v1561 = vadd.f32 %v1340, %v1560
        %v1562 = vpop.f32.mrb[0].mxu0
        %v1563 = vpop.f32.mrb[0].mxu0
        %v1564 = vadd.f32 %v1340, %v1563
        %v1565 = vpop.f32.mrb[0].mxu0
        %1566 = vmatprep.mubr.bf16.mxu0 %v1258
        %1567 = vmatmul.mubr.bf16.gmra.mrb[0].mxu0 %v1257
        %v1568 = vpop.f32.mrb[0].mxu0
        %v1569 = vadd.f32 %v1340, %v1568
        %v1570 = vpop.f32.mrb[0].mxu0
        %v1571 = vpop.f32.mrb[0].mxu0
        %v1572 = vadd.f32 %v1340, %v1571
        %v1573 = vpop.f32.mrb[0].mxu0
        %1574 = vmatprep.mubr.bf16.mxu0 %v1261
        %1575 = vmatmul.mubr.bf16.gmra.mrb[0].mxu0 %v1260
        %v1576 = vpop.f32.mrb[0].mxu0
        %v1577 = vadd.f32 %v1340, %v1576
        %v1578 = vpop.f32.mrb[0].mxu0
        %v1579 = vpop.f32.mrb[0].mxu0
        %v1580 = vadd.f32 %v1340, %v1579
        %v1581 = vpop.f32.mrb[0].mxu0
        %1582 = vmatprep.mubr.bf16.mxu0 %v1264
        %1583 = vmatmul.mubr.bf16.gmra.mrb[0].mxu0 %v1263
        %v1584 = vpop.f32.mrb[0].mxu0
        %v1585 = vadd.f32 %v1340, %v1584
        %v1586 = vpop.f32.mrb[0].mxu0
        %v1587 = vpop.f32.mrb[0].mxu0
        %v1588 = vadd.f32 %v1340, %v1587
        %v1589 = vpop.f32.mrb[0].mxu0
        %1590 = vmatprep.mubr.bf16.mxu0 %v1267
        %1591 = vmatmul.mubr.bf16.gmra.mrb[0].mxu0 %v1266
        %v1592 = vpop.f32.mrb[0].mxu0
        %v1593 = vadd.f32 %v1340, %v1592
        %v1594 = vpop.f32.mrb[0].mxu0
        %v1595 = vpop.f32.mrb[0].mxu0
        %v1596 = vadd.f32 %v1340, %v1595
        %v1597 = vpop.f32.mrb[0].mxu0
        %1598 = vmatprep.mubr.bf16.mxu0 %v1270
        %1599 = vmatmul.mubr.bf16.gmra.mrb[0].mxu0 %v1269
        %v1600 = vpop.f32.mrb[0].mxu0
        %v1601 = vadd.f32 %v1340, %v1600
        %v1602 = vpop.f32.mrb[0].mxu0
        %v1603 = vpop.f32.mrb[0].mxu0
        %v1604 = vadd.f32 %v1340, %v1603
        %v1605 = vpop.f32.mrb[0].mxu0
        %1606 = vmatprep.mubr.bf16.mxu0 %v1273
        %1607 = vmatmul.mubr.bf16.gmra.mrb[0].mxu0 %v1272
        %v1608 = vpop.f32.mrb[0].mxu0
        %v1609 = vadd.f32 %v1340, %v1608
        %v1610 = vpop.f32.mrb[0].mxu0
        %v1611 = vpop.f32.mrb[0].mxu0
        %v1612 = vadd.f32 %v1340, %v1611
        %v1613 = vpop.f32.mrb[0].mxu0
        %1614 = vmatprep.mubr.bf16.mxu0 %v1276
        %1615 = vmatmul.mubr.bf16.gmra.mrb[0].mxu0 %v1275
        %v1616 = vpop.f32.mrb[0].mxu0
        %v1617 = vadd.f32 %v1340, %v1616
        %v1618 = vpop.f32.mrb[0].mxu0
        %v1619 = vpop.f32.mrb[0].mxu0
        %v1620 = vadd.f32 %v1340, %v1619
        %v1621 = vpop.f32.mrb[0].mxu0
        %1622 = vmatprep.mubr.bf16.mxu0 %v1279
        %1623 = vmatmul.mubr.bf16.gmra.mrb[0].mxu0 %v1278
        %v1624 = vpop.f32.mrb[0].mxu0
        %v1625 = vadd.f32 %v1340, %v1624
        %v1626 = vpop.f32.mrb[0].mxu0
        %v1627 = vpop.f32.mrb[0].mxu0
        %v1628 = vadd.f32 %v1340, %v1627
        %v1629 = vpop.f32.mrb[0].mxu0
        %1630 = vmatprep.mubr.bf16.mxu0 %v1282
        %1631 = vmatmul.mubr.bf16.gmra.mrb[0].mxu0 %v1281
        %v1632 = vpop.f32.mrb[0].mxu0
        %v1633 = vadd.f32 %v1340, %v1632
        %v1634 = vpop.f32.mrb[0].mxu0
        %v1635 = vpop.f32.mrb[0].mxu0
        %v1636 = vadd.f32 %v1340, %v1635
        %v1637 = vpop.f32.mrb[0].mxu0
        %1638 = vmatprep.mubr.bf16.mxu0 %v1285
        %1639 = vmatmul.mubr.bf16.gmra.mrb[0].mxu0 %v1284
        %v1640 = vpop.f32.mrb[0].mxu0
        %v1641 = vadd.f32 %v1340, %v1640
        %v1642 = vpop.f32.mrb[0].mxu0
        %v1643 = vpop.f32.mrb[0].mxu0
        %v1644 = vadd.f32 %v1340, %v1643
        %v1645 = vpop.f32.mrb[0].mxu0
        %1646 = vdwg.mxu0
        %1647 = vmatprep.subr.bf16.mxu0 0
        %1648 = vmatpush1.bf16.msra.mxu0 %v1454
        %1649 = vmatprep.subr.bf16.mxu0 0
        %1650 = vmatpush1.bf16.msra.mxu0 %v1455
        %1651 = vmatprep.subr.bf16.mxu0 0
        %1652 = vmatpush1.bf16.msra.mxu0 %v1456
        %1653 = vmatprep.subr.bf16.mxu0 0
        %1654 = vmatpush1.bf16.msra.mxu0 %v1457
        %1655 = vmatprep.subr.bf16.mxu0 0
        %1656 = vmatpush1.bf16.msra.mxu0 %v1458
        %1657 = vmatprep.subr.bf16.mxu0 0
        %1658 = vmatpush1.bf16.msra.mxu0 %v1459
        %1659 = vmatprep.subr.bf16.mxu0 0
        %1660 = vmatpush1.bf16.msra.mxu0 %v1460
        %1661 = vmatprep.subr.bf16.mxu0 0
        %1662 = vmatpush1.bf16.msra.mxu0 %v1461
        %1663 = vmatprep.subr.bf16.mxu0 0
        %1664 = vmatpush1.bf16.msra.mxu0 0
        %1665 = vmatprep.subr.bf16.mxu0 0
        %1666 = vmatpush1.bf16.msra.mxu0 0
        %1667 = vmatprep.subr.bf16.mxu0 0
        %1668 = vmatpush1.bf16.msra.mxu0 0
        %1669 = vmatprep.subr.bf16.mxu0 0
        %1670 = vmatpush1.bf16.msra.mxu0 0
        %1671 = vmatprep.subr.bf16.mxu0 0
        %1672 = vmatpush1.bf16.msra.mxu0 0
        %1673 = vmatprep.subr.bf16.mxu0 0
        %1674 = vmatpush1.bf16.msra.mxu0 0
        %1675 = vmatprep.subr.bf16.mxu0 0
        %1676 = vmatpush1.bf16.msra.mxu0 0
        %1677 = vmatprep.subr.bf16.mxu0 0
        %1678 = vmatpush1.bf16.msra.mxu0 0
        %1679 = vmatprep.mubr.bf16.mxu0 0
        %1680 = vmatmul.mubr.bf16.gmra.mrb[0].mxu0 %v1241
        %v1681 = vpop.f32.mrb[0].mxu0
        %v1682 = vadd.f32 %v1521, %v1681
        %v1683 = vpop.f32.mrb[0].mxu0
        %v1684 = vpop.f32.mrb[0].mxu0
        %v1685 = vadd.f32 %v1524, %v1684
        %v1686 = vpop.f32.mrb[0].mxu0
        %1687 = vmatprep.mubr.bf16.mxu0 0
        %1688 = vmatmul.mubr.bf16.gmra.mrb[0].mxu0 %v1244
        %v1689 = vpop.f32.mrb[0].mxu0
        %v1690 = vadd.f32 %v1529, %v1689
        %v1691 = vpop.f32.mrb[0].mxu0
        %v1692 = vpop.f32.mrb[0].mxu0
        %v1693 = vadd.f32 %v1532, %v1692
        %v1694 = vpop.f32.mrb[0].mxu0
        %1695 = vmatprep.mubr.bf16.mxu0 0
        %1696 = vmatmul.mubr.bf16.gmra.mrb[0].mxu0 %v1247
        %v1697 = vpop.f32.mrb[0].mxu0
        %v1698 = vadd.f32 %v1537, %v1697
        %v1699 = vpop.f32.mrb[0].mxu0
        %v1700 = vpop.f32.mrb[0].mxu0
        %v1701 = vadd.f32 %v1540, %v1700
        %v1702 = vpop.f32.mrb[0].mxu0
        %1703 = vmatprep.mubr.bf16.mxu0 0
        %1704 = vmatmul.mubr.bf16.gmra.mrb[0].mxu0 %v1250
        %v1705 = vpop.f32.mrb[0].mxu0
        %v1706 = vadd.f32 %v1545, %v1705
        %v1707 = vpop.f32.mrb[0].mxu0
        %v1708 = vpop.f32.mrb[0].mxu0
        %v1709 = vadd.f32 %v1548, %v1708
        %v1710 = vpop.f32.mrb[0].mxu0
        %1711 = vmatprep.mubr.bf16.mxu0 0
        %1712 = vmatmul.mubr.bf16.gmra.mrb[0].mxu0 %v1253
        %v1713 = vpop.f32.mrb[0].mxu0
        %v1714 = vadd.f32 %v1553, %v1713
        %v1715 = vpop.f32.mrb[0].mxu0
        %v1716 = vpop.f32.mrb[0].mxu0
        %v1717 = vadd.f32 %v1556, %v1716
        %v1718 = vpop.f32.mrb[0].mxu0
        %1719 = vmatprep.mubr.bf16.mxu0 0
        %1720 = vmatmul.mubr.bf16.gmra.mrb[0].mxu0 %v1256
        %v1721 = vpop.f32.mrb[0].mxu0
        %v1722 = vadd.f32 %v1561, %v1721
        %v1723 = vpop.f32.mrb[0].mxu0
        %v1724 = vpop.f32.mrb[0].mxu0
        %v1725 = vadd.f32 %v1564, %v1724
        %v1726 = vpop.f32.mrb[0].mxu0
        %1727 = vmatprep.mubr.bf16.mxu0 0
        %1728 = vmatmul.mubr.bf16.gmra.mrb[0].mxu0 %v1259
        %v1729 = vpop.f32.mrb[0].mxu0
        %v1730 = vadd.f32 %v1569, %v1729
        %v1731 = vpop.f32.mrb[0].mxu0
        %v1732 = vpop.f32.mrb[0].mxu0
        %v1733 = vadd.f32 %v1572, %v1732
        %v1734 = vpop.f32.mrb[0].mxu0
        %1735 = vmatprep.mubr.bf16.mxu0 0
        %1736 = vmatmul.mubr.bf16.gmra.mrb[0].mxu0 %v1262
        %v1737 = vpop.f32.mrb[0].mxu0
        %v1738 = vadd.f32 %v1577, %v1737
        %v1739 = vpop.f32.mrb[0].mxu0
        %v1740 = vpop.f32.mrb[0].mxu0
        %v1741 = vadd.f32 %v1580, %v1740
        %v1742 = vpop.f32.mrb[0].mxu0
        %1743 = vmatprep.mubr.bf16.mxu0 0
        %1744 = vmatmul.mubr.bf16.gmra.mrb[0].mxu0 %v1265
        %v1745 = vpop.f32.mrb[0].mxu0
        %v1746 = vadd.f32 %v1585, %v1745
        %v1747 = vpop.f32.mrb[0].mxu0
        %v1748 = vpop.f32.mrb[0].mxu0
        %v1749 = vadd.f32 %v1588, %v1748
        %v1750 = vpop.f32.mrb[0].mxu0
        %1751 = vmatprep.mubr.bf16.mxu0 0
        %1752 = vmatmul.mubr.bf16.gmra.mrb[0].mxu0 %v1268
        %v1753 = vpop.f32.mrb[0].mxu0
        %v1754 = vadd.f32 %v1593, %v1753
        %v1755 = vpop.f32.mrb[0].mxu0
        %v1756 = vpop.f32.mrb[0].mxu0
        %v1757 = vadd.f32 %v1596, %v1756
        %v1758 = vpop.f32.mrb[0].mxu0
        %1759 = vmatprep.mubr.bf16.mxu0 0
        %1760 = vmatmul.mubr.bf16.gmra.mrb[0].mxu0 %v1271
        %v1761 = vpop.f32.mrb[0].mxu0
        %v1762 = vadd.f32 %v1601, %v1761
        %v1763 = vpop.f32.mrb[0].mxu0
        %v1764 = vpop.f32.mrb[0].mxu0
        %v1765 = vadd.f32 %v1604, %v1764
        %v1766 = vpop.f32.mrb[0].mxu0
        %1767 = vmatprep.mubr.bf16.mxu0 0
        %1768 = vmatmul.mubr.bf16.gmra.mrb[0].mxu0 %v1274
        %v1769 = vpop.f32.mrb[0].mxu0
        %v1770 = vadd.f32 %v1609, %v1769
        %v1771 = vpop.f32.mrb[0].mxu0
        %v1772 = vpop.f32.mrb[0].mxu0
        %v1773 = vadd.f32 %v1612, %v1772
        %v1774 = vpop.f32.mrb[0].mxu0
        %1775 = vmatprep.mubr.bf16.mxu0 0
        %1776 = vmatmul.mubr.bf16.gmra.mrb[0].mxu0 %v1277
        %v1777 = vpop.f32.mrb[0].mxu0
        %v1778 = vadd.f32 %v1617, %v1777
        %v1779 = vpop.f32.mrb[0].mxu0
        %v1780 = vpop.f32.mrb[0].mxu0
        %v1781 = vadd.f32 %v1620, %v1780
        %v1782 = vpop.f32.mrb[0].mxu0
        %1783 = vmatprep.mubr.bf16.mxu0 0
        %1784 = vmatmul.mubr.bf16.gmra.mrb[0].mxu0 %v1280
        %v1785 = vpop.f32.mrb[0].mxu0
        %v1786 = vadd.f32 %v1625, %v1785
        %v1787 = vpop.f32.mrb[0].mxu0
        %v1788 = vpop.f32.mrb[0].mxu0
        %v1789 = vadd.f32 %v1628, %v1788
        %v1790 = vpop.f32.mrb[0].mxu0
        %1791 = vmatprep.mubr.bf16.mxu0 0
        %1792 = vmatmul.mubr.bf16.gmra.mrb[0].mxu0 %v1283
        %v1793 = vpop.f32.mrb[0].mxu0
        %v1794 = vadd.f32 %v1633, %v1793
        %v1795 = vpop.f32.mrb[0].mxu0
        %v1796 = vpop.f32.mrb[0].mxu0
        %v1797 = vadd.f32 %v1636, %v1796
        %v1798 = vpop.f32.mrb[0].mxu0
        %1799 = vmatprep.mubr.bf16.mxu0 0
        %1800 = vmatmul.mubr.bf16.gmra.mrb[0].mxu0 %v1286
        %v1801 = vpop.f32.mrb[0].mxu0
        %v1802 = vadd.f32 %v1641, %v1801
        %v1803 = vpop.f32.mrb[0].mxu0
        %v1804 = vpop.f32.mrb[0].mxu0
        %v1805 = vadd.f32 %v1644, %v1804
        %v1806 = vpop.f32.mrb[0].mxu0
        %1807 = vdwg.mxu0
        %v1808 = vmax.f32 %v1682, 0.0
        %v1809 = vmax.f32 %v1685, 0.0
        %v1810 = vmax.f32 %v1690, 0.0
        %v1811 = vmax.f32 %v1693, 0.0
        %v1812 = vmax.f32 %v1698, 0.0
        %v1813 = vmax.f32 %v1701, 0.0
        %v1814 = vmax.f32 %v1706, 0.0
        %v1815 = vmax.f32 %v1709, 0.0
        %v1816 = vmax.f32 %v1714, 0.0
        %v1817 = vmax.f32 %v1717, 0.0
        %v1818 = vmax.f32 %v1722, 0.0
        %v1819 = vmax.f32 %v1725, 0.0
        %v1820 = vmax.f32 %v1730, 0.0
        %v1821 = vmax.f32 %v1733, 0.0
        %v1822 = vmax.f32 %v1738, 0.0
        %v1823 = vmax.f32 %v1741, 0.0
        %v1824 = vmax.f32 %v1746, 0.0
        %v1825 = vmax.f32 %v1749, 0.0
        %v1826 = vmax.f32 %v1754, 0.0
        %v1827 = vmax.f32 %v1757, 0.0
        %v1828 = vmax.f32 %v1762, 0.0
        %v1829 = vmax.f32 %v1765, 0.0
        %v1830 = vmax.f32 %v1770, 0.0
        %v1831 = vmax.f32 %v1773, 0.0
        %v1832 = vmax.f32 %v1778, 0.0
        %v1833 = vmax.f32 %v1781, 0.0
        %v1834 = vmax.f32 %v1786, 0.0
        %v1835 = vmax.f32 %v1789, 0.0
        %v1836 = vmax.f32 %v1794, 0.0
        %v1837 = vmax.f32 %v1797, 0.0
        %v1838 = vmax.f32 %v1802, 0.0
        %v1839 = vmax.f32 %v1805, 0.0
        %v1840 = vpack.c.bf16 %v1809, %v1808
        %v1841 = vpack.c.bf16 %v1811, %v1810
        %v1842 = vpack.c.bf16 %v1813, %v1812
        %v1843 = vpack.c.bf16 %v1815, %v1814
        %v1844 = vpack.c.bf16 %v1817, %v1816
        %v1845 = vpack.c.bf16 %v1819, %v1818
        %v1846 = vpack.c.bf16 %v1821, %v1820
        %v1847 = vpack.c.bf16 %v1823, %v1822
        %v1848 = vpack.c.bf16 %v1825, %v1824
        %v1849 = vpack.c.bf16 %v1827, %v1826
        %v1850 = vpack.c.bf16 %v1829, %v1828
        %v1851 = vpack.c.bf16 %v1831, %v1830
        %v1852 = vpack.c.bf16 %v1833, %v1832
        %v1853 = vpack.c.bf16 %v1835, %v1834
        %v1854 = vpack.c.bf16 %v1837, %v1836
        %v1855 = vpack.c.bf16 %v1839, %v1838
        %v1856 = vld [vmem:[%s5] sm:$0xf]
        %v1857 = vld [vmem:[%s5 + $0x4] sm:$0xf]
        %v1858 = vld [vmem:[%s5 + $0x8] sm:$0xf]
        %v1859 = vld [vmem:[%s5 + $0xc] sm:$0xf]
        %v1860 = vld [vmem:[%s5 + $0x10] sm:$0xf]
        %v1861 = vld [vmem:[%s5 + $0x14] sm:$0xf]
        %v1862 = vld [vmem:[%s5 + $0x18] sm:$0xf]
        %v1863 = vld [vmem:[%s5 + $0x1c] sm:$0xf]
        %v1864 = vld [vmem:[%s5 + $0x20] sm:$0xf]
        %v1865 = vld [vmem:[%s5 + $0x24] sm:$0xf]
        %v1866 = vld [vmem:[%s5 + $0x28] sm:$0xf]
        %v1867 = vld [vmem:[%s5 + $0x2c] sm:$0xf]
        %v1868 = vld [vmem:[%s5 + $0x30] sm:$0xf]
        %v1869 = vld [vmem:[%s5 + $0x34] sm:$0xf]
        %v1870 = vld [vmem:[%s5 + $0x38] sm:$0xf]
        %v1871 = vld [vmem:[%s5 + $0x3c] sm:$0xf]
        %v1872 = vld [vmem:[%s6] sm:$0x1]
        %v1874 = vlaneseq
        %v1875 = vshrl.u32 %v1874, 7
        %v1876 = vsub.s32 0, %v1875
        %v1877 = vrot.slane %v1872, %v1876
        %v1895 = vunpack.c.l.b16 %v1856
        %v1896 = vunpack.c.l.b16 %v1857
        %v1897 = vunpack.c.l.b16 %v1858
        %v1898 = vunpack.c.l.b16 %v1859
        %v1899 = vunpack.c.l.b16 %v1860
        %v1900 = vunpack.c.l.b16 %v1861
        %v1901 = vunpack.c.l.b16 %v1862
        %v1902 = vunpack.c.l.b16 %v1863
        %v1903 = vunpack.c.l.b16 %v1864
        %v1904 = vunpack.c.l.b16 %v1865
        %v1905 = vunpack.c.l.b16 %v1866
        %v1906 = vunpack.c.l.b16 %v1867
        %v1907 = vunpack.c.l.b16 %v1868
        %v1908 = vunpack.c.l.b16 %v1869
        %v1909 = vunpack.c.l.b16 %v1870
        %v1910 = vunpack.c.l.b16 %v1871
        %v1911 = vpack.c.b16 %v1896, %v1895
        %v1912 = vpack.c.b16 %v1898, %v1897
        %v1913 = vpack.c.b16 %v1900, %v1899
        %v1914 = vpack.c.b16 %v1902, %v1901
        %v1915 = vpack.c.b16 %v1904, %v1903
        %v1916 = vpack.c.b16 %v1906, %v1905
        %v1917 = vpack.c.b16 %v1908, %v1907
        %v1918 = vpack.c.b16 %v1910, %v1909
        %1927 = vmatprep.subr.bf16.mxu0 0
        %1928 = vmatpush1.bf16.msra.mxu0 %v1911
        %1929 = vmatprep.subr.bf16.mxu0 0
        %1930 = vmatpush1.bf16.msra.mxu0 %v1912
        %1931 = vmatprep.subr.bf16.mxu0 0
        %1932 = vmatpush1.bf16.msra.mxu0 %v1913
        %1933 = vmatprep.subr.bf16.mxu0 0
        %1934 = vmatpush1.bf16.msra.mxu0 %v1914
        %1935 = vmatprep.subr.bf16.mxu0 0
        %1936 = vmatpush1.bf16.msra.mxu0 %v1915
        %1937 = vmatprep.subr.bf16.mxu0 0
        %1938 = vmatpush1.bf16.msra.mxu0 %v1916
        %1939 = vmatprep.subr.bf16.mxu0 0
        %1940 = vmatpush1.bf16.msra.mxu0 %v1917
        %1941 = vmatprep.subr.bf16.mxu0 0
        %1942 = vmatpush1.bf16.msra.mxu0 %v1918
        %1943 = vmatprep.subr.bf16.mxu0 0
        %1944 = vmatpush1.bf16.msra.mxu0 0
        %1945 = vmatprep.subr.bf16.mxu0 0
        %1946 = vmatpush1.bf16.msra.mxu0 0
        %1947 = vmatprep.subr.bf16.mxu0 0
        %1948 = vmatpush1.bf16.msra.mxu0 0
        %1949 = vmatprep.subr.bf16.mxu0 0
        %1950 = vmatpush1.bf16.msra.mxu0 0
        %1951 = vmatprep.subr.bf16.mxu0 0
        %1952 = vmatpush1.bf16.msra.mxu0 0
        %1953 = vmatprep.subr.bf16.mxu0 0
        %1954 = vmatpush1.bf16.msra.mxu0 0
        %1955 = vmatprep.subr.bf16.mxu0 0
        %1956 = vmatpush1.bf16.msra.mxu0 0
        %1957 = vmatprep.subr.bf16.mxu0 0
        %1958 = vmatpush1.bf16.msra.mxu0 0
        %1959 = vmatprep.mubr.bf16.mxu0 0
        %1960 = vmatmul.mubr.bf16.gmra.mrb[0].mxu0 %v1840
        %v1961 = vpop.f32.mrb[0].mxu0
        %v1962 = vadd.f32 %v1877, %v1961
        %v1963 = vpop.f32.mrb[0].mxu0
        %v1964 = vpop.f32.mrb[0].mxu0
        %v1965 = vadd.f32 %v1877, %v1964
        %v1966 = vpop.f32.mrb[0].mxu0
        %1967 = vmatprep.mubr.bf16.mxu0 0
        %1968 = vmatmul.mubr.bf16.gmra.mrb[0].mxu0 %v1841
        %v1969 = vpop.f32.mrb[0].mxu0
        %v1970 = vadd.f32 %v1877, %v1969
        %v1971 = vpop.f32.mrb[0].mxu0
        %v1972 = vpop.f32.mrb[0].mxu0
        %v1973 = vadd.f32 %v1877, %v1972
        %v1974 = vpop.f32.mrb[0].mxu0
        %1975 = vmatprep.mubr.bf16.mxu0 0
        %1976 = vmatmul.mubr.bf16.gmra.mrb[0].mxu0 %v1842
        %v1977 = vpop.f32.mrb[0].mxu0
        %v1978 = vadd.f32 %v1877, %v1977
        %v1979 = vpop.f32.mrb[0].mxu0
        %v1980 = vpop.f32.mrb[0].mxu0
        %v1981 = vadd.f32 %v1877, %v1980
        %v1982 = vpop.f32.mrb[0].mxu0
        %1983 = vmatprep.mubr.bf16.mxu0 0
        %1984 = vmatmul.mubr.bf16.gmra.mrb[0].mxu0 %v1843
        %v1985 = vpop.f32.mrb[0].mxu0
        %v1986 = vadd.f32 %v1877, %v1985
        %v1987 = vpop.f32.mrb[0].mxu0
        %v1988 = vpop.f32.mrb[0].mxu0
        %v1989 = vadd.f32 %v1877, %v1988
        %v1990 = vpop.f32.mrb[0].mxu0
        %1991 = vmatprep.mubr.bf16.mxu0 0
        %1992 = vmatmul.mubr.bf16.gmra.mrb[0].mxu0 %v1844
        %v1993 = vpop.f32.mrb[0].mxu0
        %v1994 = vadd.f32 %v1877, %v1993
        %v1995 = vpop.f32.mrb[0].mxu0
        %v1996 = vpop.f32.mrb[0].mxu0
        %v1997 = vadd.f32 %v1877, %v1996
        %v1998 = vpop.f32.mrb[0].mxu0
        %1999 = vmatprep.mubr.bf16.mxu0 0
        %2000 = vmatmul.mubr.bf16.gmra.mrb[0].mxu0 %v1845
        %v2001 = vpop.f32.mrb[0].mxu0
        %v2002 = vadd.f32 %v1877, %v2001
        %v2003 = vpop.f32.mrb[0].mxu0
        %v2004 = vpop.f32.mrb[0].mxu0
        %v2005 = vadd.f32 %v1877, %v2004
        %v2006 = vpop.f32.mrb[0].mxu0
        %2007 = vmatprep.mubr.bf16.mxu0 0
        %2008 = vmatmul.mubr.bf16.gmra.mrb[0].mxu0 %v1846
        %v2009 = vpop.f32.mrb[0].mxu0
        %v2010 = vadd.f32 %v1877, %v2009
        %v2011 = vpop.f32.mrb[0].mxu0
        %v2012 = vpop.f32.mrb[0].mxu0
        %v2013 = vadd.f32 %v1877, %v2012
        %v2014 = vpop.f32.mrb[0].mxu0
        %2015 = vmatprep.mubr.bf16.mxu0 0
        %2016 = vmatmul.mubr.bf16.gmra.mrb[0].mxu0 %v1847
        %v2017 = vpop.f32.mrb[0].mxu0
        %v2018 = vadd.f32 %v1877, %v2017
        %v2019 = vpop.f32.mrb[0].mxu0
        %v2020 = vpop.f32.mrb[0].mxu0
        %v2021 = vadd.f32 %v1877, %v2020
        %v2022 = vpop.f32.mrb[0].mxu0
        %2023 = vmatprep.mubr.bf16.mxu0 0
        %2024 = vmatmul.mubr.bf16.gmra.mrb[0].mxu0 %v1848
        %v2025 = vpop.f32.mrb[0].mxu0
        %v2026 = vadd.f32 %v1877, %v2025
        %v2027 = vpop.f32.mrb[0].mxu0
        %v2028 = vpop.f32.mrb[0].mxu0
        %v2029 = vadd.f32 %v1877, %v2028
        %v2030 = vpop.f32.mrb[0].mxu0
        %2031 = vmatprep.mubr.bf16.mxu0 0
        %2032 = vmatmul.mubr.bf16.gmra.mrb[0].mxu0 %v1849
        %v2033 = vpop.f32.mrb[0].mxu0
        %v2034 = vadd.f32 %v1877, %v2033
        %v2035 = vpop.f32.mrb[0].mxu0
        %v2036 = vpop.f32.mrb[0].mxu0
        %v2037 = vadd.f32 %v1877, %v2036
        %v2038 = vpop.f32.mrb[0].mxu0
        %2039 = vmatprep.mubr.bf16.mxu0 0
        %2040 = vmatmul.mubr.bf16.gmra.mrb[0].mxu0 %v1850
        %v2041 = vpop.f32.mrb[0].mxu0
        %v2042 = vadd.f32 %v1877, %v2041
        %v2043 = vpop.f32.mrb[0].mxu0
        %v2044 = vpop.f32.mrb[0].mxu0
        %v2045 = vadd.f32 %v1877, %v2044
        %v2046 = vpop.f32.mrb[0].mxu0
        %2047 = vmatprep.mubr.bf16.mxu0 0
        %2048 = vmatmul.mubr.bf16.gmra.mrb[0].mxu0 %v1851
        %v2049 = vpop.f32.mrb[0].mxu0
        %v2050 = vadd.f32 %v1877, %v2049
        %v2051 = vpop.f32.mrb[0].mxu0
        %v2052 = vpop.f32.mrb[0].mxu0
        %v2053 = vadd.f32 %v1877, %v2052
        %v2054 = vpop.f32.mrb[0].mxu0
        %2055 = vmatprep.mubr.bf16.mxu0 0
        %2056 = vmatmul.mubr.bf16.gmra.mrb[0].mxu0 %v1852
        %v2057 = vpop.f32.mrb[0].mxu0
        %v2058 = vadd.f32 %v1877, %v2057
        %v2059 = vpop.f32.mrb[0].mxu0
        %v2060 = vpop.f32.mrb[0].mxu0
        %v2061 = vadd.f32 %v1877, %v2060
        %v2062 = vpop.f32.mrb[0].mxu0
        %2063 = vmatprep.mubr.bf16.mxu0 0
        %2064 = vmatmul.mubr.bf16.gmra.mrb[0].mxu0 %v1853
        %v2065 = vpop.f32.mrb[0].mxu0
        %v2066 = vadd.f32 %v1877, %v2065
        %v2067 = vpop.f32.mrb[0].mxu0
        %v2068 = vpop.f32.mrb[0].mxu0
        %v2069 = vadd.f32 %v1877, %v2068
        %v2070 = vpop.f32.mrb[0].mxu0
        %2071 = vmatprep.mubr.bf16.mxu0 0
        %2072 = vmatmul.mubr.bf16.gmra.mrb[0].mxu0 %v1854
        %v2073 = vpop.f32.mrb[0].mxu0
        %v2074 = vadd.f32 %v1877, %v2073
        %v2075 = vpop.f32.mrb[0].mxu0
        %v2076 = vpop.f32.mrb[0].mxu0
        %v2077 = vadd.f32 %v1877, %v2076
        %v2078 = vpop.f32.mrb[0].mxu0
        %2079 = vmatprep.mubr.bf16.mxu0 0
        %2080 = vmatmul.mubr.bf16.gmra.mrb[0].mxu0 %v1855
        %v2081 = vpop.f32.mrb[0].mxu0
        %v2082 = vadd.f32 %v1877, %v2081
        %v2083 = vpop.f32.mrb[0].mxu0
        %v2084 = vpop.f32.mrb[0].mxu0
        %v2085 = vadd.f32 %v1877, %v2084
        %v2086 = vpop.f32.mrb[0].mxu0
        %2087 = vdwg.mxu0
        %v2088 = vmax.f32 %v1962, 0.0
        %v2089 = vmax.f32 %v1965, 0.0
        %v2090 = vmax.f32 %v1970, 0.0
        %v2091 = vmax.f32 %v1973, 0.0
        %v2092 = vmax.f32 %v1978, 0.0
        %v2093 = vmax.f32 %v1981, 0.0
        %v2094 = vmax.f32 %v1986, 0.0
        %v2095 = vmax.f32 %v1989, 0.0
        %v2096 = vmax.f32 %v1994, 0.0
        %v2097 = vmax.f32 %v1997, 0.0
        %v2098 = vmax.f32 %v2002, 0.0
        %v2099 = vmax.f32 %v2005, 0.0
        %v2100 = vmax.f32 %v2010, 0.0
        %v2101 = vmax.f32 %v2013, 0.0
        %v2102 = vmax.f32 %v2018, 0.0
        %v2103 = vmax.f32 %v2021, 0.0
        %v2104 = vmax.f32 %v2026, 0.0
        %v2105 = vmax.f32 %v2029, 0.0
        %v2106 = vmax.f32 %v2034, 0.0
        %v2107 = vmax.f32 %v2037, 0.0
        %v2108 = vmax.f32 %v2042, 0.0
        %v2109 = vmax.f32 %v2045, 0.0
        %v2110 = vmax.f32 %v2050, 0.0
        %v2111 = vmax.f32 %v2053, 0.0
        %v2112 = vmax.f32 %v2058, 0.0
        %v2113 = vmax.f32 %v2061, 0.0
        %v2114 = vmax.f32 %v2066, 0.0
        %v2115 = vmax.f32 %v2069, 0.0
        %v2116 = vmax.f32 %v2074, 0.0
        %v2117 = vmax.f32 %v2077, 0.0
        %v2118 = vmax.f32 %v2082, 0.0
        %v2119 = vmax.f32 %v2085, 0.0
        %v2120 = vpack.c.bf16 %v2089, %v2088
        %v2121 = vpack.c.bf16 %v2091, %v2090
        %v2122 = vpack.c.bf16 %v2093, %v2092
        %v2123 = vpack.c.bf16 %v2095, %v2094
        %v2124 = vpack.c.bf16 %v2097, %v2096
        %v2125 = vpack.c.bf16 %v2099, %v2098
        %v2126 = vpack.c.bf16 %v2101, %v2100
        %v2127 = vpack.c.bf16 %v2103, %v2102
        %v2128 = vpack.c.bf16 %v2105, %v2104
        %v2129 = vpack.c.bf16 %v2107, %v2106
        %v2130 = vpack.c.bf16 %v2109, %v2108
        %v2131 = vpack.c.bf16 %v2111, %v2110
        %v2132 = vpack.c.bf16 %v2113, %v2112
        %v2133 = vpack.c.bf16 %v2115, %v2114
        %v2134 = vpack.c.bf16 %v2117, %v2116
        %v2135 = vpack.c.bf16 %v2119, %v2118
        %v2152 = vunpack.c.l.b16 %v2120
        %v2153 = vunpack.c.h.b16 %v2120
        %v2154 = vunpack.c.l.b16 %v2121
        %v2155 = vunpack.c.h.b16 %v2121
        %v2156 = vunpack.c.l.b16 %v2122
        %v2157 = vunpack.c.h.b16 %v2122
        %v2158 = vunpack.c.l.b16 %v2123
        %v2159 = vunpack.c.h.b16 %v2123
        %v2160 = vunpack.c.l.b16 %v2124
        %v2161 = vunpack.c.h.b16 %v2124
        %v2162 = vunpack.c.l.b16 %v2125
        %v2163 = vunpack.c.h.b16 %v2125
        %v2164 = vunpack.c.l.b16 %v2126
        %v2165 = vunpack.c.h.b16 %v2126
        %v2166 = vunpack.c.l.b16 %v2127
        %v2167 = vunpack.c.h.b16 %v2127
        %v2168 = vunpack.c.l.b16 %v2128
        %v2169 = vunpack.c.h.b16 %v2128
        %v2170 = vunpack.c.l.b16 %v2129
        %v2171 = vunpack.c.h.b16 %v2129
        %v2172 = vunpack.c.l.b16 %v2130
        %v2173 = vunpack.c.h.b16 %v2130
        %v2174 = vunpack.c.l.b16 %v2131
        %v2175 = vunpack.c.h.b16 %v2131
        %v2176 = vunpack.c.l.b16 %v2132
        %v2177 = vunpack.c.h.b16 %v2132
        %v2178 = vunpack.c.l.b16 %v2133
        %v2179 = vunpack.c.h.b16 %v2133
        %v2180 = vunpack.c.l.b16 %v2134
        %v2181 = vunpack.c.h.b16 %v2134
        %v2182 = vunpack.c.l.b16 %v2135
        %v2183 = vunpack.c.h.b16 %v2135
        %v2184 = vpack.c.b16 %v2152, %v2152
        %v2185 = vpack.c.b16 %v2153, %v2153
        %v2186 = vpack.c.b16 %v2154, %v2154
        %v2187 = vpack.c.b16 %v2155, %v2155
        %v2188 = vpack.c.b16 %v2156, %v2156
        %v2189 = vpack.c.b16 %v2157, %v2157
        %v2190 = vpack.c.b16 %v2158, %v2158
        %v2191 = vpack.c.b16 %v2159, %v2159
        %v2192 = vpack.c.b16 %v2160, %v2160
        %v2193 = vpack.c.b16 %v2161, %v2161
        %v2194 = vpack.c.b16 %v2162, %v2162
        %v2195 = vpack.c.b16 %v2163, %v2163
        %v2196 = vpack.c.b16 %v2164, %v2164
        %v2197 = vpack.c.b16 %v2165, %v2165
        %v2198 = vpack.c.b16 %v2166, %v2166
        %v2199 = vpack.c.b16 %v2167, %v2167
        %v2200 = vpack.c.b16 %v2168, %v2168
        %v2201 = vpack.c.b16 %v2169, %v2169
        %v2202 = vpack.c.b16 %v2170, %v2170
        %v2203 = vpack.c.b16 %v2171, %v2171
        %v2204 = vpack.c.b16 %v2172, %v2172
        %v2205 = vpack.c.b16 %v2173, %v2173
        %v2206 = vpack.c.b16 %v2174, %v2174
        %v2207 = vpack.c.b16 %v2175, %v2175
        %v2208 = vpack.c.b16 %v2176, %v2176
        %v2209 = vpack.c.b16 %v2177, %v2177
        %v2210 = vpack.c.b16 %v2178, %v2178
        %v2211 = vpack.c.b16 %v2179, %v2179
        %v2212 = vpack.c.b16 %v2180, %v2180
        %v2213 = vpack.c.b16 %v2181, %v2181
        %v2214 = vpack.c.b16 %v2182, %v2182
        %v2215 = vpack.c.b16 %v2183, %v2183
        %2248 = vst [vmem:[%s480] sm:$0xf] %v2184
        %2249 = vst [vmem:[%s480 + $0x4] sm:$0xf] %v2185
        %2250 = vst [vmem:[%s480 + $0x8] sm:$0xf] %v2186
        %2251 = vst [vmem:[%s480 + $0xc] sm:$0xf] %v2187
        %2252 = vst [vmem:[%s480 + $0x10] sm:$0xf] %v2188
        %2253 = vst [vmem:[%s480 + $0x14] sm:$0xf] %v2189
        %2254 = vst [vmem:[%s480 + $0x18] sm:$0xf] %v2190
        %2255 = vst [vmem:[%s480 + $0x1c] sm:$0xf] %v2191
        %2256 = vst [vmem:[%s480 + $0x20] sm:$0xf] %v2192
        %2257 = vst [vmem:[%s480 + $0x24] sm:$0xf] %v2193
        %2258 = vst [vmem:[%s480 + $0x28] sm:$0xf] %v2194
        %2259 = vst [vmem:[%s480 + $0x2c] sm:$0xf] %v2195
        %2260 = vst [vmem:[%s480 + $0x30] sm:$0xf] %v2196
        %2261 = vst [vmem:[%s480 + $0x34] sm:$0xf] %v2197
        %2262 = vst [vmem:[%s480 + $0x38] sm:$0xf] %v2198
        %2263 = vst [vmem:[%s480 + $0x3c] sm:$0xf] %v2199
        %2264 = vst [vmem:[%s480 + $0x40] sm:$0xf] %v2200
        %2265 = vst [vmem:[%s480 + $0x44] sm:$0xf] %v2201
        %2266 = vst [vmem:[%s480 + $0x48] sm:$0xf] %v2202
        %2267 = vst [vmem:[%s480 + $0x4c] sm:$0xf] %v2203
        %2268 = vst [vmem:[%s480 + $0x50] sm:$0xf] %v2204
        %2269 = vst [vmem:[%s480 + $0x54] sm:$0xf] %v2205
        %2270 = vst [vmem:[%s480 + $0x58] sm:$0xf] %v2206
        %2271 = vst [vmem:[%s480 + $0x5c] sm:$0xf] %v2207
        %2272 = vst [vmem:[%s480 + $0x60] sm:$0xf] %v2208
        %2273 = vst [vmem:[%s480 + $0x64] sm:$0xf] %v2209
        %2274 = vst [vmem:[%s480 + $0x68] sm:$0xf] %v2210
        %2275 = vst [vmem:[%s480 + $0x6c] sm:$0xf] %v2211
        %2276 = vst [vmem:[%s480 + $0x70] sm:$0xf] %v2212
        %2277 = vst [vmem:[%s480 + $0x74] sm:$0xf] %v2213
        %2278 = vst [vmem:[%s480 + $0x78] sm:$0xf] %v2214
        %2279 = vst [vmem:[%s480 + $0x7c] sm:$0xf] %v2215
        %v2280 = vld [vmem:[%s7] sm:$0xf]
        %v2281 = vld [vmem:[%s7 + $0x4] sm:$0xf]
        %v2282 = vld [vmem:[%s7 + $0x8] sm:$0xf]
        %v2283 = vld [vmem:[%s7 + $0xc] sm:$0xf]
        %v2284 = vld [vmem:[%s7 + $0x10] sm:$0xf]
        %v2285 = vld [vmem:[%s7 + $0x14] sm:$0xf]
        %v2286 = vld [vmem:[%s7 + $0x18] sm:$0xf]
        %v2287 = vld [vmem:[%s7 + $0x1c] sm:$0xf]
        %v2288 = vld [vmem:[%s7 + $0x20] sm:$0xf]
        %v2289 = vld [vmem:[%s7 + $0x24] sm:$0xf]
        %v2290 = vld [vmem:[%s7 + $0x28] sm:$0xf]
        %v2291 = vld [vmem:[%s7 + $0x2c] sm:$0xf]
        %v2292 = vld [vmem:[%s7 + $0x30] sm:$0xf]
        %v2293 = vld [vmem:[%s7 + $0x34] sm:$0xf]
        %v2294 = vld [vmem:[%s7 + $0x38] sm:$0xf]
        %v2295 = vld [vmem:[%s7 + $0x3c] sm:$0xf]
        %v2296 = vld [vmem:[%s8] sm:$0x1]
        %v2298 = vlaneseq
        %v2299 = vshrl.u32 %v2298, 7
        %v2300 = vsub.s32 0, %v2299
        %v2301 = vrot.slane %v2296, %v2300
        %v2319 = vunpack.c.l.b16 %v2280
        %v2320 = vunpack.c.l.b16 %v2281
        %v2321 = vunpack.c.l.b16 %v2282
        %v2322 = vunpack.c.l.b16 %v2283
        %v2323 = vunpack.c.l.b16 %v2284
        %v2324 = vunpack.c.l.b16 %v2285
        %v2325 = vunpack.c.l.b16 %v2286
        %v2326 = vunpack.c.l.b16 %v2287
        %v2327 = vunpack.c.l.b16 %v2288
        %v2328 = vunpack.c.l.b16 %v2289
        %v2329 = vunpack.c.l.b16 %v2290
        %v2330 = vunpack.c.l.b16 %v2291
        %v2331 = vunpack.c.l.b16 %v2292
        %v2332 = vunpack.c.l.b16 %v2293
        %v2333 = vunpack.c.l.b16 %v2294
        %v2334 = vunpack.c.l.b16 %v2295
        %v2335 = vpack.c.b16 %v2320, %v2319
        %v2336 = vpack.c.b16 %v2322, %v2321
        %v2337 = vpack.c.b16 %v2324, %v2323
        %v2338 = vpack.c.b16 %v2326, %v2325
        %v2339 = vpack.c.b16 %v2328, %v2327
        %v2340 = vpack.c.b16 %v2330, %v2329
        %v2341 = vpack.c.b16 %v2332, %v2331
        %v2342 = vpack.c.b16 %v2334, %v2333
        %2351 = vmatprep.subr.bf16.mxu0 0
        %2352 = vmatpush1.bf16.msra.mxu0 %v2335
        %2353 = vmatprep.subr.bf16.mxu0 0
        %2354 = vmatpush1.bf16.msra.mxu0 %v2336
        %2355 = vmatprep.subr.bf16.mxu0 0
        %2356 = vmatpush1.bf16.msra.mxu0 %v2337
        %2357 = vmatprep.subr.bf16.mxu0 0
        %2358 = vmatpush1.bf16.msra.mxu0 %v2338
        %2359 = vmatprep.subr.bf16.mxu0 0
        %2360 = vmatpush1.bf16.msra.mxu0 %v2339
        %2361 = vmatprep.subr.bf16.mxu0 0
        %2362 = vmatpush1.bf16.msra.mxu0 %v2340
        %2363 = vmatprep.subr.bf16.mxu0 0
        %2364 = vmatpush1.bf16.msra.mxu0 %v2341
        %2365 = vmatprep.subr.bf16.mxu0 0
        %2366 = vmatpush1.bf16.msra.mxu0 %v2342
        %2367 = vmatprep.subr.bf16.mxu0 0
        %2368 = vmatpush1.bf16.msra.mxu0 0
        %2369 = vmatprep.subr.bf16.mxu0 0
        %2370 = vmatpush1.bf16.msra.mxu0 0
        %2371 = vmatprep.subr.bf16.mxu0 0
        %2372 = vmatpush1.bf16.msra.mxu0 0
        %2373 = vmatprep.subr.bf16.mxu0 0
        %2374 = vmatpush1.bf16.msra.mxu0 0
        %2375 = vmatprep.subr.bf16.mxu0 0
        %2376 = vmatpush1.bf16.msra.mxu0 0
        %2377 = vmatprep.subr.bf16.mxu0 0
        %2378 = vmatpush1.bf16.msra.mxu0 0
        %2379 = vmatprep.subr.bf16.mxu0 0
        %2380 = vmatpush1.bf16.msra.mxu0 0
        %2381 = vmatprep.subr.bf16.mxu0 0
        %2382 = vmatpush1.bf16.msra.mxu0 0
        %2383 = vmatprep.mubr.bf16.mxu0 0
        %2384 = vmatmul.mubr.bf16.gmra.mrb[0].mxu0 %v2120
        %v2385 = vpop.f32.mrb[0].mxu0
        %v2386 = vadd.f32 %v2301, %v2385
        %v2387 = vpop.f32.mrb[0].mxu0
        %v2388 = vpop.f32.mrb[0].mxu0
        %v2389 = vadd.f32 %v2301, %v2388
        %v2390 = vpop.f32.mrb[0].mxu0
        %2391 = vmatprep.mubr.bf16.mxu0 0
        %2392 = vmatmul.mubr.bf16.gmra.mrb[0].mxu0 %v2121
        %v2393 = vpop.f32.mrb[0].mxu0
        %v2394 = vadd.f32 %v2301, %v2393
        %v2395 = vpop.f32.mrb[0].mxu0
        %v2396 = vpop.f32.mrb[0].mxu0
        %v2397 = vadd.f32 %v2301, %v2396
        %v2398 = vpop.f32.mrb[0].mxu0
        %2399 = vmatprep.mubr.bf16.mxu0 0
        %2400 = vmatmul.mubr.bf16.gmra.mrb[0].mxu0 %v2122
        %v2401 = vpop.f32.mrb[0].mxu0
        %v2402 = vadd.f32 %v2301, %v2401
        %v2403 = vpop.f32.mrb[0].mxu0
        %v2404 = vpop.f32.mrb[0].mxu0
        %v2405 = vadd.f32 %v2301, %v2404
        %v2406 = vpop.f32.mrb[0].mxu0
        %2407 = vmatprep.mubr.bf16.mxu0 0
        %2408 = vmatmul.mubr.bf16.gmra.mrb[0].mxu0 %v2123
        %v2409 = vpop.f32.mrb[0].mxu0
        %v2410 = vadd.f32 %v2301, %v2409
        %v2411 = vpop.f32.mrb[0].mxu0
        %v2412 = vpop.f32.mrb[0].mxu0
        %v2413 = vadd.f32 %v2301, %v2412
        %v2414 = vpop.f32.mrb[0].mxu0
        %2415 = vmatprep.mubr.bf16.mxu0 0
        %2416 = vmatmul.mubr.bf16.gmra.mrb[0].mxu0 %v2124
        %v2417 = vpop.f32.mrb[0].mxu0
        %v2418 = vadd.f32 %v2301, %v2417
        %v2419 = vpop.f32.mrb[0].mxu0
        %v2420 = vpop.f32.mrb[0].mxu0
        %v2421 = vadd.f32 %v2301, %v2420
        %v2422 = vpop.f32.mrb[0].mxu0
        %2423 = vmatprep.mubr.bf16.mxu0 0
        %2424 = vmatmul.mubr.bf16.gmra.mrb[0].mxu0 %v2125
        %v2425 = vpop.f32.mrb[0].mxu0
        %v2426 = vadd.f32 %v2301, %v2425
        %v2427 = vpop.f32.mrb[0].mxu0
        %v2428 = vpop.f32.mrb[0].mxu0
        %v2429 = vadd.f32 %v2301, %v2428
        %v2430 = vpop.f32.mrb[0].mxu0
        %2431 = vmatprep.mubr.bf16.mxu0 0
        %2432 = vmatmul.mubr.bf16.gmra.mrb[0].mxu0 %v2126
        %v2433 = vpop.f32.mrb[0].mxu0
        %v2434 = vadd.f32 %v2301, %v2433
        %v2435 = vpop.f32.mrb[0].mxu0
        %v2436 = vpop.f32.mrb[0].mxu0
        %v2437 = vadd.f32 %v2301, %v2436
        %v2438 = vpop.f32.mrb[0].mxu0
        %2439 = vmatprep.mubr.bf16.mxu0 0
        %2440 = vmatmul.mubr.bf16.gmra.mrb[0].mxu0 %v2127
        %v2441 = vpop.f32.mrb[0].mxu0
        %v2442 = vadd.f32 %v2301, %v2441
        %v2443 = vpop.f32.mrb[0].mxu0
        %v2444 = vpop.f32.mrb[0].mxu0
        %v2445 = vadd.f32 %v2301, %v2444
        %v2446 = vpop.f32.mrb[0].mxu0
        %2447 = vmatprep.mubr.bf16.mxu0 0
        %2448 = vmatmul.mubr.bf16.gmra.mrb[0].mxu0 %v2128
        %v2449 = vpop.f32.mrb[0].mxu0
        %v2450 = vadd.f32 %v2301, %v2449
        %v2451 = vpop.f32.mrb[0].mxu0
        %v2452 = vpop.f32.mrb[0].mxu0
        %v2453 = vadd.f32 %v2301, %v2452
        %v2454 = vpop.f32.mrb[0].mxu0
        %2455 = vmatprep.mubr.bf16.mxu0 0
        %2456 = vmatmul.mubr.bf16.gmra.mrb[0].mxu0 %v2129
        %v2457 = vpop.f32.mrb[0].mxu0
        %v2458 = vadd.f32 %v2301, %v2457
        %v2459 = vpop.f32.mrb[0].mxu0
        %v2460 = vpop.f32.mrb[0].mxu0
        %v2461 = vadd.f32 %v2301, %v2460
        %v2462 = vpop.f32.mrb[0].mxu0
        %2463 = vmatprep.mubr.bf16.mxu0 0
        %2464 = vmatmul.mubr.bf16.gmra.mrb[0].mxu0 %v2130
        %v2465 = vpop.f32.mrb[0].mxu0
        %v2466 = vadd.f32 %v2301, %v2465
        %v2467 = vpop.f32.mrb[0].mxu0
        %v2468 = vpop.f32.mrb[0].mxu0
        %v2469 = vadd.f32 %v2301, %v2468
        %v2470 = vpop.f32.mrb[0].mxu0
        %2471 = vmatprep.mubr.bf16.mxu0 0
        %2472 = vmatmul.mubr.bf16.gmra.mrb[0].mxu0 %v2131
        %v2473 = vpop.f32.mrb[0].mxu0
        %v2474 = vadd.f32 %v2301, %v2473
        %v2475 = vpop.f32.mrb[0].mxu0
        %v2476 = vpop.f32.mrb[0].mxu0
        %v2477 = vadd.f32 %v2301, %v2476
        %v2478 = vpop.f32.mrb[0].mxu0
        %2479 = vmatprep.mubr.bf16.mxu0 0
        %2480 = vmatmul.mubr.bf16.gmra.mrb[0].mxu0 %v2132
        %v2481 = vpop.f32.mrb[0].mxu0
        %v2482 = vadd.f32 %v2301, %v2481
        %v2483 = vpop.f32.mrb[0].mxu0
        %v2484 = vpop.f32.mrb[0].mxu0
        %v2485 = vadd.f32 %v2301, %v2484
        %v2486 = vpop.f32.mrb[0].mxu0
        %2487 = vmatprep.mubr.bf16.mxu0 0
        %2488 = vmatmul.mubr.bf16.gmra.mrb[0].mxu0 %v2133
        %v2489 = vpop.f32.mrb[0].mxu0
        %v2490 = vadd.f32 %v2301, %v2489
        %v2491 = vpop.f32.mrb[0].mxu0
        %v2492 = vpop.f32.mrb[0].mxu0
        %v2493 = vadd.f32 %v2301, %v2492
        %v2494 = vpop.f32.mrb[0].mxu0
        %2495 = vmatprep.mubr.bf16.mxu0 0
        %2496 = vmatmul.mubr.bf16.gmra.mrb[0].mxu0 %v2134
        %v2497 = vpop.f32.mrb[0].mxu0
        %v2498 = vadd.f32 %v2301, %v2497
        %v2499 = vpop.f32.mrb[0].mxu0
        %v2500 = vpop.f32.mrb[0].mxu0
        %v2501 = vadd.f32 %v2301, %v2500
        %v2502 = vpop.f32.mrb[0].mxu0
        %2503 = vmatprep.mubr.bf16.mxu0 0
        %2504 = vmatmul.mubr.bf16.gmra.mrb[0].mxu0 %v2135
        %v2505 = vpop.f32.mrb[0].mxu0
        %v2506 = vadd.f32 %v2301, %v2505
        %v2507 = vpop.f32.mrb[0].mxu0
        %v2508 = vpop.f32.mrb[0].mxu0
        %v2509 = vadd.f32 %v2301, %v2508
        %v2510 = vpop.f32.mrb[0].mxu0
        %2511 = vdwg.mxu0
        %v2512 = vmax.f32 %v2386, 0.0
        %v2513 = vmax.f32 %v2389, 0.0
        %v2514 = vmax.f32 %v2394, 0.0
        %v2515 = vmax.f32 %v2397, 0.0
        %v2516 = vmax.f32 %v2402, 0.0
        %v2517 = vmax.f32 %v2405, 0.0
        %v2518 = vmax.f32 %v2410, 0.0
        %v2519 = vmax.f32 %v2413, 0.0
        %v2520 = vmax.f32 %v2418, 0.0
        %v2521 = vmax.f32 %v2421, 0.0
        %v2522 = vmax.f32 %v2426, 0.0
        %v2523 = vmax.f32 %v2429, 0.0
        %v2524 = vmax.f32 %v2434, 0.0
        %v2525 = vmax.f32 %v2437, 0.0
        %v2526 = vmax.f32 %v2442, 0.0
        %v2527 = vmax.f32 %v2445, 0.0
        %v2528 = vmax.f32 %v2450, 0.0
        %v2529 = vmax.f32 %v2453, 0.0
        %v2530 = vmax.f32 %v2458, 0.0
        %v2531 = vmax.f32 %v2461, 0.0
        %v2532 = vmax.f32 %v2466, 0.0
        %v2533 = vmax.f32 %v2469, 0.0
        %v2534 = vmax.f32 %v2474, 0.0
        %v2535 = vmax.f32 %v2477, 0.0
        %v2536 = vmax.f32 %v2482, 0.0
        %v2537 = vmax.f32 %v2485, 0.0
        %v2538 = vmax.f32 %v2490, 0.0
        %v2539 = vmax.f32 %v2493, 0.0
        %v2540 = vmax.f32 %v2498, 0.0
        %v2541 = vmax.f32 %v2501, 0.0
        %v2542 = vmax.f32 %v2506, 0.0
        %v2543 = vmax.f32 %v2509, 0.0
        %v2544 = vpack.c.bf16 %v2513, %v2512
        %v2545 = vpack.c.bf16 %v2515, %v2514
        %v2546 = vpack.c.bf16 %v2517, %v2516
        %v2547 = vpack.c.bf16 %v2519, %v2518
        %v2548 = vpack.c.bf16 %v2521, %v2520
        %v2549 = vpack.c.bf16 %v2523, %v2522
        %v2550 = vpack.c.bf16 %v2525, %v2524
        %v2551 = vpack.c.bf16 %v2527, %v2526
        %v2552 = vpack.c.bf16 %v2529, %v2528
        %v2553 = vpack.c.bf16 %v2531, %v2530
        %v2554 = vpack.c.bf16 %v2533, %v2532
        %v2555 = vpack.c.bf16 %v2535, %v2534
        %v2556 = vpack.c.bf16 %v2537, %v2536
        %v2557 = vpack.c.bf16 %v2539, %v2538
        %v2558 = vpack.c.bf16 %v2541, %v2540
        %v2559 = vpack.c.bf16 %v2543, %v2542
        %v2560 = vld [vmem:[%s9] sm:$0xff]
        %v2561 = vld [vmem:[%s9 + $0x8] sm:$0xf]
        %v2562 = vld [vmem:[%s9 + $0xc] sm:$0xff]
        %v2563 = vld [vmem:[%s9 + $0x14] sm:$0xf]
        %v2564 = vld [vmem:[%s9 + $0x18] sm:$0xff]
        %v2565 = vld [vmem:[%s9 + $0x20] sm:$0xf]
        %v2566 = vld [vmem:[%s9 + $0x24] sm:$0xff]
        %v2567 = vld [vmem:[%s9 + $0x2c] sm:$0xf]
        %v2568 = vld [vmem:[%s9 + $0x30] sm:$0xff]
        %v2569 = vld [vmem:[%s9 + $0x38] sm:$0xf]
        %v2570 = vld [vmem:[%s9 + $0x3c] sm:$0xff]
        %v2571 = vld [vmem:[%s9 + $0x44] sm:$0xf]
        %v2572 = vld [vmem:[%s9 + $0x48] sm:$0xff]
        %v2573 = vld [vmem:[%s9 + $0x50] sm:$0xf]
        %v2574 = vld [vmem:[%s9 + $0x54] sm:$0xff]
        %v2575 = vld [vmem:[%s9 + $0x5c] sm:$0xf]
        %v2576 = vld [vmem:[%s9 + $0x60] sm:$0xff]
        %v2577 = vld [vmem:[%s9 + $0x68] sm:$0xf]
        %v2578 = vld [vmem:[%s9 + $0x6c] sm:$0xff]
        %v2579 = vld [vmem:[%s9 + $0x74] sm:$0xf]
        %v2580 = vld [vmem:[%s9 + $0x78] sm:$0xff]
        %v2581 = vld [vmem:[%s9 + $0x80] sm:$0xf]
        %v2582 = vld [vmem:[%s9 + $0x84] sm:$0xff]
        %v2583 = vld [vmem:[%s9 + $0x8c] sm:$0xf]
        %v2584 = vld [vmem:[%s9 + $0x90] sm:$0xff]
        %v2585 = vld [vmem:[%s9 + $0x98] sm:$0xf]
        %v2586 = vld [vmem:[%s9 + $0x9c] sm:$0xff]
        %v2587 = vld [vmem:[%s9 + $0xa4] sm:$0xf]
        %v2588 = vld [vmem:[%s9 + $0xa8] sm:$0xff]
        %v2589 = vld [vmem:[%s9 + $0xb0] sm:$0xf]
        %v2590 = vld [vmem:[%s9 + $0xb4] sm:$0xff]
        %v2591 = vld [vmem:[%s9 + $0xbc] sm:$0xf]
        %v2592 = vld [vmem:[%s10] sm:$0x7]
        %v2594 = vlaneseq
        %v2595 = vshrl.u32 %v2594, 7
        %v2596 = vsub.s32 0, %v2595
        %v2597 = vrot.slane %v2592, %v2596
        %v2598 = vlaneseq
        %v2599 = vshrl.u32 %v2598, 7
        %v2600 = vsub.s32 1, %v2599
        %v2601 = vrot.slane %v2592, %v2600
        %v2602 = vlaneseq
        %v2603 = vshrl.u32 %v2602, 7
        %v2604 = vsub.s32 2, %v2603
        %v2605 = vrot.slane %v2592, %v2604
        %v2641 = vunpack.c.l.b16 %v2560
        %v2642 = vunpack.c.h.b16 %v2560
        %v2643 = vunpack.c.l.b16 %v2561
        %v2644 = vunpack.c.l.b16 %v2562
        %v2645 = vunpack.c.h.b16 %v2562
        %v2646 = vunpack.c.l.b16 %v2563
        %v2647 = vunpack.c.l.b16 %v2564
        %v2648 = vunpack.c.h.b16 %v2564
        %v2649 = vunpack.c.l.b16 %v2565
        %v2650 = vunpack.c.l.b16 %v2566
        %v2651 = vunpack.c.h.b16 %v2566
        %v2652 = vunpack.c.l.b16 %v2567
        %v2653 = vunpack.c.l.b16 %v2568
        %v2654 = vunpack.c.h.b16 %v2568
        %v2655 = vunpack.c.l.b16 %v2569
        %v2656 = vunpack.c.l.b16 %v2570
        %v2657 = vunpack.c.h.b16 %v2570
        %v2658 = vunpack.c.l.b16 %v2571
        %v2659 = vunpack.c.l.b16 %v2572
        %v2660 = vunpack.c.h.b16 %v2572
        %v2661 = vunpack.c.l.b16 %v2573
        %v2662 = vunpack.c.l.b16 %v2574
        %v2663 = vunpack.c.h.b16 %v2574
        %v2664 = vunpack.c.l.b16 %v2575
        %v2665 = vunpack.c.l.b16 %v2576
        %v2666 = vunpack.c.h.b16 %v2576
        %v2667 = vunpack.c.l.b16 %v2577
        %v2668 = vunpack.c.l.b16 %v2578
        %v2669 = vunpack.c.h.b16 %v2578
        %v2670 = vunpack.c.l.b16 %v2579
        %v2671 = vunpack.c.l.b16 %v2580
        %v2672 = vunpack.c.h.b16 %v2580
        %v2673 = vunpack.c.l.b16 %v2581
        %v2674 = vunpack.c.l.b16 %v2582
        %v2675 = vunpack.c.h.b16 %v2582
        %v2676 = vunpack.c.l.b16 %v2583
        %v2677 = vunpack.c.l.b16 %v2584
        %v2678 = vunpack.c.h.b16 %v2584
        %v2679 = vunpack.c.l.b16 %v2585
        %v2680 = vunpack.c.l.b16 %v2586
        %v2681 = vunpack.c.h.b16 %v2586
        %v2682 = vunpack.c.l.b16 %v2587
        %v2683 = vunpack.c.l.b16 %v2588
        %v2684 = vunpack.c.h.b16 %v2588
        %v2685 = vunpack.c.l.b16 %v2589
        %v2686 = vunpack.c.l.b16 %v2590
        %v2687 = vunpack.c.h.b16 %v2590
        %v2688 = vunpack.c.l.b16 %v2591
        %v2689 = vpack.c.b16 %v2644, %v2641
        %v2690 = vpack.c.b16 %v2645, %v2642
        %v2691 = vpack.c.b16 %v2646, %v2643
        %v2692 = vpack.c.b16 %v2650, %v2647
        %v2693 = vpack.c.b16 %v2651, %v2648
        %v2694 = vpack.c.b16 %v2652, %v2649
        %v2695 = vpack.c.b16 %v2656, %v2653
        %v2696 = vpack.c.b16 %v2657, %v2654
        %v2697 = vpack.c.b16 %v2658, %v2655
        %v2698 = vpack.c.b16 %v2662, %v2659
        %v2699 = vpack.c.b16 %v2663, %v2660
        %v2700 = vpack.c.b16 %v2664, %v2661
        %v2701 = vpack.c.b16 %v2668, %v2665
        %v2702 = vpack.c.b16 %v2669, %v2666
        %v2703 = vpack.c.b16 %v2670, %v2667
        %v2704 = vpack.c.b16 %v2674, %v2671
        %v2705 = vpack.c.b16 %v2675, %v2672
        %v2706 = vpack.c.b16 %v2676, %v2673
        %v2707 = vpack.c.b16 %v2680, %v2677
        %v2708 = vpack.c.b16 %v2681, %v2678
        %v2709 = vpack.c.b16 %v2682, %v2679
        %v2710 = vpack.c.b16 %v2686, %v2683
        %v2711 = vpack.c.b16 %v2687, %v2684
        %v2712 = vpack.c.b16 %v2688, %v2685
        %2737 = vmatprep.subr.bf16.mxu0 %v2690
        %2738 = vmatpush1.bf16.msra.mxu0 %v2689
        %2739 = vmatprep.subr.bf16.mxu0 %v2693
        %2740 = vmatpush1.bf16.msra.mxu0 %v2692
        %2741 = vmatprep.subr.bf16.mxu0 %v2696
        %2742 = vmatpush1.bf16.msra.mxu0 %v2695
        %2743 = vmatprep.subr.bf16.mxu0 %v2699
        %2744 = vmatpush1.bf16.msra.mxu0 %v2698
        %2745 = vmatprep.subr.bf16.mxu0 %v2702
        %2746 = vmatpush1.bf16.msra.mxu0 %v2701
        %2747 = vmatprep.subr.bf16.mxu0 %v2705
        %2748 = vmatpush1.bf16.msra.mxu0 %v2704
        %2749 = vmatprep.subr.bf16.mxu0 %v2708
        %2750 = vmatpush1.bf16.msra.mxu0 %v2707
        %2751 = vmatprep.subr.bf16.mxu0 %v2711
        %2752 = vmatpush1.bf16.msra.mxu0 %v2710
        %2753 = vmatprep.subr.bf16.mxu0 0
        %2754 = vmatpush1.bf16.msra.mxu0 0
        %2755 = vmatprep.subr.bf16.mxu0 0
        %2756 = vmatpush1.bf16.msra.mxu0 0
        %2757 = vmatprep.subr.bf16.mxu0 0
        %2758 = vmatpush1.bf16.msra.mxu0 0
        %2759 = vmatprep.subr.bf16.mxu0 0
        %2760 = vmatpush1.bf16.msra.mxu0 0
        %2761 = vmatprep.subr.bf16.mxu0 0
        %2762 = vmatpush1.bf16.msra.mxu0 0
        %2763 = vmatprep.subr.bf16.mxu0 0
        %2764 = vmatpush1.bf16.msra.mxu0 0
        %2765 = vmatprep.subr.bf16.mxu0 0
        %2766 = vmatpush1.bf16.msra.mxu0 0
        %2767 = vmatprep.subr.bf16.mxu0 0
        %2768 = vmatpush1.bf16.msra.mxu0 0
        %2769 = vmatprep.mubr.bf16.mxu0 0
        %2770 = vmatmul.mubr.bf16.gmra.mrb[0].mxu0 %v2544
        %v2771 = vpop.f32.mrb[0].mxu0
        %v2772 = vadd.f32 %v2597, %v2771
        %v2773 = vpop.f32.mrb[0].mxu0
        %v2774 = vadd.f32 %v2601, %v2773
        %v2775 = vpop.f32.mrb[0].mxu0
        %v2776 = vadd.f32 %v2597, %v2775
        %v2777 = vpop.f32.mrb[0].mxu0
        %v2778 = vadd.f32 %v2601, %v2777
        %2779 = vmatprep.mubr.bf16.mxu0 0
        %2780 = vmatmul.mubr.bf16.gmra.mrb[0].mxu0 %v2545
        %v2781 = vpop.f32.mrb[0].mxu0
        %v2782 = vadd.f32 %v2597, %v2781
        %v2783 = vpop.f32.mrb[0].mxu0
        %v2784 = vadd.f32 %v2601, %v2783
        %v2785 = vpop.f32.mrb[0].mxu0
        %v2786 = vadd.f32 %v2597, %v2785
        %v2787 = vpop.f32.mrb[0].mxu0
        %v2788 = vadd.f32 %v2601, %v2787
        %2789 = vmatprep.mubr.bf16.mxu0 0
        %2790 = vmatmul.mubr.bf16.gmra.mrb[0].mxu0 %v2546
        %v2791 = vpop.f32.mrb[0].mxu0
        %v2792 = vadd.f32 %v2597, %v2791
        %v2793 = vpop.f32.mrb[0].mxu0
        %v2794 = vadd.f32 %v2601, %v2793
        %v2795 = vpop.f32.mrb[0].mxu0
        %v2796 = vadd.f32 %v2597, %v2795
        %v2797 = vpop.f32.mrb[0].mxu0
        %v2798 = vadd.f32 %v2601, %v2797
        %2799 = vmatprep.mubr.bf16.mxu0 0
        %2800 = vmatmul.mubr.bf16.gmra.mrb[0].mxu0 %v2547
        %v2801 = vpop.f32.mrb[0].mxu0
        %v2802 = vadd.f32 %v2597, %v2801
        %v2803 = vpop.f32.mrb[0].mxu0
        %v2804 = vadd.f32 %v2601, %v2803
        %v2805 = vpop.f32.mrb[0].mxu0
        %v2806 = vadd.f32 %v2597, %v2805
        %v2807 = vpop.f32.mrb[0].mxu0
        %v2808 = vadd.f32 %v2601, %v2807
        %2809 = vmatprep.mubr.bf16.mxu0 0
        %2810 = vmatmul.mubr.bf16.gmra.mrb[0].mxu0 %v2548
        %v2811 = vpop.f32.mrb[0].mxu0
        %v2812 = vadd.f32 %v2597, %v2811
        %v2813 = vpop.f32.mrb[0].mxu0
        %v2814 = vadd.f32 %v2601, %v2813
        %v2815 = vpop.f32.mrb[0].mxu0
        %v2816 = vadd.f32 %v2597, %v2815
        %v2817 = vpop.f32.mrb[0].mxu0
        %v2818 = vadd.f32 %v2601, %v2817
        %2819 = vmatprep.mubr.bf16.mxu0 0
        %2820 = vmatmul.mubr.bf16.gmra.mrb[0].mxu0 %v2549
        %v2821 = vpop.f32.mrb[0].mxu0
        %v2822 = vadd.f32 %v2597, %v2821
        %v2823 = vpop.f32.mrb[0].mxu0
        %v2824 = vadd.f32 %v2601, %v2823
        %v2825 = vpop.f32.mrb[0].mxu0
        %v2826 = vadd.f32 %v2597, %v2825
        %v2827 = vpop.f32.mrb[0].mxu0
        %v2828 = vadd.f32 %v2601, %v2827
        %2829 = vmatprep.mubr.bf16.mxu0 0
        %2830 = vmatmul.mubr.bf16.gmra.mrb[0].mxu0 %v2550
        %v2831 = vpop.f32.mrb[0].mxu0
        %v2832 = vadd.f32 %v2597, %v2831
        %v2833 = vpop.f32.mrb[0].mxu0
        %v2834 = vadd.f32 %v2601, %v2833
        %v2835 = vpop.f32.mrb[0].mxu0
        %v2836 = vadd.f32 %v2597, %v2835
        %v2837 = vpop.f32.mrb[0].mxu0
        %v2838 = vadd.f32 %v2601, %v2837
        %2839 = vmatprep.mubr.bf16.mxu0 0
        %2840 = vmatmul.mubr.bf16.gmra.mrb[0].mxu0 %v2551
        %v2841 = vpop.f32.mrb[0].mxu0
        %v2842 = vadd.f32 %v2597, %v2841
        %v2843 = vpop.f32.mrb[0].mxu0
        %v2844 = vadd.f32 %v2601, %v2843
        %v2845 = vpop.f32.mrb[0].mxu0
        %v2846 = vadd.f32 %v2597, %v2845
        %v2847 = vpop.f32.mrb[0].mxu0
        %v2848 = vadd.f32 %v2601, %v2847
        %2849 = vmatprep.mubr.bf16.mxu0 0
        %2850 = vmatmul.mubr.bf16.gmra.mrb[0].mxu0 %v2552
        %v2851 = vpop.f32.mrb[0].mxu0
        %v2852 = vadd.f32 %v2597, %v2851
        %v2853 = vpop.f32.mrb[0].mxu0
        %v2854 = vadd.f32 %v2601, %v2853
        %v2855 = vpop.f32.mrb[0].mxu0
        %v2856 = vadd.f32 %v2597, %v2855
        %v2857 = vpop.f32.mrb[0].mxu0
        %v2858 = vadd.f32 %v2601, %v2857
        %2859 = vmatprep.mubr.bf16.mxu0 0
        %2860 = vmatmul.mubr.bf16.gmra.mrb[0].mxu0 %v2553
        %v2861 = vpop.f32.mrb[0].mxu0
        %v2862 = vadd.f32 %v2597, %v2861
        %v2863 = vpop.f32.mrb[0].mxu0
        %v2864 = vadd.f32 %v2601, %v2863
        %v2865 = vpop.f32.mrb[0].mxu0
        %v2866 = vadd.f32 %v2597, %v2865
        %v2867 = vpop.f32.mrb[0].mxu0
        %v2868 = vadd.f32 %v2601, %v2867
        %2869 = vmatprep.mubr.bf16.mxu0 0
        %2870 = vmatmul.mubr.bf16.gmra.mrb[0].mxu0 %v2554
        %v2871 = vpop.f32.mrb[0].mxu0
        %v2872 = vadd.f32 %v2597, %v2871
        %v2873 = vpop.f32.mrb[0].mxu0
        %v2874 = vadd.f32 %v2601, %v2873
        %v2875 = vpop.f32.mrb[0].mxu0
        %v2876 = vadd.f32 %v2597, %v2875
        %v2877 = vpop.f32.mrb[0].mxu0
        %v2878 = vadd.f32 %v2601, %v2877
        %2879 = vmatprep.mubr.bf16.mxu0 0
        %2880 = vmatmul.mubr.bf16.gmra.mrb[0].mxu0 %v2555
        %v2881 = vpop.f32.mrb[0].mxu0
        %v2882 = vadd.f32 %v2597, %v2881
        %v2883 = vpop.f32.mrb[0].mxu0
        %v2884 = vadd.f32 %v2601, %v2883
        %v2885 = vpop.f32.mrb[0].mxu0
        %v2886 = vadd.f32 %v2597, %v2885
        %v2887 = vpop.f32.mrb[0].mxu0
        %v2888 = vadd.f32 %v2601, %v2887
        %2889 = vmatprep.mubr.bf16.mxu0 0
        %2890 = vmatmul.mubr.bf16.gmra.mrb[0].mxu0 %v2556
        %v2891 = vpop.f32.mrb[0].mxu0
        %v2892 = vadd.f32 %v2597, %v2891
        %v2893 = vpop.f32.mrb[0].mxu0
        %v2894 = vadd.f32 %v2601, %v2893
        %v2895 = vpop.f32.mrb[0].mxu0
        %v2896 = vadd.f32 %v2597, %v2895
        %v2897 = vpop.f32.mrb[0].mxu0
        %v2898 = vadd.f32 %v2601, %v2897
        %2899 = vmatprep.mubr.bf16.mxu0 0
        %2900 = vmatmul.mubr.bf16.gmra.mrb[0].mxu0 %v2557
        %v2901 = vpop.f32.mrb[0].mxu0
        %v2902 = vadd.f32 %v2597, %v2901
        %v2903 = vpop.f32.mrb[0].mxu0
        %v2904 = vadd.f32 %v2601, %v2903
        %v2905 = vpop.f32.mrb[0].mxu0
        %v2906 = vadd.f32 %v2597, %v2905
        %v2907 = vpop.f32.mrb[0].mxu0
        %v2908 = vadd.f32 %v2601, %v2907
        %2909 = vmatprep.mubr.bf16.mxu0 0
        %2910 = vmatmul.mubr.bf16.gmra.mrb[0].mxu0 %v2558
        %v2911 = vpop.f32.mrb[0].mxu0
        %v2912 = vadd.f32 %v2597, %v2911
        %v2913 = vpop.f32.mrb[0].mxu0
        %v2914 = vadd.f32 %v2601, %v2913
        %v2915 = vpop.f32.mrb[0].mxu0
        %v2916 = vadd.f32 %v2597, %v2915
        %v2917 = vpop.f32.mrb[0].mxu0
        %v2918 = vadd.f32 %v2601, %v2917
        %2919 = vmatprep.mubr.bf16.mxu0 0
        %2920 = vmatmul.mubr.bf16.gmra.mrb[0].mxu0 %v2559
        %v2921 = vpop.f32.mrb[0].mxu0
        %v2922 = vadd.f32 %v2597, %v2921
        %v2923 = vpop.f32.mrb[0].mxu0
        %v2924 = vadd.f32 %v2601, %v2923
        %v2925 = vpop.f32.mrb[0].mxu0
        %v2926 = vadd.f32 %v2597, %v2925
        %v2927 = vpop.f32.mrb[0].mxu0
        %v2928 = vadd.f32 %v2601, %v2927
        %2929 = vdwg.mxu0
        %2930 = vmatprep.subr.bf16.mxu0 0
        %2931 = vmatpush1.bf16.msra.mxu0 %v2691
        %2932 = vmatprep.subr.bf16.mxu0 0
        %2933 = vmatpush1.bf16.msra.mxu0 %v2694
        %2934 = vmatprep.subr.bf16.mxu0 0
        %2935 = vmatpush1.bf16.msra.mxu0 %v2697
        %2936 = vmatprep.subr.bf16.mxu0 0
        %2937 = vmatpush1.bf16.msra.mxu0 %v2700
        %2938 = vmatprep.subr.bf16.mxu0 0
        %2939 = vmatpush1.bf16.msra.mxu0 %v2703
        %2940 = vmatprep.subr.bf16.mxu0 0
        %2941 = vmatpush1.bf16.msra.mxu0 %v2706
        %2942 = vmatprep.subr.bf16.mxu0 0
        %2943 = vmatpush1.bf16.msra.mxu0 %v2709
        %2944 = vmatprep.subr.bf16.mxu0 0
        %2945 = vmatpush1.bf16.msra.mxu0 %v2712
        %2946 = vmatprep.subr.bf16.mxu0 0
        %2947 = vmatpush1.bf16.msra.mxu0 0
        %2948 = vmatprep.subr.bf16.mxu0 0
        %2949 = vmatpush1.bf16.msra.mxu0 0
        %2950 = vmatprep.subr.bf16.mxu0 0
        %2951 = vmatpush1.bf16.msra.mxu0 0
        %2952 = vmatprep.subr.bf16.mxu0 0
        %2953 = vmatpush1.bf16.msra.mxu0 0
        %2954 = vmatprep.subr.bf16.mxu0 0
        %2955 = vmatpush1.bf16.msra.mxu0 0
        %2956 = vmatprep.subr.bf16.mxu0 0
        %2957 = vmatpush1.bf16.msra.mxu0 0
        %2958 = vmatprep.subr.bf16.mxu0 0
        %2959 = vmatpush1.bf16.msra.mxu0 0
        %2960 = vmatprep.subr.bf16.mxu0 0
        %2961 = vmatpush1.bf16.msra.mxu0 0
        %2962 = vmatprep.mubr.bf16.mxu0 0
        %2963 = vmatmul.mubr.bf16.gmra.mrb[0].mxu0 %v2544
        %v2964 = vpop.f32.mrb[0].mxu0
        %v2965 = vadd.f32 %v2605, %v2964
        %v2966 = vpop.f32.mrb[0].mxu0
        %v2967 = vpop.f32.mrb[0].mxu0
        %v2968 = vadd.f32 %v2605, %v2967
        %v2969 = vpop.f32.mrb[0].mxu0
        %2970 = vmatprep.mubr.bf16.mxu0 0
        %2971 = vmatmul.mubr.bf16.gmra.mrb[0].mxu0 %v2545
        %v2972 = vpop.f32.mrb[0].mxu0
        %v2973 = vadd.f32 %v2605, %v2972
        %v2974 = vpop.f32.mrb[0].mxu0
        %v2975 = vpop.f32.mrb[0].mxu0
        %v2976 = vadd.f32 %v2605, %v2975
        %v2977 = vpop.f32.mrb[0].mxu0
        %2978 = vmatprep.mubr.bf16.mxu0 0
        %2979 = vmatmul.mubr.bf16.gmra.mrb[0].mxu0 %v2546
        %v2980 = vpop.f32.mrb[0].mxu0
        %v2981 = vadd.f32 %v2605, %v2980
        %v2982 = vpop.f32.mrb[0].mxu0
        %v2983 = vpop.f32.mrb[0].mxu0
        %v2984 = vadd.f32 %v2605, %v2983
        %v2985 = vpop.f32.mrb[0].mxu0
        %2986 = vmatprep.mubr.bf16.mxu0 0
        %2987 = vmatmul.mubr.bf16.gmra.mrb[0].mxu0 %v2547
        %v2988 = vpop.f32.mrb[0].mxu0
        %v2989 = vadd.f32 %v2605, %v2988
        %v2990 = vpop.f32.mrb[0].mxu0
        %v2991 = vpop.f32.mrb[0].mxu0
        %v2992 = vadd.f32 %v2605, %v2991
        %v2993 = vpop.f32.mrb[0].mxu0
        %2994 = vmatprep.mubr.bf16.mxu0 0
        %2995 = vmatmul.mubr.bf16.gmra.mrb[0].mxu0 %v2548
        %v2996 = vpop.f32.mrb[0].mxu0
        %v2997 = vadd.f32 %v2605, %v2996
        %v2998 = vpop.f32.mrb[0].mxu0
        %v2999 = vpop.f32.mrb[0].mxu0
        %v3000 = vadd.f32 %v2605, %v2999
        %v3001 = vpop.f32.mrb[0].mxu0
        %3002 = vmatprep.mubr.bf16.mxu0 0
        %3003 = vmatmul.mubr.bf16.gmra.mrb[0].mxu0 %v2549
        %v3004 = vpop.f32.mrb[0].mxu0
        %v3005 = vadd.f32 %v2605, %v3004
        %v3006 = vpop.f32.mrb[0].mxu0
        %v3007 = vpop.f32.mrb[0].mxu0
        %v3008 = vadd.f32 %v2605, %v3007
        %v3009 = vpop.f32.mrb[0].mxu0
        %3010 = vmatprep.mubr.bf16.mxu0 0
        %3011 = vmatmul.mubr.bf16.gmra.mrb[0].mxu0 %v2550
        %v3012 = vpop.f32.mrb[0].mxu0
        %v3013 = vadd.f32 %v2605, %v3012
        %v3014 = vpop.f32.mrb[0].mxu0
        %v3015 = vpop.f32.mrb[0].mxu0
        %v3016 = vadd.f32 %v2605, %v3015
        %v3017 = vpop.f32.mrb[0].mxu0
        %3018 = vmatprep.mubr.bf16.mxu0 0
        %3019 = vmatmul.mubr.bf16.gmra.mrb[0].mxu0 %v2551
        %v3020 = vpop.f32.mrb[0].mxu0
        %v3021 = vadd.f32 %v2605, %v3020
        %v3022 = vpop.f32.mrb[0].mxu0
        %v3023 = vpop.f32.mrb[0].mxu0
        %v3024 = vadd.f32 %v2605, %v3023
        %v3025 = vpop.f32.mrb[0].mxu0
        %3026 = vmatprep.mubr.bf16.mxu0 0
        %3027 = vmatmul.mubr.bf16.gmra.mrb[0].mxu0 %v2552
        %v3028 = vpop.f32.mrb[0].mxu0
        %v3029 = vadd.f32 %v2605, %v3028
        %v3030 = vpop.f32.mrb[0].mxu0
        %v3031 = vpop.f32.mrb[0].mxu0
        %v3032 = vadd.f32 %v2605, %v3031
        %v3033 = vpop.f32.mrb[0].mxu0
        %3034 = vmatprep.mubr.bf16.mxu0 0
        %3035 = vmatmul.mubr.bf16.gmra.mrb[0].mxu0 %v2553
        %v3036 = vpop.f32.mrb[0].mxu0
        %v3037 = vadd.f32 %v2605, %v3036
        %v3038 = vpop.f32.mrb[0].mxu0
        %v3039 = vpop.f32.mrb[0].mxu0
        %v3040 = vadd.f32 %v2605, %v3039
        %v3041 = vpop.f32.mrb[0].mxu0
        %3042 = vmatprep.mubr.bf16.mxu0 0
        %3043 = vmatmul.mubr.bf16.gmra.mrb[0].mxu0 %v2554
        %v3044 = vpop.f32.mrb[0].mxu0
        %v3045 = vadd.f32 %v2605, %v3044
        %v3046 = vpop.f32.mrb[0].mxu0
        %v3047 = vpop.f32.mrb[0].mxu0
        %v3048 = vadd.f32 %v2605, %v3047
        %v3049 = vpop.f32.mrb[0].mxu0
        %3050 = vmatprep.mubr.bf16.mxu0 0
        %3051 = vmatmul.mubr.bf16.gmra.mrb[0].mxu0 %v2555
        %v3052 = vpop.f32.mrb[0].mxu0
        %v3053 = vadd.f32 %v2605, %v3052
        %v3054 = vpop.f32.mrb[0].mxu0
        %v3055 = vpop.f32.mrb[0].mxu0
        %v3056 = vadd.f32 %v2605, %v3055
        %v3057 = vpop.f32.mrb[0].mxu0
        %3058 = vmatprep.mubr.bf16.mxu0 0
        %3059 = vmatmul.mubr.bf16.gmra.mrb[0].mxu0 %v2556
        %v3060 = vpop.f32.mrb[0].mxu0
        %v3061 = vadd.f32 %v2605, %v3060
        %v3062 = vpop.f32.mrb[0].mxu0
        %v3063 = vpop.f32.mrb[0].mxu0
        %v3064 = vadd.f32 %v2605, %v3063
        %v3065 = vpop.f32.mrb[0].mxu0
        %3066 = vmatprep.mubr.bf16.mxu0 0
        %3067 = vmatmul.mubr.bf16.gmra.mrb[0].mxu0 %v2557
        %v3068 = vpop.f32.mrb[0].mxu0
        %v3069 = vadd.f32 %v2605, %v3068
        %v3070 = vpop.f32.mrb[0].mxu0
        %v3071 = vpop.f32.mrb[0].mxu0
        %v3072 = vadd.f32 %v2605, %v3071
        %v3073 = vpop.f32.mrb[0].mxu0
        %3074 = vmatprep.mubr.bf16.mxu0 0
        %3075 = vmatmul.mubr.bf16.gmra.mrb[0].mxu0 %v2558
        %v3076 = vpop.f32.mrb[0].mxu0
        %v3077 = vadd.f32 %v2605, %v3076
        %v3078 = vpop.f32.mrb[0].mxu0
        %v3079 = vpop.f32.mrb[0].mxu0
        %v3080 = vadd.f32 %v2605, %v3079
        %v3081 = vpop.f32.mrb[0].mxu0
        %3082 = vmatprep.mubr.bf16.mxu0 0
        %3083 = vmatmul.mubr.bf16.gmra.mrb[0].mxu0 %v2559
        %v3084 = vpop.f32.mrb[0].mxu0
        %v3085 = vadd.f32 %v2605, %v3084
        %v3086 = vpop.f32.mrb[0].mxu0
        %v3087 = vpop.f32.mrb[0].mxu0
        %v3088 = vadd.f32 %v2605, %v3087
        %v3089 = vpop.f32.mrb[0].mxu0
        %3090 = vdwg.mxu0
        %v3091 = vmax.f32 %v2772, 0.0
        %v3092 = vmax.f32 %v2774, 0.0
        %v3093 = vmax.f32 %v2965, 0.0
        %v3094 = vmax.f32 %v2776, 0.0
        %v3095 = vmax.f32 %v2778, 0.0
        %v3096 = vmax.f32 %v2968, 0.0
        %v3097 = vmax.f32 %v2782, 0.0
        %v3098 = vmax.f32 %v2784, 0.0
        %v3099 = vmax.f32 %v2973, 0.0
        %v3100 = vmax.f32 %v2786, 0.0
        %v3101 = vmax.f32 %v2788, 0.0
        %v3102 = vmax.f32 %v2976, 0.0
        %v3103 = vmax.f32 %v2792, 0.0
        %v3104 = vmax.f32 %v2794, 0.0
        %v3105 = vmax.f32 %v2981, 0.0
        %v3106 = vmax.f32 %v2796, 0.0
        %v3107 = vmax.f32 %v2798, 0.0
        %v3108 = vmax.f32 %v2984, 0.0
        %v3109 = vmax.f32 %v2802, 0.0
        %v3110 = vmax.f32 %v2804, 0.0
        %v3111 = vmax.f32 %v2989, 0.0
        %v3112 = vmax.f32 %v2806, 0.0
        %v3113 = vmax.f32 %v2808, 0.0
        %v3114 = vmax.f32 %v2992, 0.0
        %v3115 = vmax.f32 %v2812, 0.0
        %v3116 = vmax.f32 %v2814, 0.0
        %v3117 = vmax.f32 %v2997, 0.0
        %v3118 = vmax.f32 %v2816, 0.0
        %v3119 = vmax.f32 %v2818, 0.0
        %v3120 = vmax.f32 %v3000, 0.0
        %v3121 = vmax.f32 %v2822, 0.0
        %v3122 = vmax.f32 %v2824, 0.0
        %v3123 = vmax.f32 %v3005, 0.0
        %v3124 = vmax.f32 %v2826, 0.0
        %v3125 = vmax.f32 %v2828, 0.0
        %v3126 = vmax.f32 %v3008, 0.0
        %v3127 = vmax.f32 %v2832, 0.0
        %v3128 = vmax.f32 %v2834, 0.0
        %v3129 = vmax.f32 %v3013, 0.0
        %v3130 = vmax.f32 %v2836, 0.0
        %v3131 = vmax.f32 %v2838, 0.0
        %v3132 = vmax.f32 %v3016, 0.0
        %v3133 = vmax.f32 %v2842, 0.0
        %v3134 = vmax.f32 %v2844, 0.0
        %v3135 = vmax.f32 %v3021, 0.0
        %v3136 = vmax.f32 %v2846, 0.0
        %v3137 = vmax.f32 %v2848, 0.0
        %v3138 = vmax.f32 %v3024, 0.0
        %v3139 = vmax.f32 %v2852, 0.0
        %v3140 = vmax.f32 %v2854, 0.0
        %v3141 = vmax.f32 %v3029, 0.0
        %v3142 = vmax.f32 %v2856, 0.0
        %v3143 = vmax.f32 %v2858, 0.0
        %v3144 = vmax.f32 %v3032, 0.0
        %v3145 = vmax.f32 %v2862, 0.0
        %v3146 = vmax.f32 %v2864, 0.0
        %v3147 = vmax.f32 %v3037, 0.0
        %v3148 = vmax.f32 %v2866, 0.0
        %v3149 = vmax.f32 %v2868, 0.0
        %v3150 = vmax.f32 %v3040, 0.0
        %v3151 = vmax.f32 %v2872, 0.0
        %v3152 = vmax.f32 %v2874, 0.0
        %v3153 = vmax.f32 %v3045, 0.0
        %v3154 = vmax.f32 %v2876, 0.0
        %v3155 = vmax.f32 %v2878, 0.0
        %v3156 = vmax.f32 %v3048, 0.0
        %v3157 = vmax.f32 %v2882, 0.0
        %v3158 = vmax.f32 %v2884, 0.0
        %v3159 = vmax.f32 %v3053, 0.0
        %v3160 = vmax.f32 %v2886, 0.0
        %v3161 = vmax.f32 %v2888, 0.0
        %v3162 = vmax.f32 %v3056, 0.0
        %v3163 = vmax.f32 %v2892, 0.0
        %v3164 = vmax.f32 %v2894, 0.0
        %v3165 = vmax.f32 %v3061, 0.0
        %v3166 = vmax.f32 %v2896, 0.0
        %v3167 = vmax.f32 %v2898, 0.0
        %v3168 = vmax.f32 %v3064, 0.0
        %v3169 = vmax.f32 %v2902, 0.0
        %v3170 = vmax.f32 %v2904, 0.0
        %v3171 = vmax.f32 %v3069, 0.0
        %v3172 = vmax.f32 %v2906, 0.0
        %v3173 = vmax.f32 %v2908, 0.0
        %v3174 = vmax.f32 %v3072, 0.0
        %v3175 = vmax.f32 %v2912, 0.0
        %v3176 = vmax.f32 %v2914, 0.0
        %v3177 = vmax.f32 %v3077, 0.0
        %v3178 = vmax.f32 %v2916, 0.0
        %v3179 = vmax.f32 %v2918, 0.0
        %v3180 = vmax.f32 %v3080, 0.0
        %v3181 = vmax.f32 %v2922, 0.0
        %v3182 = vmax.f32 %v2924, 0.0
        %v3183 = vmax.f32 %v3085, 0.0
        %v3184 = vmax.f32 %v2926, 0.0
        %v3185 = vmax.f32 %v2928, 0.0
        %v3186 = vmax.f32 %v3088, 0.0
        %v3187 = vpack.c.bf16 %v3094, %v3091
        %v3188 = vpack.c.bf16 %v3095, %v3092
        %v3189 = vpack.c.bf16 %v3096, %v3093
        %v3190 = vpack.c.bf16 %v3100, %v3097
        %v3191 = vpack.c.bf16 %v3101, %v3098
        %v3192 = vpack.c.bf16 %v3102, %v3099
        %v3193 = vpack.c.bf16 %v3106, %v3103
        %v3194 = vpack.c.bf16 %v3107, %v3104
        %v3195 = vpack.c.bf16 %v3108, %v3105
        %v3196 = vpack.c.bf16 %v3112, %v3109
        %v3197 = vpack.c.bf16 %v3113, %v3110
        %v3198 = vpack.c.bf16 %v3114, %v3111
        %v3199 = vpack.c.bf16 %v3118, %v3115
        %v3200 = vpack.c.bf16 %v3119, %v3116
        %v3201 = vpack.c.bf16 %v3120, %v3117
        %v3202 = vpack.c.bf16 %v3124, %v3121
        %v3203 = vpack.c.bf16 %v3125, %v3122
        %v3204 = vpack.c.bf16 %v3126, %v3123
        %v3205 = vpack.c.bf16 %v3130, %v3127
        %v3206 = vpack.c.bf16 %v3131, %v3128
        %v3207 = vpack.c.bf16 %v3132, %v3129
        %v3208 = vpack.c.bf16 %v3136, %v3133
        %v3209 = vpack.c.bf16 %v3137, %v3134
        %v3210 = vpack.c.bf16 %v3138, %v3135
        %v3211 = vpack.c.bf16 %v3142, %v3139
        %v3212 = vpack.c.bf16 %v3143, %v3140
        %v3213 = vpack.c.bf16 %v3144, %v3141
        %v3214 = vpack.c.bf16 %v3148, %v3145
        %v3215 = vpack.c.bf16 %v3149, %v3146
        %v3216 = vpack.c.bf16 %v3150, %v3147
        %v3217 = vpack.c.bf16 %v3154, %v3151
        %v3218 = vpack.c.bf16 %v3155, %v3152
        %v3219 = vpack.c.bf16 %v3156, %v3153
        %v3220 = vpack.c.bf16 %v3160, %v3157
        %v3221 = vpack.c.bf16 %v3161, %v3158
        %v3222 = vpack.c.bf16 %v3162, %v3159
        %v3223 = vpack.c.bf16 %v3166, %v3163
        %v3224 = vpack.c.bf16 %v3167, %v3164
        %v3225 = vpack.c.bf16 %v3168, %v3165
        %v3226 = vpack.c.bf16 %v3172, %v3169
        %v3227 = vpack.c.bf16 %v3173, %v3170
        %v3228 = vpack.c.bf16 %v3174, %v3171
        %v3229 = vpack.c.bf16 %v3178, %v3175
        %v3230 = vpack.c.bf16 %v3179, %v3176
        %v3231 = vpack.c.bf16 %v3180, %v3177
        %v3232 = vpack.c.bf16 %v3184, %v3181
        %v3233 = vpack.c.bf16 %v3185, %v3182
        %v3234 = vpack.c.bf16 %v3186, %v3183
        %v3235 = vld [vmem:[%s11] sm:$0xf]
        %v3236 = vld [vmem:[%s11 + $0x4] sm:$0xf]
        %v3237 = vld [vmem:[%s11 + $0x8] sm:$0xf]
        %v3238 = vld [vmem:[%s11 + $0xc] sm:$0xf]
        %v3239 = vld [vmem:[%s11 + $0x10] sm:$0xf]
        %v3240 = vld [vmem:[%s11 + $0x14] sm:$0xf]
        %v3241 = vld [vmem:[%s11 + $0x18] sm:$0xf]
        %v3242 = vld [vmem:[%s11 + $0x1c] sm:$0xf]
        %v3243 = vld [vmem:[%s11 + $0x20] sm:$0xf]
        %v3244 = vld [vmem:[%s11 + $0x24] sm:$0xf]
        %v3245 = vld [vmem:[%s11 + $0x28] sm:$0xf]
        %v3246 = vld [vmem:[%s11 + $0x2c] sm:$0xf]
        %v3247 = vld [vmem:[%s11 + $0x30] sm:$0xf]
        %v3248 = vld [vmem:[%s11 + $0x34] sm:$0xf]
        %v3249 = vld [vmem:[%s11 + $0x38] sm:$0xf]
        %v3250 = vld [vmem:[%s11 + $0x3c] sm:$0xf]
        %v3251 = vld [vmem:[%s11 + $0x40] sm:$0xf]
        %v3252 = vld [vmem:[%s11 + $0x44] sm:$0xf]
        %v3253 = vld [vmem:[%s11 + $0x48] sm:$0xf]
        %v3254 = vld [vmem:[%s11 + $0x4c] sm:$0xf]
        %v3255 = vld [vmem:[%s11 + $0x50] sm:$0xf]
        %v3256 = vld [vmem:[%s11 + $0x54] sm:$0xf]
        %v3257 = vld [vmem:[%s11 + $0x58] sm:$0xf]
        %v3258 = vld [vmem:[%s11 + $0x5c] sm:$0xf]
        %v3259 = vld [vmem:[%s11 + $0x60] sm:$0xf]
        %v3260 = vld [vmem:[%s11 + $0x64] sm:$0xf]
        %v3261 = vld [vmem:[%s11 + $0x68] sm:$0xf]
        %v3262 = vld [vmem:[%s11 + $0x6c] sm:$0xf]
        %v3263 = vld [vmem:[%s11 + $0x70] sm:$0xf]
        %v3264 = vld [vmem:[%s11 + $0x74] sm:$0xf]
        %v3265 = vld [vmem:[%s11 + $0x78] sm:$0xf]
        %v3266 = vld [vmem:[%s11 + $0x7c] sm:$0xf]
        %v3267 = vld [vmem:[%s11 + $0x80] sm:$0xf]
        %v3268 = vld [vmem:[%s11 + $0x84] sm:$0xf]
        %v3269 = vld [vmem:[%s11 + $0x88] sm:$0xf]
        %v3270 = vld [vmem:[%s11 + $0x8c] sm:$0xf]
        %v3271 = vld [vmem:[%s11 + $0x90] sm:$0xf]
        %v3272 = vld [vmem:[%s11 + $0x94] sm:$0xf]
        %v3273 = vld [vmem:[%s11 + $0x98] sm:$0xf]
        %v3274 = vld [vmem:[%s11 + $0x9c] sm:$0xf]
        %v3275 = vld [vmem:[%s11 + $0xa0] sm:$0xf]
        %v3276 = vld [vmem:[%s11 + $0xa4] sm:$0xf]
        %v3277 = vld [vmem:[%s11 + $0xa8] sm:$0xf]
        %v3278 = vld [vmem:[%s11 + $0xac] sm:$0xf]
        %v3279 = vld [vmem:[%s11 + $0xb0] sm:$0xf]
        %v3280 = vld [vmem:[%s11 + $0xb4] sm:$0xf]
        %v3281 = vld [vmem:[%s11 + $0xb8] sm:$0xf]
        %v3282 = vld [vmem:[%s11 + $0xbc] sm:$0xf]
        %v3283 = vld [vmem:[%s12] sm:$0x1]
        %v3285 = vlaneseq
        %v3286 = vshrl.u32 %v3285, 7
        %v3287 = vsub.s32 0, %v3286
        %v3288 = vrot.slane %v3283, %v3287
        %v3338 = vunpack.c.l.b16 %v3235
        %v3339 = vunpack.c.l.b16 %v3236
        %v3340 = vunpack.c.l.b16 %v3237
        %v3341 = vunpack.c.l.b16 %v3238
        %v3342 = vunpack.c.l.b16 %v3239
        %v3343 = vunpack.c.l.b16 %v3240
        %v3344 = vunpack.c.l.b16 %v3241
        %v3345 = vunpack.c.l.b16 %v3242
        %v3346 = vunpack.c.l.b16 %v3243
        %v3347 = vunpack.c.l.b16 %v3244
        %v3348 = vunpack.c.l.b16 %v3245
        %v3349 = vunpack.c.l.b16 %v3246
        %v3350 = vunpack.c.l.b16 %v3247
        %v3351 = vunpack.c.l.b16 %v3248
        %v3352 = vunpack.c.l.b16 %v3249
        %v3353 = vunpack.c.l.b16 %v3250
        %v3354 = vunpack.c.l.b16 %v3251
        %v3355 = vunpack.c.l.b16 %v3252
        %v3356 = vunpack.c.l.b16 %v3253
        %v3357 = vunpack.c.l.b16 %v3254
        %v3358 = vunpack.c.l.b16 %v3255
        %v3359 = vunpack.c.l.b16 %v3256
        %v3360 = vunpack.c.l.b16 %v3257
        %v3361 = vunpack.c.l.b16 %v3258
        %v3362 = vunpack.c.l.b16 %v3259
        %v3363 = vunpack.c.l.b16 %v3260
        %v3364 = vunpack.c.l.b16 %v3261
        %v3365 = vunpack.c.l.b16 %v3262
        %v3366 = vunpack.c.l.b16 %v3263
        %v3367 = vunpack.c.l.b16 %v3264
        %v3368 = vunpack.c.l.b16 %v3265
        %v3369 = vunpack.c.l.b16 %v3266
        %v3370 = vunpack.c.l.b16 %v3267
        %v3371 = vunpack.c.l.b16 %v3268
        %v3372 = vunpack.c.l.b16 %v3269
        %v3373 = vunpack.c.l.b16 %v3270
        %v3374 = vunpack.c.l.b16 %v3271
        %v3375 = vunpack.c.l.b16 %v3272
        %v3376 = vunpack.c.l.b16 %v3273
        %v3377 = vunpack.c.l.b16 %v3274
        %v3378 = vunpack.c.l.b16 %v3275
        %v3379 = vunpack.c.l.b16 %v3276
        %v3380 = vunpack.c.l.b16 %v3277
        %v3381 = vunpack.c.l.b16 %v3278
        %v3382 = vunpack.c.l.b16 %v3279
        %v3383 = vunpack.c.l.b16 %v3280
        %v3384 = vunpack.c.l.b16 %v3281
        %v3385 = vunpack.c.l.b16 %v3282
        %v3386 = vpack.c.b16 %v3339, %v3338
        %v3387 = vpack.c.b16 %v3341, %v3340
        %v3388 = vpack.c.b16 %v3343, %v3342
        %v3389 = vpack.c.b16 %v3345, %v3344
        %v3390 = vpack.c.b16 %v3347, %v3346
        %v3391 = vpack.c.b16 %v3349, %v3348
        %v3392 = vpack.c.b16 %v3351, %v3350
        %v3393 = vpack.c.b16 %v3353, %v3352
        %v3394 = vpack.c.b16 %v3355, %v3354
        %v3395 = vpack.c.b16 %v3357, %v3356
        %v3396 = vpack.c.b16 %v3359, %v3358
        %v3397 = vpack.c.b16 %v3361, %v3360
        %v3398 = vpack.c.b16 %v3363, %v3362
        %v3399 = vpack.c.b16 %v3365, %v3364
        %v3400 = vpack.c.b16 %v3367, %v3366
        %v3401 = vpack.c.b16 %v3369, %v3368
        %v3402 = vpack.c.b16 %v3371, %v3370
        %v3403 = vpack.c.b16 %v3373, %v3372
        %v3404 = vpack.c.b16 %v3375, %v3374
        %v3405 = vpack.c.b16 %v3377, %v3376
        %v3406 = vpack.c.b16 %v3379, %v3378
        %v3407 = vpack.c.b16 %v3381, %v3380
        %v3408 = vpack.c.b16 %v3383, %v3382
        %v3409 = vpack.c.b16 %v3385, %v3384
        %3434 = vmatprep.subr.bf16.mxu0 0
        %3435 = vmatpush1.bf16.msra.mxu0 %v3386
        %3436 = vmatprep.subr.bf16.mxu0 0
        %3437 = vmatpush1.bf16.msra.mxu0 %v3387
        %3438 = vmatprep.subr.bf16.mxu0 0
        %3439 = vmatpush1.bf16.msra.mxu0 %v3388
        %3440 = vmatprep.subr.bf16.mxu0 0
        %3441 = vmatpush1.bf16.msra.mxu0 %v3389
        %3442 = vmatprep.subr.bf16.mxu0 0
        %3443 = vmatpush1.bf16.msra.mxu0 %v3390
        %3444 = vmatprep.subr.bf16.mxu0 0
        %3445 = vmatpush1.bf16.msra.mxu0 %v3391
        %3446 = vmatprep.subr.bf16.mxu0 0
        %3447 = vmatpush1.bf16.msra.mxu0 %v3392
        %3448 = vmatprep.subr.bf16.mxu0 0
        %3449 = vmatpush1.bf16.msra.mxu0 %v3393
        %3450 = vmatprep.subr.bf16.mxu0 0
        %3451 = vmatpush1.bf16.msra.mxu0 %v3394
        %3452 = vmatprep.subr.bf16.mxu0 0
        %3453 = vmatpush1.bf16.msra.mxu0 %v3395
        %3454 = vmatprep.subr.bf16.mxu0 0
        %3455 = vmatpush1.bf16.msra.mxu0 %v3396
        %3456 = vmatprep.subr.bf16.mxu0 0
        %3457 = vmatpush1.bf16.msra.mxu0 %v3397
        %3458 = vmatprep.subr.bf16.mxu0 0
        %3459 = vmatpush1.bf16.msra.mxu0 %v3398
        %3460 = vmatprep.subr.bf16.mxu0 0
        %3461 = vmatpush1.bf16.msra.mxu0 %v3399
        %3462 = vmatprep.subr.bf16.mxu0 0
        %3463 = vmatpush1.bf16.msra.mxu0 %v3400
        %3464 = vmatprep.subr.bf16.mxu0 0
        %3465 = vmatpush1.bf16.msra.mxu0 %v3401
        %3466 = vmatprep.mubr.bf16.mxu0 %v3188
        %3467 = vmatmul.mubr.bf16.gmra.mrb[0].mxu0 %v3187
        %v3468 = vpop.f32.mrb[0].mxu0
        %v3469 = vadd.f32 %v3288, %v3468
        %v3470 = vpop.f32.mrb[0].mxu0
        %v3471 = vpop.f32.mrb[0].mxu0
        %v3472 = vadd.f32 %v3288, %v3471
        %v3473 = vpop.f32.mrb[0].mxu0
        %3474 = vmatprep.mubr.bf16.mxu0 %v3191
        %3475 = vmatmul.mubr.bf16.gmra.mrb[0].mxu0 %v3190
        %v3476 = vpop.f32.mrb[0].mxu0
        %v3477 = vadd.f32 %v3288, %v3476
        %v3478 = vpop.f32.mrb[0].mxu0
        %v3479 = vpop.f32.mrb[0].mxu0
        %v3480 = vadd.f32 %v3288, %v3479
        %v3481 = vpop.f32.mrb[0].mxu0
        %3482 = vmatprep.mubr.bf16.mxu0 %v3194
        %3483 = vmatmul.mubr.bf16.gmra.mrb[0].mxu0 %v3193
        %v3484 = vpop.f32.mrb[0].mxu0
        %v3485 = vadd.f32 %v3288, %v3484
        %v3486 = vpop.f32.mrb[0].mxu0
        %v3487 = vpop.f32.mrb[0].mxu0
        %v3488 = vadd.f32 %v3288, %v3487
        %v3489 = vpop.f32.mrb[0].mxu0
        %3490 = vmatprep.mubr.bf16.mxu0 %v3197
        %3491 = vmatmul.mubr.bf16.gmra.mrb[0].mxu0 %v3196
        %v3492 = vpop.f32.mrb[0].mxu0
        %v3493 = vadd.f32 %v3288, %v3492
        %v3494 = vpop.f32.mrb[0].mxu0
        %v3495 = vpop.f32.mrb[0].mxu0
        %v3496 = vadd.f32 %v3288, %v3495
        %v3497 = vpop.f32.mrb[0].mxu0
        %3498 = vmatprep.mubr.bf16.mxu0 %v3200
        %3499 = vmatmul.mubr.bf16.gmra.mrb[0].mxu0 %v3199
        %v3500 = vpop.f32.mrb[0].mxu0
        %v3501 = vadd.f32 %v3288, %v3500
        %v3502 = vpop.f32.mrb[0].mxu0
        %v3503 = vpop.f32.mrb[0].mxu0
        %v3504 = vadd.f32 %v3288, %v3503
        %v3505 = vpop.f32.mrb[0].mxu0
        %3506 = vmatprep.mubr.bf16.mxu0 %v3203
        %3507 = vmatmul.mubr.bf16.gmra.mrb[0].mxu0 %v3202
        %v3508 = vpop.f32.mrb[0].mxu0
        %v3509 = vadd.f32 %v3288, %v3508
        %v3510 = vpop.f32.mrb[0].mxu0
        %v3511 = vpop.f32.mrb[0].mxu0
        %v3512 = vadd.f32 %v3288, %v3511
        %v3513 = vpop.f32.mrb[0].mxu0
        %3514 = vmatprep.mubr.bf16.mxu0 %v3206
        %3515 = vmatmul.mubr.bf16.gmra.mrb[0].mxu0 %v3205
        %v3516 = vpop.f32.mrb[0].mxu0
        %v3517 = vadd.f32 %v3288, %v3516
        %v3518 = vpop.f32.mrb[0].mxu0
        %v3519 = vpop.f32.mrb[0].mxu0
        %v3520 = vadd.f32 %v3288, %v3519
        %v3521 = vpop.f32.mrb[0].mxu0
        %3522 = vmatprep.mubr.bf16.mxu0 %v3209
        %3523 = vmatmul.mubr.bf16.gmra.mrb[0].mxu0 %v3208
        %v3524 = vpop.f32.mrb[0].mxu0
        %v3525 = vadd.f32 %v3288, %v3524
        %v3526 = vpop.f32.mrb[0].mxu0
        %v3527 = vpop.f32.mrb[0].mxu0
        %v3528 = vadd.f32 %v3288, %v3527
        %v3529 = vpop.f32.mrb[0].mxu0
        %3530 = vmatprep.mubr.bf16.mxu0 %v3212
        %3531 = vmatmul.mubr.bf16.gmra.mrb[0].mxu0 %v3211
        %v3532 = vpop.f32.mrb[0].mxu0
        %v3533 = vadd.f32 %v3288, %v3532
        %v3534 = vpop.f32.mrb[0].mxu0
        %v3535 = vpop.f32.mrb[0].mxu0
        %v3536 = vadd.f32 %v3288, %v3535
        %v3537 = vpop.f32.mrb[0].mxu0
        %3538 = vmatprep.mubr.bf16.mxu0 %v3215
        %3539 = vmatmul.mubr.bf16.gmra.mrb[0].mxu0 %v3214
        %v3540 = vpop.f32.mrb[0].mxu0
        %v3541 = vadd.f32 %v3288, %v3540
        %v3542 = vpop.f32.mrb[0].mxu0
        %v3543 = vpop.f32.mrb[0].mxu0
        %v3544 = vadd.f32 %v3288, %v3543
        %v3545 = vpop.f32.mrb[0].mxu0
        %3546 = vmatprep.mubr.bf16.mxu0 %v3218
        %3547 = vmatmul.mubr.bf16.gmra.mrb[0].mxu0 %v3217
        %v3548 = vpop.f32.mrb[0].mxu0
        %v3549 = vadd.f32 %v3288, %v3548
        %v3550 = vpop.f32.mrb[0].mxu0
        %v3551 = vpop.f32.mrb[0].mxu0
        %v3552 = vadd.f32 %v3288, %v3551
        %v3553 = vpop.f32.mrb[0].mxu0
        %3554 = vmatprep.mubr.bf16.mxu0 %v3221
        %3555 = vmatmul.mubr.bf16.gmra.mrb[0].mxu0 %v3220
        %v3556 = vpop.f32.mrb[0].mxu0
        %v3557 = vadd.f32 %v3288, %v3556
        %v3558 = vpop.f32.mrb[0].mxu0
        %v3559 = vpop.f32.mrb[0].mxu0
        %v3560 = vadd.f32 %v3288, %v3559
        %v3561 = vpop.f32.mrb[0].mxu0
        %3562 = vmatprep.mubr.bf16.mxu0 %v3224
        %3563 = vmatmul.mubr.bf16.gmra.mrb[0].mxu0 %v3223
        %v3564 = vpop.f32.mrb[0].mxu0
        %v3565 = vadd.f32 %v3288, %v3564
        %v3566 = vpop.f32.mrb[0].mxu0
        %v3567 = vpop.f32.mrb[0].mxu0
        %v3568 = vadd.f32 %v3288, %v3567
        %v3569 = vpop.f32.mrb[0].mxu0
        %3570 = vmatprep.mubr.bf16.mxu0 %v3227
        %3571 = vmatmul.mubr.bf16.gmra.mrb[0].mxu0 %v3226
        %v3572 = vpop.f32.mrb[0].mxu0
        %v3573 = vadd.f32 %v3288, %v3572
        %v3574 = vpop.f32.mrb[0].mxu0
        %v3575 = vpop.f32.mrb[0].mxu0
        %v3576 = vadd.f32 %v3288, %v3575
        %v3577 = vpop.f32.mrb[0].mxu0
        %3578 = vmatprep.mubr.bf16.mxu0 %v3230
        %3579 = vmatmul.mubr.bf16.gmra.mrb[0].mxu0 %v3229
        %v3580 = vpop.f32.mrb[0].mxu0
        %v3581 = vadd.f32 %v3288, %v3580
        %v3582 = vpop.f32.mrb[0].mxu0
        %v3583 = vpop.f32.mrb[0].mxu0
        %v3584 = vadd.f32 %v3288, %v3583
        %v3585 = vpop.f32.mrb[0].mxu0
        %3586 = vmatprep.mubr.bf16.mxu0 %v3233
        %3587 = vmatmul.mubr.bf16.gmra.mrb[0].mxu0 %v3232
        %v3588 = vpop.f32.mrb[0].mxu0
        %v3589 = vadd.f32 %v3288, %v3588
        %v3590 = vpop.f32.mrb[0].mxu0
        %v3591 = vpop.f32.mrb[0].mxu0
        %v3592 = vadd.f32 %v3288, %v3591
        %v3593 = vpop.f32.mrb[0].mxu0
        %3594 = vdwg.mxu0
        %3595 = vmatprep.subr.bf16.mxu0 0
        %3596 = vmatpush1.bf16.msra.mxu0 %v3402
        %3597 = vmatprep.subr.bf16.mxu0 0
        %3598 = vmatpush1.bf16.msra.mxu0 %v3403
        %3599 = vmatprep.subr.bf16.mxu0 0
        %3600 = vmatpush1.bf16.msra.mxu0 %v3404
        %3601 = vmatprep.subr.bf16.mxu0 0
        %3602 = vmatpush1.bf16.msra.mxu0 %v3405
        %3603 = vmatprep.subr.bf16.mxu0 0
        %3604 = vmatpush1.bf16.msra.mxu0 %v3406
        %3605 = vmatprep.subr.bf16.mxu0 0
        %3606 = vmatpush1.bf16.msra.mxu0 %v3407
        %3607 = vmatprep.subr.bf16.mxu0 0
        %3608 = vmatpush1.bf16.msra.mxu0 %v3408
        %3609 = vmatprep.subr.bf16.mxu0 0
        %3610 = vmatpush1.bf16.msra.mxu0 %v3409
        %3611 = vmatprep.subr.bf16.mxu0 0
        %3612 = vmatpush1.bf16.msra.mxu0 0
        %3613 = vmatprep.subr.bf16.mxu0 0
        %3614 = vmatpush1.bf16.msra.mxu0 0
        %3615 = vmatprep.subr.bf16.mxu0 0
        %3616 = vmatpush1.bf16.msra.mxu0 0
        %3617 = vmatprep.subr.bf16.mxu0 0
        %3618 = vmatpush1.bf16.msra.mxu0 0
        %3619 = vmatprep.subr.bf16.mxu0 0
        %3620 = vmatpush1.bf16.msra.mxu0 0
        %3621 = vmatprep.subr.bf16.mxu0 0
        %3622 = vmatpush1.bf16.msra.mxu0 0
        %3623 = vmatprep.subr.bf16.mxu0 0
        %3624 = vmatpush1.bf16.msra.mxu0 0
        %3625 = vmatprep.subr.bf16.mxu0 0
        %3626 = vmatpush1.bf16.msra.mxu0 0
        %3627 = vmatprep.mubr.bf16.mxu0 0
        %3628 = vmatmul.mubr.bf16.gmra.mrb[0].mxu0 %v3189
        %v3629 = vpop.f32.mrb[0].mxu0
        %v3630 = vadd.f32 %v3469, %v3629
        %v3631 = vpop.f32.mrb[0].mxu0
        %v3632 = vpop.f32.mrb[0].mxu0
        %v3633 = vadd.f32 %v3472, %v3632
        %v3634 = vpop.f32.mrb[0].mxu0
        %3635 = vmatprep.mubr.bf16.mxu0 0
        %3636 = vmatmul.mubr.bf16.gmra.mrb[0].mxu0 %v3192
        %v3637 = vpop.f32.mrb[0].mxu0
        %v3638 = vadd.f32 %v3477, %v3637
        %v3639 = vpop.f32.mrb[0].mxu0
        %v3640 = vpop.f32.mrb[0].mxu0
        %v3641 = vadd.f32 %v3480, %v3640
        %v3642 = vpop.f32.mrb[0].mxu0
        %3643 = vmatprep.mubr.bf16.mxu0 0
        %3644 = vmatmul.mubr.bf16.gmra.mrb[0].mxu0 %v3195
        %v3645 = vpop.f32.mrb[0].mxu0
        %v3646 = vadd.f32 %v3485, %v3645
        %v3647 = vpop.f32.mrb[0].mxu0
        %v3648 = vpop.f32.mrb[0].mxu0
        %v3649 = vadd.f32 %v3488, %v3648
        %v3650 = vpop.f32.mrb[0].mxu0
        %3651 = vmatprep.mubr.bf16.mxu0 0
        %3652 = vmatmul.mubr.bf16.gmra.mrb[0].mxu0 %v3198
        %v3653 = vpop.f32.mrb[0].mxu0
        %v3654 = vadd.f32 %v3493, %v3653
        %v3655 = vpop.f32.mrb[0].mxu0
        %v3656 = vpop.f32.mrb[0].mxu0
        %v3657 = vadd.f32 %v3496, %v3656
        %v3658 = vpop.f32.mrb[0].mxu0
        %3659 = vmatprep.mubr.bf16.mxu0 0
        %3660 = vmatmul.mubr.bf16.gmra.mrb[0].mxu0 %v3201
        %v3661 = vpop.f32.mrb[0].mxu0
        %v3662 = vadd.f32 %v3501, %v3661
        %v3663 = vpop.f32.mrb[0].mxu0
        %v3664 = vpop.f32.mrb[0].mxu0
        %v3665 = vadd.f32 %v3504, %v3664
        %v3666 = vpop.f32.mrb[0].mxu0
        %3667 = vmatprep.mubr.bf16.mxu0 0
        %3668 = vmatmul.mubr.bf16.gmra.mrb[0].mxu0 %v3204
        %v3669 = vpop.f32.mrb[0].mxu0
        %v3670 = vadd.f32 %v3509, %v3669
        %v3671 = vpop.f32.mrb[0].mxu0
        %v3672 = vpop.f32.mrb[0].mxu0
        %v3673 = vadd.f32 %v3512, %v3672
        %v3674 = vpop.f32.mrb[0].mxu0
        %3675 = vmatprep.mubr.bf16.mxu0 0
        %3676 = vmatmul.mubr.bf16.gmra.mrb[0].mxu0 %v3207
        %v3677 = vpop.f32.mrb[0].mxu0
        %v3678 = vadd.f32 %v3517, %v3677
        %v3679 = vpop.f32.mrb[0].mxu0
        %v3680 = vpop.f32.mrb[0].mxu0
        %v3681 = vadd.f32 %v3520, %v3680
        %v3682 = vpop.f32.mrb[0].mxu0
        %3683 = vmatprep.mubr.bf16.mxu0 0
        %3684 = vmatmul.mubr.bf16.gmra.mrb[0].mxu0 %v3210
        %v3685 = vpop.f32.mrb[0].mxu0
        %v3686 = vadd.f32 %v3525, %v3685
        %v3687 = vpop.f32.mrb[0].mxu0
        %v3688 = vpop.f32.mrb[0].mxu0
        %v3689 = vadd.f32 %v3528, %v3688
        %v3690 = vpop.f32.mrb[0].mxu0
        %3691 = vmatprep.mubr.bf16.mxu0 0
        %3692 = vmatmul.mubr.bf16.gmra.mrb[0].mxu0 %v3213
        %v3693 = vpop.f32.mrb[0].mxu0
        %v3694 = vadd.f32 %v3533, %v3693
        %v3695 = vpop.f32.mrb[0].mxu0
        %v3696 = vpop.f32.mrb[0].mxu0
        %v3697 = vadd.f32 %v3536, %v3696
        %v3698 = vpop.f32.mrb[0].mxu0
        %3699 = vmatprep.mubr.bf16.mxu0 0
        %3700 = vmatmul.mubr.bf16.gmra.mrb[0].mxu0 %v3216
        %v3701 = vpop.f32.mrb[0].mxu0
        %v3702 = vadd.f32 %v3541, %v3701
        %v3703 = vpop.f32.mrb[0].mxu0
        %v3704 = vpop.f32.mrb[0].mxu0
        %v3705 = vadd.f32 %v3544, %v3704
        %v3706 = vpop.f32.mrb[0].mxu0
        %3707 = vmatprep.mubr.bf16.mxu0 0
        %3708 = vmatmul.mubr.bf16.gmra.mrb[0].mxu0 %v3219
        %v3709 = vpop.f32.mrb[0].mxu0
        %v3710 = vadd.f32 %v3549, %v3709
        %v3711 = vpop.f32.mrb[0].mxu0
        %v3712 = vpop.f32.mrb[0].mxu0
        %v3713 = vadd.f32 %v3552, %v3712
        %v3714 = vpop.f32.mrb[0].mxu0
        %3715 = vmatprep.mubr.bf16.mxu0 0
        %3716 = vmatmul.mubr.bf16.gmra.mrb[0].mxu0 %v3222
        %v3717 = vpop.f32.mrb[0].mxu0
        %v3718 = vadd.f32 %v3557, %v3717
        %v3719 = vpop.f32.mrb[0].mxu0
        %v3720 = vpop.f32.mrb[0].mxu0
        %v3721 = vadd.f32 %v3560, %v3720
        %v3722 = vpop.f32.mrb[0].mxu0
        %3723 = vmatprep.mubr.bf16.mxu0 0
        %3724 = vmatmul.mubr.bf16.gmra.mrb[0].mxu0 %v3225
        %v3725 = vpop.f32.mrb[0].mxu0
        %v3726 = vadd.f32 %v3565, %v3725
        %v3727 = vpop.f32.mrb[0].mxu0
        %v3728 = vpop.f32.mrb[0].mxu0
        %v3729 = vadd.f32 %v3568, %v3728
        %v3730 = vpop.f32.mrb[0].mxu0
        %3731 = vmatprep.mubr.bf16.mxu0 0
        %3732 = vmatmul.mubr.bf16.gmra.mrb[0].mxu0 %v3228
        %v3733 = vpop.f32.mrb[0].mxu0
        %v3734 = vadd.f32 %v3573, %v3733
        %v3735 = vpop.f32.mrb[0].mxu0
        %v3736 = vpop.f32.mrb[0].mxu0
        %v3737 = vadd.f32 %v3576, %v3736
        %v3738 = vpop.f32.mrb[0].mxu0
        %3739 = vmatprep.mubr.bf16.mxu0 0
        %3740 = vmatmul.mubr.bf16.gmra.mrb[0].mxu0 %v3231
        %v3741 = vpop.f32.mrb[0].mxu0
        %v3742 = vadd.f32 %v3581, %v3741
        %v3743 = vpop.f32.mrb[0].mxu0
        %v3744 = vpop.f32.mrb[0].mxu0
        %v3745 = vadd.f32 %v3584, %v3744
        %v3746 = vpop.f32.mrb[0].mxu0
        %3747 = vmatprep.mubr.bf16.mxu0 0
        %3748 = vmatmul.mubr.bf16.gmra.mrb[0].mxu0 %v3234
        %v3749 = vpop.f32.mrb[0].mxu0
        %v3750 = vadd.f32 %v3589, %v3749
        %v3751 = vpop.f32.mrb[0].mxu0
        %v3752 = vpop.f32.mrb[0].mxu0
        %v3753 = vadd.f32 %v3592, %v3752
        %v3754 = vpop.f32.mrb[0].mxu0
        %3755 = vdwg.mxu0
        %v3756 = vpack.c.bf16 %v3633, %v3630
        %v3757 = vpack.c.bf16 %v3641, %v3638
        %v3758 = vpack.c.bf16 %v3649, %v3646
        %v3759 = vpack.c.bf16 %v3657, %v3654
        %v3760 = vpack.c.bf16 %v3665, %v3662
        %v3761 = vpack.c.bf16 %v3673, %v3670
        %v3762 = vpack.c.bf16 %v3681, %v3678
        %v3763 = vpack.c.bf16 %v3689, %v3686
        %v3764 = vpack.c.bf16 %v3697, %v3694
        %v3765 = vpack.c.bf16 %v3705, %v3702
        %v3766 = vpack.c.bf16 %v3713, %v3710
        %v3767 = vpack.c.bf16 %v3721, %v3718
        %v3768 = vpack.c.bf16 %v3729, %v3726
        %v3769 = vpack.c.bf16 %v3737, %v3734
        %v3770 = vpack.c.bf16 %v3745, %v3742
        %v3771 = vpack.c.bf16 %v3753, %v3750
        %v3788 = vunpack.c.l.b16 %v3756
        %v3789 = vunpack.c.h.b16 %v3756
        %v3790 = vunpack.c.l.b16 %v3757
        %v3791 = vunpack.c.h.b16 %v3757
        %v3792 = vunpack.c.l.b16 %v3758
        %v3793 = vunpack.c.h.b16 %v3758
        %v3794 = vunpack.c.l.b16 %v3759
        %v3795 = vunpack.c.h.b16 %v3759
        %v3796 = vunpack.c.l.b16 %v3760
        %v3797 = vunpack.c.h.b16 %v3760
        %v3798 = vunpack.c.l.b16 %v3761
        %v3799 = vunpack.c.h.b16 %v3761
        %v3800 = vunpack.c.l.b16 %v3762
        %v3801 = vunpack.c.h.b16 %v3762
        %v3802 = vunpack.c.l.b16 %v3763
        %v3803 = vunpack.c.h.b16 %v3763
        %v3804 = vunpack.c.l.b16 %v3764
        %v3805 = vunpack.c.h.b16 %v3764
        %v3806 = vunpack.c.l.b16 %v3765
        %v3807 = vunpack.c.h.b16 %v3765
        %v3808 = vunpack.c.l.b16 %v3766
        %v3809 = vunpack.c.h.b16 %v3766
        %v3810 = vunpack.c.l.b16 %v3767
        %v3811 = vunpack.c.h.b16 %v3767
        %v3812 = vunpack.c.l.b16 %v3768
        %v3813 = vunpack.c.h.b16 %v3768
        %v3814 = vunpack.c.l.b16 %v3769
        %v3815 = vunpack.c.h.b16 %v3769
        %v3816 = vunpack.c.l.b16 %v3770
        %v3817 = vunpack.c.h.b16 %v3770
        %v3818 = vunpack.c.l.b16 %v3771
        %v3819 = vunpack.c.h.b16 %v3771
        %v3820 = vpack.c.b16 %v3788, %v3788
        %v3821 = vpack.c.b16 %v3789, %v3789
        %v3822 = vpack.c.b16 %v3790, %v3790
        %v3823 = vpack.c.b16 %v3791, %v3791
        %v3824 = vpack.c.b16 %v3792, %v3792
        %v3825 = vpack.c.b16 %v3793, %v3793
        %v3826 = vpack.c.b16 %v3794, %v3794
        %v3827 = vpack.c.b16 %v3795, %v3795
        %v3828 = vpack.c.b16 %v3796, %v3796
        %v3829 = vpack.c.b16 %v3797, %v3797
        %v3830 = vpack.c.b16 %v3798, %v3798
        %v3831 = vpack.c.b16 %v3799, %v3799
        %v3832 = vpack.c.b16 %v3800, %v3800
        %v3833 = vpack.c.b16 %v3801, %v3801
        %v3834 = vpack.c.b16 %v3802, %v3802
        %v3835 = vpack.c.b16 %v3803, %v3803
        %v3836 = vpack.c.b16 %v3804, %v3804
        %v3837 = vpack.c.b16 %v3805, %v3805
        %v3838 = vpack.c.b16 %v3806, %v3806
        %v3839 = vpack.c.b16 %v3807, %v3807
        %v3840 = vpack.c.b16 %v3808, %v3808
        %v3841 = vpack.c.b16 %v3809, %v3809
        %v3842 = vpack.c.b16 %v3810, %v3810
        %v3843 = vpack.c.b16 %v3811, %v3811
        %v3844 = vpack.c.b16 %v3812, %v3812
        %v3845 = vpack.c.b16 %v3813, %v3813
        %v3846 = vpack.c.b16 %v3814, %v3814
        %v3847 = vpack.c.b16 %v3815, %v3815
        %v3848 = vpack.c.b16 %v3816, %v3816
        %v3849 = vpack.c.b16 %v3817, %v3817
        %v3850 = vpack.c.b16 %v3818, %v3818
        %v3851 = vpack.c.b16 %v3819, %v3819
        %3884 = vst [vmem:[%s469] sm:$0xf] %v3820
        %3885 = vst [vmem:[%s469 + $0x4] sm:$0xf] %v3821
        %3886 = vst [vmem:[%s469 + $0x8] sm:$0xf] %v3822
        %3887 = vst [vmem:[%s469 + $0xc] sm:$0xf] %v3823
        %3888 = vst [vmem:[%s469 + $0x10] sm:$0xf] %v3824
        %3889 = vst [vmem:[%s469 + $0x14] sm:$0xf] %v3825
        %3890 = vst [vmem:[%s469 + $0x18] sm:$0xf] %v3826
        %3891 = vst [vmem:[%s469 + $0x1c] sm:$0xf] %v3827
        %3892 = vst [vmem:[%s469 + $0x20] sm:$0xf] %v3828
        %3893 = vst [vmem:[%s469 + $0x24] sm:$0xf] %v3829
        %3894 = vst [vmem:[%s469 + $0x28] sm:$0xf] %v3830
        %3895 = vst [vmem:[%s469 + $0x2c] sm:$0xf] %v3831
        %3896 = vst [vmem:[%s469 + $0x30] sm:$0xf] %v3832
        %3897 = vst [vmem:[%s469 + $0x34] sm:$0xf] %v3833
        %3898 = vst [vmem:[%s469 + $0x38] sm:$0xf] %v3834
        %3899 = vst [vmem:[%s469 + $0x3c] sm:$0xf] %v3835
        %3900 = vst [vmem:[%s469 + $0x40] sm:$0xf] %v3836
        %3901 = vst [vmem:[%s469 + $0x44] sm:$0xf] %v3837
        %3902 = vst [vmem:[%s469 + $0x48] sm:$0xf] %v3838
        %3903 = vst [vmem:[%s469 + $0x4c] sm:$0xf] %v3839
        %3904 = vst [vmem:[%s469 + $0x50] sm:$0xf] %v3840
        %3905 = vst [vmem:[%s469 + $0x54] sm:$0xf] %v3841
        %3906 = vst [vmem:[%s469 + $0x58] sm:$0xf] %v3842
        %3907 = vst [vmem:[%s469 + $0x5c] sm:$0xf] %v3843
        %3908 = vst [vmem:[%s469 + $0x60] sm:$0xf] %v3844
        %3909 = vst [vmem:[%s469 + $0x64] sm:$0xf] %v3845
        %3910 = vst [vmem:[%s469 + $0x68] sm:$0xf] %v3846
        %3911 = vst [vmem:[%s469 + $0x6c] sm:$0xf] %v3847
        %3912 = vst [vmem:[%s469 + $0x70] sm:$0xf] %v3848
        %3913 = vst [vmem:[%s469 + $0x74] sm:$0xf] %v3849
        %3914 = vst [vmem:[%s469 + $0x78] sm:$0xf] %v3850
        %3915 = vst [vmem:[%s469 + $0x7c] sm:$0xf] %v3851
        %s3916 = smul.u32 32, %s29
        %p3917 = scmp.lt.s32.totalorder %s3916, 127
        %s3918 = scalar_select %p3917, %s3916, 127
        %s3919 = smul.addr %s3918, 4
        %s3920 = scalar_lea.vmem %s13, %s3919
        %s3921 = sand.u32 %s341, 1
        %s3922 = scalar_lea.sflag [#allocation3], %s3921
        %s3923 = sand.u32 %s341, 1
        %s3924 = smul.addr %s3923, 128
        %s3925 = scalar_lea.vmem [#allocation2], %s3924
        // Predicated region
        $region73: #{autoencoder_forward.1} parent=71 // pred_check
          %p3926 = pneg %p325
        $region74: #{autoencoder_forward.1} parent=71 // pred_check_branch
          %3928 = sbr.rel (%p3926) target = $region76
        $region75: #{autoencoder_forward.1} parent=71 // pred_region
          %s3929 = smul.u32 32, %s29
        $region76: #{autoencoder_forward.1} parent=71 // pred_fallthru
          _
        // Predicated region
        $region77: #{autoencoder_forward.1} parent=71 // pred_check
          %p3930 = pneg %p351
        $region78: #{autoencoder_forward.1} parent=71 // pred_check_branch
          %3932 = sbr.rel (%p3930) target = $region80
        $region79: #{autoencoder_forward.1} parent=71 // pred_region
          %s3933 = smul.u32 32, %s29
          %s3935 = ssub.s32 2048, 2048
          %3936 = vsyncadd %s3922, %s3935
          %s3937 = smul.addr %s3933, 64
          %s3938 = scalar_lea.hbm %s14, %s3937
          %s3939 = sshll.u32 %s3925, 4
          %s3940 = int_to_ptr.vmem [resolvable:$true] %s3939
          %3945 = dma.vmem_to_hbm [thread:$0]  %s3940, 2048, %s3938, %s3922, 64, 64, 4
        $region80: #{autoencoder_forward.1} parent=71 // pred_fallthru
          _
      $region72: #{autoencoder_forward.1} parent=5 // pred_fallthru
        _
      %p3946 = scmp.le.s32.totalorder 2, %s24
      // Predicated region
      $region81: #{autoencoder_forward.1} parent=5 // pred_check
        %p3947 = pneg %p3946
      $region82: #{autoencoder_forward.1} parent=5 // pred_check_branch
        %3949 = sbr.rel (%p3947) target = $region84
      $region83: #{autoencoder_forward.1} parent=5 // pred_region
        %s3950 = ssub.s32 %s24, 2
        // Predicated region
        $region85: #{autoencoder_forward.1} parent=83 // pred_check
          %p3951 = pneg %p331
        $region86: #{autoencoder_forward.1} parent=83 // pred_check_branch
          %3953 = sbr.rel (%p3951) target = $region88
        $region87: #{autoencoder_forward.1} parent=83 // pred_region
          %s3954 = smul.u32 32, %s30
          %p3955 = scmp.lt.s32.totalorder %s3954, 127
          %s3956 = scalar_select %p3955, %s3954, 127
          %s3957 = smul.addr %s3956, 4
          %s3958 = scalar_lea.vmem %s13, %s3957
        $region88: #{autoencoder_forward.1} parent=83 // pred_fallthru
          _
        // Predicated region
        $region89: #{autoencoder_forward.1} parent=83 // pred_check
          %p3959 = pneg %p357
        $region90: #{autoencoder_forward.1} parent=83 // pred_check_branch
          %3961 = sbr.rel (%p3959) target = $region92
        $region91: #{autoencoder_forward.1} parent=83 // pred_region
          %s3962 = sand.u32 %s342, 1
          %s3963 = scalar_lea.sflag [#allocation3], %s3962
          %s3964 = sand.u32 %s342, 1
          %s3965 = smul.addr %s3964, 128
          %s3966 = scalar_lea.vmem [#allocation2], %s3965
          %3967 = dma.done %s3963, 2048
        $region92: #{autoencoder_forward.1} parent=83 // pred_fallthru
          _
      $region84: #{autoencoder_forward.1} parent=5 // pred_fallthru
        _
    $region6: #{autoencoder_forward.1} parent=1 // loop_footer
      %s28 = sadd.s32 1, %s24
    $region7: #{autoencoder_forward.1} parent=1 // loop_footer_branch
      %23 = sbr.rel target = $region3
    $region8: #{autoencoder_forward.1} parent=1 // loop_exit
      _
    %3968 = vsyncpa [#allocation3], 1
    %s3969 = scalar_lea.sflag [#allocation3], 1
    %3970 = vsyncpa %s3969, 1

</llo_original>
